<compile_context>
chip_gen: v6e
topology: v6e:2x2x1
jax: 0.10.0
libtpu: 0.0.40
codegen_flags: <defaults>
</compile_context>

<pallas_src>
import functools

import jax
import jax.numpy as jnp
from jax.experimental import pallas as pl
from jax.experimental.pallas import tpu as pltpu


def attention_kernel(x_ref, wqkv_ref, wp_ref, bp_ref, o_ref, *, num_heads, block_b, seq_len):
    # x_ref block: (Bb*N, C); wqkv_ref: (C, 3C) with scale folded into the q columns;
    # wp_ref: (C, C); bp_ref: (1, C); o_ref block: (Bb*N, C).
    H, Bb, N = num_heads, block_b, seq_len
    M, C = x_ref.shape
    assert M == Bb * N
    hd = C // H
    dtype = x_ref.dtype

    # ---- fused QKV projection: one wide MXU matmul over Bb sequences (M = Bb*N rows),
    #      f32 accumulation only, no operand upcast. qkv_bias=False. ----
    qkv = jnp.dot(x_ref[...], wqkv_ref[...], preferred_element_type=jnp.float32)   # (M, 3C) f32
    qkv = qkv.astype(dtype)   # single cast pass; q already carries the softmax scale

    # ---- head/batch split -> (G, N, hd), G = Bb*H, via static sublane/lane slices and a
    #      leading-axis stack (no minor-dim reshapes/transposes inside the kernel). ----
    def gather(col0):
        return jnp.stack(
            [qkv[b * N:(b + 1) * N, col0 + h * hd: col0 + (h + 1) * hd]
             for b in range(Bb) for h in range(H)],
            axis=0)                                                                # (G, N, hd)

    q3 = gather(0)
    k3 = gather(C)
    v3 = gather(2 * C)

    # ---- scores for all (sequence, head) pairs: single-batch-dim einsum, no explicit k.T ----
    s = jnp.einsum('gqd,gkd->gqk', q3, k3, preferred_element_type=jnp.float32)     # (G, N, N) f32
    s = s - jnp.max(s, axis=-1, keepdims=True)
    p = jnp.exp(s)
    denom = jnp.sum(p, axis=-1, keepdims=True)                                     # (G, N, 1) f32

    # ---- P @ V with the *un-normalized* probabilities; normalize the small (G,N,hd) result
    #      with the EUP approximate reciprocal instead of rescaling the (G,N,N) matrix.
    #      attn_drop(p=0.0) -> identity. ----
    ctx = jnp.einsum('gqk,gkd->gqd', p.astype(dtype), v3,
                     preferred_element_type=jnp.float32)                           # (G, N, hd) f32
    ctx = (ctx * pl.reciprocal(denom, approx=True)).astype(dtype)

    # ---- head merge: one dense lane-axis concatenate per sequence (no masked per-head
    #      scratch stores), then a single full-width K=C output projection + bias.
    #      proj_drop(p=0.0) -> identity. ----
    merged = jnp.concatenate(
        [jnp.concatenate([ctx[b * H + h] for h in range(H)], axis=-1)              # (N, C)
         for b in range(Bb)],
        axis=0)                                                                    # (M, C)
    out = jnp.dot(merged, wp_ref[...], preferred_element_type=jnp.float32) + bp_ref[...]
    o_ref[...] = out.astype(o_ref.dtype)                                           # lane-dense store


def _pick_block_b(B, N, C, H, itemsize):
    """Batch Bb sequences per grid step so the projection matmuls see M = Bb*N >= ~256 rows,
    subject to a VMEM budget dominated by the (Bb*H, N, N) score/probability tensors."""
    budget = 20 << 20

    def live_bytes(bb):
        return (bb * H * N * N * 12                      # scores f32 + exp f32 + cast copy
                + bb * N * 3 * C * (4 + itemsize)        # qkv f32 + split copies
                + bb * N * C * 16)                       # ctx f32 + merged + out f32

    cands = [bb for bb in range(1, B + 1)
             if B % bb == 0 and (bb == B or (bb * N) % 8 == 0)]
    fitting = [bb for bb in cands if live_bytes(bb) <= budget]
    if not fitting:
        return cands[0]
    for bb in fitting:
        if bb * N >= 256:
            return bb
    return fitting[-1]


def _vmem_limit_bytes(Bb, N, C, H, itemsize):
    """Scoped-VMEM limit derived from the per-step footprint (double-buffered blocks +
    live intermediates) with 2x slack, clamped to v7x's 64 MiB physical per-TC ceiling."""
    blocks = 2 * 2 * Bb * N * C * itemsize               # x + out blocks, double-buffered
    weights = 2 * (3 * C * C + C * C + C) * itemsize     # wqkv / wp / bp, double-buffered
    inter = (Bb * H * N * N * 12
             + Bb * N * 3 * C * (4 + itemsize)
             + Bb * N * C * 16)
    est = blocks + weights + 2 * inter + (8 << 20)
    return int(min(max(est, 32 << 20), 64 << 20))


def attention(x, w_qkv, w_proj, b_proj, *, num_heads, block_b=None):
    """x: (B, N, C). w_qkv: (3C, C), w_proj: (C, C), b_proj: (C,) in torch nn.Linear layout."""
    B, N, C = x.shape
    assert C % num_heads == 0
    hd = C // num_heads
    scale = hd ** -0.5

    # Host-side weight prep: transpose to y = x @ W form; fold the softmax scale into the
    # q columns of the fused QKV weight (scale applied in f32 before casting back).
    wq, wk, wv = w_qkv[:C], w_qkv[C:2 * C], w_qkv[2 * C:]
    wq = (wq.astype(jnp.float32) * scale).astype(w_qkv.dtype)
    wqkv = jnp.concatenate([wq, wk, wv], axis=0).T        # (C, 3C), columns [q | k | v]
    wp = w_proj.T                                         # (C, C)
    bp = b_proj.reshape(1, C)

    Bb = _pick_block_b(B, N, C, num_heads, x.dtype.itemsize) if block_b is None else block_b
    assert B % Bb == 0 and (Bb == B or (Bb * N) % 8 == 0)
    M = Bb * N

    # Flatten tokens on the host (free) so the kernel runs M = Bb*N row matmuls and emits a
    # dense full-width output slab per grid step.
    x2 = x.reshape(B * N, C)

    flops = B * (6 * N * C * C + 4 * num_heads * N * N * hd + 2 * N * C * C)
    bytes_accessed = (2 * x2.size * x.dtype.itemsize
                      + wqkv.size * wqkv.dtype.itemsize
                      + wp.size * wp.dtype.itemsize
                      + bp.size * bp.dtype.itemsize)

    kernel = functools.partial(attention_kernel, num_heads=num_heads, block_b=Bb, seq_len=N)
    out = pl.pallas_call(
        kernel,
        out_shape=jax.ShapeDtypeStruct((B * N, C), x.dtype),
        grid=(B // Bb,),
        in_specs=[
            pl.BlockSpec((M, C), lambda i: (i, 0)),        # x tokens
            pl.BlockSpec((C, 3 * C), lambda i: (0, 0)),    # fused Wqkv (grid-invariant)
            pl.BlockSpec((C, C), lambda i: (0, 0)),        # Wproj (grid-invariant)
            pl.BlockSpec((1, C), lambda i: (0, 0)),        # proj bias (grid-invariant)
        ],
        out_specs=pl.BlockSpec((M, C), lambda i: (i, 0)),
        compiler_params=pltpu.CompilerParams(
            dimension_semantics=("parallel",),
            vmem_limit_bytes=_vmem_limit_bytes(Bb, N, C, num_heads, x.dtype.itemsize),
        ),
        cost_estimate=pl.CostEstimate(
            flops=int(flops),
            transcendentals=int(B * num_heads * N * N),
            bytes_accessed=int(bytes_accessed),
        ),
    )(x2, wqkv, wp, bp)
    return out.reshape(B, N, C)


def attention_ref(x, w_qkv, w_proj, b_proj, *, num_heads):
    """Pure-JAX reference mirroring the PyTorch forward exactly (f32 math)."""
    B, N, C = x.shape
    hd = C // num_heads
    scale = hd ** -0.5
    qkv = (x @ w_qkv.T).reshape(B, N, 3, num_heads, hd).transpose(2, 0, 3, 1, 4)
    q, k, v = qkv[0], qkv[1], qkv[2]
    attn = jnp.einsum('bhqd,bhkd->bhqk', q, k) * scale
    attn = jax.nn.softmax(attn, axis=-1)
    ctx = jnp.einsum('bhqk,bhkd->bhqd', attn, v).transpose(0, 2, 1, 3).reshape(B, N, C)
    return ctx @ w_proj.T + b_proj


if __name__ == "__main__":
    # Hardware-friendly small shapes: N multiple of 8, C multiple of 128 (lane-dense output).
    B, N, C = 2, 16, 256
    num_heads = 8

    key = jax.random.PRNGKey(0)
    kx, kqkv, kp, kb = jax.random.split(key, 4)

    x = jax.random.normal(kx, (B, N, C), dtype=jnp.float32)
    w_qkv = jax.random.normal(kqkv, (3 * C, C), dtype=jnp.float32) * 0.02   # nn.Linear(C, 3C, bias=False)
    w_proj = jax.random.normal(kp, (C, C), dtype=jnp.float32) * 0.02        # nn.Linear(C, C)
    b_proj = jax.random.normal(kb, (C,), dtype=jnp.float32) * 0.02

    ref = attention_ref(x, w_qkv, w_proj, b_proj, num_heads=num_heads)

    # f32 path (only deliberate deviation from the reference: EUP approximate reciprocal).
    out = jax.block_until_ready(attention(x, w_qkv, w_proj, b_proj, num_heads=num_heads))
    assert out.shape == (B, N, C)
    assert jnp.allclose(out, ref, atol=5e-3, rtol=5e-3), \
        f"f32 mismatch vs reference: max abs err {jnp.max(jnp.abs(out - ref))}"

    # bf16 path: native MXU dtype with f32 accumulation; compare to f32 reference loosely.
    out_b = jax.block_until_ready(
        attention(x.astype(jnp.bfloat16), w_qkv.astype(jnp.bfloat16),
                  w_proj.astype(jnp.bfloat16), b_proj.astype(jnp.bfloat16),
                  num_heads=num_heads))
    assert jnp.allclose(out_b.astype(jnp.float32), ref, atol=5e-2, rtol=5e-2), \
        f"bf16 mismatch vs reference: max abs err {jnp.max(jnp.abs(out_b.astype(jnp.float32) - ref))}"

    print("KERNEL_OK")
</pallas_src>

<mosaic_0001>
module attributes {stable_mosaic.version = 11 : i64} {
  func.func @attention_kernel(%arg0: i32, %arg1: memref<32x256xf32, #tpu.memory_space<vmem>>, %arg2: memref<256x768xf32, #tpu.memory_space<vmem>>, %arg3: memref<256x256xf32, #tpu.memory_space<vmem>>, %arg4: memref<1x256xf32, #tpu.memory_space<vmem>>, %arg5: memref<32x256xf32, #tpu.memory_space<vmem>>) attributes {dimension_semantics = [#tpu.dimension_semantics<parallel>], iteration_bounds = array<i64: 1>, scalar_prefetch = 0 : i64, scratch_operands = 0 : i64, tpu.core_type = #tpu.core_type<tc>, window_params = [{transform_indices = @transform_0, window_bounds = array<i64: 32, 256>}, {pipeline_mode = #tpu.pipeline_mode<synchronous>, transform_indices = @transform_1, window_bounds = array<i64: 256, 768>}, {pipeline_mode = #tpu.pipeline_mode<synchronous>, transform_indices = @transform_2, window_bounds = array<i64: 256, 256>}, {pipeline_mode = #tpu.pipeline_mode<synchronous>, transform_indices = @transform_3, window_bounds = array<i64: 1, 256>}, {transform_indices = @transform_4, window_bounds = array<i64: 32, 256>}]} {
    %c0 = arith.constant 0 : index
    %c0_0 = arith.constant 0 : index
    %0 = vector.load %arg1[%c0, %c0_0] : memref<32x256xf32, #tpu.memory_space<vmem>>, vector<32x256xf32>
    %c0_1 = arith.constant 0 : index
    %c0_2 = arith.constant 0 : index
    %1 = vector.load %arg2[%c0_1, %c0_2] : memref<256x768xf32, #tpu.memory_space<vmem>>, vector<256x768xf32>
    %cst = arith.constant dense<0.000000e+00> : vector<32x768xf32>
    %2 = tpu.matmul %0, %1, %cst {dimension_numbers = #tpu.dot_dimension_numbers<[1], [0], [0], [1], [0, 0, 1, 1], [], []>} : vector<32x256xf32>, vector<256x768xf32>, vector<32x768xf32> -> vector<32x768xf32>
    %3 = vector.extract_strided_slice %2 {offsets = [0, 0], sizes = [16, 32], strides = [1, 1]} : vector<32x768xf32> to vector<16x32xf32>
    %4 = vector.extract_strided_slice %2 {offsets = [0, 32], sizes = [16, 32], strides = [1, 1]} : vector<32x768xf32> to vector<16x32xf32>
    %5 = vector.extract_strided_slice %2 {offsets = [0, 64], sizes = [16, 32], strides = [1, 1]} : vector<32x768xf32> to vector<16x32xf32>
    %6 = vector.extract_strided_slice %2 {offsets = [0, 96], sizes = [16, 32], strides = [1, 1]} : vector<32x768xf32> to vector<16x32xf32>
    %7 = vector.extract_strided_slice %2 {offsets = [0, 128], sizes = [16, 32], strides = [1, 1]} : vector<32x768xf32> to vector<16x32xf32>
    %8 = vector.extract_strided_slice %2 {offsets = [0, 160], sizes = [16, 32], strides = [1, 1]} : vector<32x768xf32> to vector<16x32xf32>
    %9 = vector.extract_strided_slice %2 {offsets = [0, 192], sizes = [16, 32], strides = [1, 1]} : vector<32x768xf32> to vector<16x32xf32>
    %10 = vector.extract_strided_slice %2 {offsets = [0, 224], sizes = [16, 32], strides = [1, 1]} : vector<32x768xf32> to vector<16x32xf32>
    %11 = vector.extract_strided_slice %2 {offsets = [16, 0], sizes = [16, 32], strides = [1, 1]} : vector<32x768xf32> to vector<16x32xf32>
    %12 = vector.extract_strided_slice %2 {offsets = [16, 32], sizes = [16, 32], strides = [1, 1]} : vector<32x768xf32> to vector<16x32xf32>
    %13 = vector.extract_strided_slice %2 {offsets = [16, 64], sizes = [16, 32], strides = [1, 1]} : vector<32x768xf32> to vector<16x32xf32>
    %14 = vector.extract_strided_slice %2 {offsets = [16, 96], sizes = [16, 32], strides = [1, 1]} : vector<32x768xf32> to vector<16x32xf32>
    %15 = vector.extract_strided_slice %2 {offsets = [16, 128], sizes = [16, 32], strides = [1, 1]} : vector<32x768xf32> to vector<16x32xf32>
    %16 = vector.extract_strided_slice %2 {offsets = [16, 160], sizes = [16, 32], strides = [1, 1]} : vector<32x768xf32> to vector<16x32xf32>
    %17 = vector.extract_strided_slice %2 {offsets = [16, 192], sizes = [16, 32], strides = [1, 1]} : vector<32x768xf32> to vector<16x32xf32>
    %18 = vector.extract_strided_slice %2 {offsets = [16, 224], sizes = [16, 32], strides = [1, 1]} : vector<32x768xf32> to vector<16x32xf32>
    %19 = vector.shape_cast %3 : vector<16x32xf32> to vector<1x16x32xf32>
    %20 = vector.shape_cast %4 : vector<16x32xf32> to vector<1x16x32xf32>
    %21 = vector.shape_cast %5 : vector<16x32xf32> to vector<1x16x32xf32>
    %22 = vector.shape_cast %6 : vector<16x32xf32> to vector<1x16x32xf32>
    %23 = vector.shape_cast %7 : vector<16x32xf32> to vector<1x16x32xf32>
    %24 = vector.shape_cast %8 : vector<16x32xf32> to vector<1x16x32xf32>
    %25 = vector.shape_cast %9 : vector<16x32xf32> to vector<1x16x32xf32>
    %26 = vector.shape_cast %10 : vector<16x32xf32> to vector<1x16x32xf32>
    %27 = vector.shape_cast %11 : vector<16x32xf32> to vector<1x16x32xf32>
    %28 = vector.shape_cast %12 : vector<16x32xf32> to vector<1x16x32xf32>
    %29 = vector.shape_cast %13 : vector<16x32xf32> to vector<1x16x32xf32>
    %30 = vector.shape_cast %14 : vector<16x32xf32> to vector<1x16x32xf32>
    %31 = vector.shape_cast %15 : vector<16x32xf32> to vector<1x16x32xf32>
    %32 = vector.shape_cast %16 : vector<16x32xf32> to vector<1x16x32xf32>
    %33 = vector.shape_cast %17 : vector<16x32xf32> to vector<1x16x32xf32>
    %34 = vector.shape_cast %18 : vector<16x32xf32> to vector<1x16x32xf32>
    %35 = tpu.concatenate %19, %20, %21, %22, %23, %24, %25, %26, %27, %28, %29, %30, %31, %32, %33, %34 in 0 : vector<1x16x32xf32>, vector<1x16x32xf32>, vector<1x16x32xf32>, vector<1x16x32xf32>, vector<1x16x32xf32>, vector<1x16x32xf32>, vector<1x16x32xf32>, vector<1x16x32xf32>, vector<1x16x32xf32>, vector<1x16x32xf32>, vector<1x16x32xf32>, vector<1x16x32xf32>, vector<1x16x32xf32>, vector<1x16x32xf32>, vector<1x16x32xf32>, vector<1x16x32xf32> -> vector<16x16x32xf32>
    %36 = vector.extract_strided_slice %2 {offsets = [0, 256], sizes = [16, 32], strides = [1, 1]} : vector<32x768xf32> to vector<16x32xf32>
    %37 = vector.extract_strided_slice %2 {offsets = [0, 288], sizes = [16, 32], strides = [1, 1]} : vector<32x768xf32> to vector<16x32xf32>
    %38 = vector.extract_strided_slice %2 {offsets = [0, 320], sizes = [16, 32], strides = [1, 1]} : vector<32x768xf32> to vector<16x32xf32>
    %39 = vector.extract_strided_slice %2 {offsets = [0, 352], sizes = [16, 32], strides = [1, 1]} : vector<32x768xf32> to vector<16x32xf32>
    %40 = vector.extract_strided_slice %2 {offsets = [0, 384], sizes = [16, 32], strides = [1, 1]} : vector<32x768xf32> to vector<16x32xf32>
    %41 = vector.extract_strided_slice %2 {offsets = [0, 416], sizes = [16, 32], strides = [1, 1]} : vector<32x768xf32> to vector<16x32xf32>
    %42 = vector.extract_strided_slice %2 {offsets = [0, 448], sizes = [16, 32], strides = [1, 1]} : vector<32x768xf32> to vector<16x32xf32>
    %43 = vector.extract_strided_slice %2 {offsets = [0, 480], sizes = [16, 32], strides = [1, 1]} : vector<32x768xf32> to vector<16x32xf32>
    %44 = vector.extract_strided_slice %2 {offsets = [16, 256], sizes = [16, 32], strides = [1, 1]} : vector<32x768xf32> to vector<16x32xf32>
    %45 = vector.extract_strided_slice %2 {offsets = [16, 288], sizes = [16, 32], strides = [1, 1]} : vector<32x768xf32> to vector<16x32xf32>
    %46 = vector.extract_strided_slice %2 {offsets = [16, 320], sizes = [16, 32], strides = [1, 1]} : vector<32x768xf32> to vector<16x32xf32>
    %47 = vector.extract_strided_slice %2 {offsets = [16, 352], sizes = [16, 32], strides = [1, 1]} : vector<32x768xf32> to vector<16x32xf32>
    %48 = vector.extract_strided_slice %2 {offsets = [16, 384], sizes = [16, 32], strides = [1, 1]} : vector<32x768xf32> to vector<16x32xf32>
    %49 = vector.extract_strided_slice %2 {offsets = [16, 416], sizes = [16, 32], strides = [1, 1]} : vector<32x768xf32> to vector<16x32xf32>
    %50 = vector.extract_strided_slice %2 {offsets = [16, 448], sizes = [16, 32], strides = [1, 1]} : vector<32x768xf32> to vector<16x32xf32>
    %51 = vector.extract_strided_slice %2 {offsets = [16, 480], sizes = [16, 32], strides = [1, 1]} : vector<32x768xf32> to vector<16x32xf32>
    %52 = vector.shape_cast %36 : vector<16x32xf32> to vector<1x16x32xf32>
    %53 = vector.shape_cast %37 : vector<16x32xf32> to vector<1x16x32xf32>
    %54 = vector.shape_cast %38 : vector<16x32xf32> to vector<1x16x32xf32>
    %55 = vector.shape_cast %39 : vector<16x32xf32> to vector<1x16x32xf32>
    %56 = vector.shape_cast %40 : vector<16x32xf32> to vector<1x16x32xf32>
    %57 = vector.shape_cast %41 : vector<16x32xf32> to vector<1x16x32xf32>
    %58 = vector.shape_cast %42 : vector<16x32xf32> to vector<1x16x32xf32>
    %59 = vector.shape_cast %43 : vector<16x32xf32> to vector<1x16x32xf32>
    %60 = vector.shape_cast %44 : vector<16x32xf32> to vector<1x16x32xf32>
    %61 = vector.shape_cast %45 : vector<16x32xf32> to vector<1x16x32xf32>
    %62 = vector.shape_cast %46 : vector<16x32xf32> to vector<1x16x32xf32>
    %63 = vector.shape_cast %47 : vector<16x32xf32> to vector<1x16x32xf32>
    %64 = vector.shape_cast %48 : vector<16x32xf32> to vector<1x16x32xf32>
    %65 = vector.shape_cast %49 : vector<16x32xf32> to vector<1x16x32xf32>
    %66 = vector.shape_cast %50 : vector<16x32xf32> to vector<1x16x32xf32>
    %67 = vector.shape_cast %51 : vector<16x32xf32> to vector<1x16x32xf32>
    %68 = tpu.concatenate %52, %53, %54, %55, %56, %57, %58, %59, %60, %61, %62, %63, %64, %65, %66, %67 in 0 : vector<1x16x32xf32>, vector<1x16x32xf32>, vector<1x16x32xf32>, vector<1x16x32xf32>, vector<1x16x32xf32>, vector<1x16x32xf32>, vector<1x16x32xf32>, vector<1x16x32xf32>, vector<1x16x32xf32>, vector<1x16x32xf32>, vector<1x16x32xf32>, vector<1x16x32xf32>, vector<1x16x32xf32>, vector<1x16x32xf32>, vector<1x16x32xf32>, vector<1x16x32xf32> -> vector<16x16x32xf32>
    %69 = vector.extract_strided_slice %2 {offsets = [0, 512], sizes = [16, 32], strides = [1, 1]} : vector<32x768xf32> to vector<16x32xf32>
    %70 = vector.extract_strided_slice %2 {offsets = [0, 544], sizes = [16, 32], strides = [1, 1]} : vector<32x768xf32> to vector<16x32xf32>
    %71 = vector.extract_strided_slice %2 {offsets = [0, 576], sizes = [16, 32], strides = [1, 1]} : vector<32x768xf32> to vector<16x32xf32>
    %72 = vector.extract_strided_slice %2 {offsets = [0, 608], sizes = [16, 32], strides = [1, 1]} : vector<32x768xf32> to vector<16x32xf32>
    %73 = vector.extract_strided_slice %2 {offsets = [0, 640], sizes = [16, 32], strides = [1, 1]} : vector<32x768xf32> to vector<16x32xf32>
    %74 = vector.extract_strided_slice %2 {offsets = [0, 672], sizes = [16, 32], strides = [1, 1]} : vector<32x768xf32> to vector<16x32xf32>
    %75 = vector.extract_strided_slice %2 {offsets = [0, 704], sizes = [16, 32], strides = [1, 1]} : vector<32x768xf32> to vector<16x32xf32>
    %76 = vector.extract_strided_slice %2 {offsets = [0, 736], sizes = [16, 32], strides = [1, 1]} : vector<32x768xf32> to vector<16x32xf32>
    %77 = vector.extract_strided_slice %2 {offsets = [16, 512], sizes = [16, 32], strides = [1, 1]} : vector<32x768xf32> to vector<16x32xf32>
    %78 = vector.extract_strided_slice %2 {offsets = [16, 544], sizes = [16, 32], strides = [1, 1]} : vector<32x768xf32> to vector<16x32xf32>
    %79 = vector.extract_strided_slice %2 {offsets = [16, 576], sizes = [16, 32], strides = [1, 1]} : vector<32x768xf32> to vector<16x32xf32>
    %80 = vector.extract_strided_slice %2 {offsets = [16, 608], sizes = [16, 32], strides = [1, 1]} : vector<32x768xf32> to vector<16x32xf32>
    %81 = vector.extract_strided_slice %2 {offsets = [16, 640], sizes = [16, 32], strides = [1, 1]} : vector<32x768xf32> to vector<16x32xf32>
    %82 = vector.extract_strided_slice %2 {offsets = [16, 672], sizes = [16, 32], strides = [1, 1]} : vector<32x768xf32> to vector<16x32xf32>
    %83 = vector.extract_strided_slice %2 {offsets = [16, 704], sizes = [16, 32], strides = [1, 1]} : vector<32x768xf32> to vector<16x32xf32>
    %84 = vector.extract_strided_slice %2 {offsets = [16, 736], sizes = [16, 32], strides = [1, 1]} : vector<32x768xf32> to vector<16x32xf32>
    %85 = vector.shape_cast %69 : vector<16x32xf32> to vector<1x16x32xf32>
    %86 = vector.shape_cast %70 : vector<16x32xf32> to vector<1x16x32xf32>
    %87 = vector.shape_cast %71 : vector<16x32xf32> to vector<1x16x32xf32>
    %88 = vector.shape_cast %72 : vector<16x32xf32> to vector<1x16x32xf32>
    %89 = vector.shape_cast %73 : vector<16x32xf32> to vector<1x16x32xf32>
    %90 = vector.shape_cast %74 : vector<16x32xf32> to vector<1x16x32xf32>
    %91 = vector.shape_cast %75 : vector<16x32xf32> to vector<1x16x32xf32>
    %92 = vector.shape_cast %76 : vector<16x32xf32> to vector<1x16x32xf32>
    %93 = vector.shape_cast %77 : vector<16x32xf32> to vector<1x16x32xf32>
    %94 = vector.shape_cast %78 : vector<16x32xf32> to vector<1x16x32xf32>
    %95 = vector.shape_cast %79 : vector<16x32xf32> to vector<1x16x32xf32>
    %96 = vector.shape_cast %80 : vector<16x32xf32> to vector<1x16x32xf32>
    %97 = vector.shape_cast %81 : vector<16x32xf32> to vector<1x16x32xf32>
    %98 = vector.shape_cast %82 : vector<16x32xf32> to vector<1x16x32xf32>
    %99 = vector.shape_cast %83 : vector<16x32xf32> to vector<1x16x32xf32>
    %100 = vector.shape_cast %84 : vector<16x32xf32> to vector<1x16x32xf32>
    %101 = tpu.concatenate %85, %86, %87, %88, %89, %90, %91, %92, %93, %94, %95, %96, %97, %98, %99, %100 in 0 : vector<1x16x32xf32>, vector<1x16x32xf32>, vector<1x16x32xf32>, vector<1x16x32xf32>, vector<1x16x32xf32>, vector<1x16x32xf32>, vector<1x16x32xf32>, vector<1x16x32xf32>, vector<1x16x32xf32>, vector<1x16x32xf32>, vector<1x16x32xf32>, vector<1x16x32xf32>, vector<1x16x32xf32>, vector<1x16x32xf32>, vector<1x16x32xf32>, vector<1x16x32xf32> -> vector<16x16x32xf32>
    "tpu.trace_start"() <{level = 10 : i32, message = "gqd,gkd->gqk"}> : () -> ()
    %cst_3 = arith.constant dense<0.000000e+00> : vector<16x16x16xf32>
    %102 = tpu.matmul %35, %68, %cst_3 {dimension_numbers = #tpu.dot_dimension_numbers<[2], [2], [1], [1], [0, 0, 0, 1, 1, 1], [0], [0]>} : vector<16x16x32xf32>, vector<16x16x32xf32>, vector<16x16x16xf32> -> vector<16x16x16xf32>
    "tpu.trace_stop"() : () -> ()
    %cst_4 = arith.constant dense<0xFF800000> : vector<16x16xf32>
    %103 = vector.multi_reduction <maximumf>, %102, %cst_4 [2] : vector<16x16x16xf32> to vector<16x16xf32>
    %104 = vector.shape_cast %103 : vector<16x16xf32> to vector<16x16x1xf32>
    %105 = vector.broadcast %104 : vector<16x16x1xf32> to vector<16x16x16xf32>
    %106 = arith.subf %102, %105 : vector<16x16x16xf32>
    %107 = math.exp %106 : vector<16x16x16xf32>
    %cst_5 = arith.constant dense<0.000000e+00> : vector<16x16xf32>
    %108 = vector.multi_reduction <add>, %107, %cst_5 [2] : vector<16x16x16xf32> to vector<16x16xf32>
    %109 = vector.shape_cast %108 : vector<16x16xf32> to vector<16x16x1xf32>
    "tpu.trace_start"() <{level = 10 : i32, message = "gqk,gkd->gqd"}> : () -> ()
    %cst_6 = arith.constant dense<0.000000e+00> : vector<16x16x32xf32>
    %110 = tpu.matmul %107, %101, %cst_6 {dimension_numbers = #tpu.dot_dimension_numbers<[2], [1], [1], [2], [0, 0, 0, 1, 1, 2], [0], [0]>} : vector<16x16x16xf32>, vector<16x16x32xf32>, vector<16x16x32xf32> -> vector<16x16x32xf32>
    "tpu.trace_stop"() : () -> ()
    %111 = tpu.reciprocal %109 {approx = true} : vector<16x16x1xf32> -> vector<16x16x1xf32>
    %112 = vector.broadcast %111 : vector<16x16x1xf32> to vector<16x16x32xf32>
    %113 = arith.mulf %110, %112 : vector<16x16x32xf32>
    %114 = vector.extract_strided_slice %113 {offsets = [0, 0, 0], sizes = [1, 16, 32], strides = [1, 1, 1]} : vector<16x16x32xf32> to vector<1x16x32xf32>
    %115 = vector.shape_cast %114 : vector<1x16x32xf32> to vector<16x32xf32>
    %116 = vector.extract_strided_slice %113 {offsets = [1, 0, 0], sizes = [1, 16, 32], strides = [1, 1, 1]} : vector<16x16x32xf32> to vector<1x16x32xf32>
    %117 = vector.shape_cast %116 : vector<1x16x32xf32> to vector<16x32xf32>
    %118 = vector.extract_strided_slice %113 {offsets = [2, 0, 0], sizes = [1, 16, 32], strides = [1, 1, 1]} : vector<16x16x32xf32> to vector<1x16x32xf32>
    %119 = vector.shape_cast %118 : vector<1x16x32xf32> to vector<16x32xf32>
    %120 = vector.extract_strided_slice %113 {offsets = [3, 0, 0], sizes = [1, 16, 32], strides = [1, 1, 1]} : vector<16x16x32xf32> to vector<1x16x32xf32>
    %121 = vector.shape_cast %120 : vector<1x16x32xf32> to vector<16x32xf32>
    %122 = vector.extract_strided_slice %113 {offsets = [4, 0, 0], sizes = [1, 16, 32], strides = [1, 1, 1]} : vector<16x16x32xf32> to vector<1x16x32xf32>
    %123 = vector.shape_cast %122 : vector<1x16x32xf32> to vector<16x32xf32>
    %124 = vector.extract_strided_slice %113 {offsets = [5, 0, 0], sizes = [1, 16, 32], strides = [1, 1, 1]} : vector<16x16x32xf32> to vector<1x16x32xf32>
    %125 = vector.shape_cast %124 : vector<1x16x32xf32> to vector<16x32xf32>
    %126 = vector.extract_strided_slice %113 {offsets = [6, 0, 0], sizes = [1, 16, 32], strides = [1, 1, 1]} : vector<16x16x32xf32> to vector<1x16x32xf32>
    %127 = vector.shape_cast %126 : vector<1x16x32xf32> to vector<16x32xf32>
    %128 = vector.extract_strided_slice %113 {offsets = [7, 0, 0], sizes = [1, 16, 32], strides = [1, 1, 1]} : vector<16x16x32xf32> to vector<1x16x32xf32>
    %129 = vector.shape_cast %128 : vector<1x16x32xf32> to vector<16x32xf32>
    %130 = tpu.concatenate %115, %117, %119, %121, %123, %125, %127, %129 in 1 : vector<16x32xf32>, vector<16x32xf32>, vector<16x32xf32>, vector<16x32xf32>, vector<16x32xf32>, vector<16x32xf32>, vector<16x32xf32>, vector<16x32xf32> -> vector<16x256xf32>
    %131 = vector.extract_strided_slice %113 {offsets = [8, 0, 0], sizes = [1, 16, 32], strides = [1, 1, 1]} : vector<16x16x32xf32> to vector<1x16x32xf32>
    %132 = vector.shape_cast %131 : vector<1x16x32xf32> to vector<16x32xf32>
    %133 = vector.extract_strided_slice %113 {offsets = [9, 0, 0], sizes = [1, 16, 32], strides = [1, 1, 1]} : vector<16x16x32xf32> to vector<1x16x32xf32>
    %134 = vector.shape_cast %133 : vector<1x16x32xf32> to vector<16x32xf32>
    %135 = vector.extract_strided_slice %113 {offsets = [10, 0, 0], sizes = [1, 16, 32], strides = [1, 1, 1]} : vector<16x16x32xf32> to vector<1x16x32xf32>
    %136 = vector.shape_cast %135 : vector<1x16x32xf32> to vector<16x32xf32>
    %137 = vector.extract_strided_slice %113 {offsets = [11, 0, 0], sizes = [1, 16, 32], strides = [1, 1, 1]} : vector<16x16x32xf32> to vector<1x16x32xf32>
    %138 = vector.shape_cast %137 : vector<1x16x32xf32> to vector<16x32xf32>
    %139 = vector.extract_strided_slice %113 {offsets = [12, 0, 0], sizes = [1, 16, 32], strides = [1, 1, 1]} : vector<16x16x32xf32> to vector<1x16x32xf32>
    %140 = vector.shape_cast %139 : vector<1x16x32xf32> to vector<16x32xf32>
    %141 = vector.extract_strided_slice %113 {offsets = [13, 0, 0], sizes = [1, 16, 32], strides = [1, 1, 1]} : vector<16x16x32xf32> to vector<1x16x32xf32>
    %142 = vector.shape_cast %141 : vector<1x16x32xf32> to vector<16x32xf32>
    %143 = vector.extract_strided_slice %113 {offsets = [14, 0, 0], sizes = [1, 16, 32], strides = [1, 1, 1]} : vector<16x16x32xf32> to vector<1x16x32xf32>
    %144 = vector.shape_cast %143 : vector<1x16x32xf32> to vector<16x32xf32>
    %145 = vector.extract_strided_slice %113 {offsets = [15, 0, 0], sizes = [1, 16, 32], strides = [1, 1, 1]} : vector<16x16x32xf32> to vector<1x16x32xf32>
    %146 = vector.shape_cast %145 : vector<1x16x32xf32> to vector<16x32xf32>
    %147 = tpu.concatenate %132, %134, %136, %138, %140, %142, %144, %146 in 1 : vector<16x32xf32>, vector<16x32xf32>, vector<16x32xf32>, vector<16x32xf32>, vector<16x32xf32>, vector<16x32xf32>, vector<16x32xf32>, vector<16x32xf32> -> vector<16x256xf32>
    %148 = tpu.concatenate %130, %147 in 0 : vector<16x256xf32>, vector<16x256xf32> -> vector<32x256xf32>
    %c0_7 = arith.constant 0 : index
    %c0_8 = arith.constant 0 : index
    %149 = vector.load %arg3[%c0_7, %c0_8] : memref<256x256xf32, #tpu.memory_space<vmem>>, vector<256x256xf32>
    %cst_9 = arith.constant dense<0.000000e+00> : vector<32x256xf32>
    %150 = tpu.matmul %148, %149, %cst_9 {dimension_numbers = #tpu.dot_dimension_numbers<[1], [0], [0], [1], [0, 0, 1, 1], [], []>} : vector<32x256xf32>, vector<256x256xf32>, vector<32x256xf32> -> vector<32x256xf32>
    %c0_10 = arith.constant 0 : index
    %c0_11 = arith.constant 0 : index
    %151 = vector.load %arg4[%c0_10, %c0_11] : memref<1x256xf32, #tpu.memory_space<vmem>>, vector<1x256xf32>
    %152 = vector.broadcast %151 : vector<1x256xf32> to vector<32x256xf32>
    %153 = arith.addf %150, %152 : vector<32x256xf32>
    %c0_12 = arith.constant 0 : index
    %c0_13 = arith.constant 0 : index
    %154 = vector.load %arg5[%c0_12, %c0_13] : memref<32x256xf32, #tpu.memory_space<vmem>>, vector<32x256xf32>
    tpu.vector_store %arg5[%c0_12, %c0_13], %153 {strides = array<i32>} : memref<32x256xf32, #tpu.memory_space<vmem>>, vector<32x256xf32>,
    return
  }
  func.func @transform_0(%arg0: i32) -> (i32, i32) {
    %c0_i32 = arith.constant 0 : i32
    %c0_i32_0 = arith.constant 0 : i32
    return %arg0, %c0_i32 : i32, i32
  }
  func.func @transform_1(%arg0: i32) -> (i32, i32) {
    %c0_i32 = arith.constant 0 : i32
    %c0_i32_0 = arith.constant 0 : i32
    %c0_i32_1 = arith.constant 0 : i32
    return %c0_i32, %c0_i32_0 : i32, i32
  }
  func.func @transform_2(%arg0: i32) -> (i32, i32) {
    %c0_i32 = arith.constant 0 : i32
    %c0_i32_0 = arith.constant 0 : i32
    %c0_i32_1 = arith.constant 0 : i32
    return %c0_i32, %c0_i32_0 : i32, i32
  }
  func.func @transform_3(%arg0: i32) -> (i32, i32) {
    %c0_i32 = arith.constant 0 : i32
    %c0_i32_0 = arith.constant 0 : i32
    %c0_i32_1 = arith.constant 0 : i32
    return %c0_i32, %c0_i32_0 : i32, i32
  }
  func.func @transform_4(%arg0: i32) -> (i32, i32) {
    %c0_i32 = arith.constant 0 : i32
    %c0_i32_0 = arith.constant 0 : i32
    return %arg0, %c0_i32 : i32, i32
  }
}

</mosaic_0001>

<llo_original>
// kernel: tpu_custom_call.1
$region0: #{tpu_custom_call.1}
  #allocation0 [shape = 'u32[]', space=smem, size = 0x4, offset = 0x4, fixed_abs, tag = 'smem constant byte address 0x4 - core index']
  #allocation1 [shape = 'u32[144,128]{1,0:T(1,128)}', space=vmem, size = 0x12000, scoped, tag = 'internal scratch']
  %s0 = inlined_call_operand.hbm [shape: f32[32,256], index: 0, kind: input, shape index: {}]
  %s1 = inlined_call_operand.hbm [shape: f32[256,768], index: 1, kind: input, shape index: {}]
  %s2 = inlined_call_operand.hbm [shape: f32[256,256], index: 2, kind: input, shape index: {}]
  %s3 = inlined_call_operand.vmem [shape: f32[1,256], index: 3, kind: input, shape index: {}]
  %s4 = inlined_call_operand.hbm [shape: f32[32,256], index: 4, kind: output, shape index: {}]
  %s5 = sld [smem:[#allocation0]]
  $region38: #{tpu_custom_call.1} parent=0
    _
  %s7 = ssub.s32 1, %s5
  %s8 = scalar_select 0, %s7, %s5
  $region1: #{tpu_custom_call.1} parent=0
    #allocation2 [shape = 'u8[32768]{0}', space=vmem, size = 0x8000, scoped, tag = 'input window, operand 0, single buffered']
    #allocation3 [shape = 's32[1]{0}', space=sflag, size = 0x4, scoped, tag = 'scoped memory for tpu_custom_call.1']
    #allocation4 [shape = 's32[1]{0}', space=sflag, size = 0x4, scoped, tag = 'scoped memory for tpu_custom_call.1']
    #allocation5 [shape = 'u8[786432]{0}', space=vmem, size = 0xc0000, scoped, tag = 'input window, operand 1, single buffered']
    #allocation6 [shape = 's32[1]{0}', space=sflag, size = 0x4, scoped, tag = 'scoped memory for tpu_custom_call.1']
    #allocation7 [shape = 'u8[262144]{0}', space=vmem, size = 0x40000, scoped, tag = 'input window, operand 2, single buffered']
    #allocation8 [shape = 'u8[32768]{0}', space=vmem, size = 0x8000, scoped, tag = 'output window, operand 0, single buffered']
    %9 = vsyncpa [#allocation3], 0
    %10 = vsyncpa [#allocation6], 0
    %11 = vsyncpa [#allocation4], 0
    // Predicated region
    $region2: #{tpu_custom_call.1} parent=1 // pred_check
      _
    $region3: #{tpu_custom_call.1} parent=1 // pred_check_branch
      %13 = sbr.rel (0) target = $region5
    $region4: #{tpu_custom_call.1} parent=1 // pred_region
      %s15 = ssub.s32 1024, 1024
      %16 = vsyncadd [#allocation3], %s15
      %s17 = sshll.u32 [#allocation2], 4
      %s18 = int_to_ptr.vmem [resolvable:$true] %s17
      %23 = dma.hbm_to_vmem [thread:$0]  %s0, 1024, %s18, [#allocation3], 256, 256, 16
    $region5: #{tpu_custom_call.1} parent=1 // pred_fallthru
      _
    // Predicated region
    $region6: #{tpu_custom_call.1} parent=1 // pred_check
      _
    $region7: #{tpu_custom_call.1} parent=1 // pred_check_branch
      %25 = sbr.rel (0) target = $region9
    $region8: #{tpu_custom_call.1} parent=1 // pred_region
      %s27 = ssub.s32 24576, 24576
      %28 = vsyncadd [#allocation6], %s27
      %s29 = sshll.u32 [#allocation5], 4
      %s30 = int_to_ptr.vmem [resolvable:$true] %s29
      %35 = dma.hbm_to_vmem [thread:$0]  %s1, 24576, %s30, [#allocation6], 768, 768, 48
    $region9: #{tpu_custom_call.1} parent=1 // pred_fallthru
      _
    // Predicated region
    $region10: #{tpu_custom_call.1} parent=1 // pred_check
      _
    $region11: #{tpu_custom_call.1} parent=1 // pred_check_branch
      %37 = sbr.rel (0) target = $region13
    $region12: #{tpu_custom_call.1} parent=1 // pred_region
      %s39 = ssub.s32 8192, 8192
      %40 = vsyncadd [#allocation6], %s39
      %s41 = sshll.u32 [#allocation7], 4
      %s42 = int_to_ptr.vmem [resolvable:$true] %s41
      %47 = dma.hbm_to_vmem [thread:$0]  %s2, 8192, %s42, [#allocation6], 256, 256, 16
    $region13: #{tpu_custom_call.1} parent=1 // pred_fallthru
      _
    // Predicated region
    $region14: #{tpu_custom_call.1} parent=1 // pred_check
      _
    $region15: #{tpu_custom_call.1} parent=1 // pred_check_branch
      %49 = sbr.rel (0) target = $region17
    $region16: #{tpu_custom_call.1} parent=1 // pred_region
      _
    $region17: #{tpu_custom_call.1} parent=1 // pred_fallthru
      _
    // Predicated region
    $region18: #{tpu_custom_call.1} parent=1 // pred_check
      _
    $region19: #{tpu_custom_call.1} parent=1 // pred_check_branch
      %51 = sbr.rel (0) target = $region21
    $region20: #{tpu_custom_call.1} parent=1 // pred_region
      %52 = dma.done [#allocation3], 1024
    $region21: #{tpu_custom_call.1} parent=1 // pred_fallthru
      _
    // Predicated region
    $region22: #{tpu_custom_call.1} parent=1 // pred_check
      _
    $region23: #{tpu_custom_call.1} parent=1 // pred_check_branch
      %54 = sbr.rel (0) target = $region25
    $region24: #{tpu_custom_call.1} parent=1 // pred_region
      %55 = dma.done [#allocation6], 24576
    $region25: #{tpu_custom_call.1} parent=1 // pred_fallthru
      _
    // Predicated region
    $region26: #{tpu_custom_call.1} parent=1 // pred_check
      _
    $region27: #{tpu_custom_call.1} parent=1 // pred_check_branch
      %57 = sbr.rel (0) target = $region29
    $region28: #{tpu_custom_call.1} parent=1 // pred_region
      %58 = dma.done [#allocation6], 8192
    $region29: #{tpu_custom_call.1} parent=1 // pred_fallthru
      _
    %v59 = vld [vmem:[#allocation2] sm:$0xff]
    %v60 = vld [vmem:[#allocation2 + $0x8] sm:$0xff]
    %v61 = vld [vmem:[#allocation2 + $0x10] sm:$0xff]
    %v62 = vld [vmem:[#allocation2 + $0x18] sm:$0xff]
    %v63 = vld [vmem:[#allocation2 + $0x20] sm:$0xff]
    %v64 = vld [vmem:[#allocation2 + $0x28] sm:$0xff]
    %v65 = vld [vmem:[#allocation2 + $0x30] sm:$0xff]
    %v66 = vld [vmem:[#allocation2 + $0x38] sm:$0xff]
    %v67 = vld [vmem:[#allocation5] sm:$0xff]
    %v68 = vld [vmem:[#allocation5 + $0x8] sm:$0xff]
    %v69 = vld [vmem:[#allocation5 + $0x10] sm:$0xff]
    %v70 = vld [vmem:[#allocation5 + $0x18] sm:$0xff]
    %v71 = vld [vmem:[#allocation5 + $0x20] sm:$0xff]
    %v72 = vld [vmem:[#allocation5 + $0x28] sm:$0xff]
    %v73 = vld [vmem:[#allocation5 + $0x30] sm:$0xff]
    %v74 = vld [vmem:[#allocation5 + $0x38] sm:$0xff]
    %v75 = vld [vmem:[#allocation5 + $0x40] sm:$0xff]
    %v76 = vld [vmem:[#allocation5 + $0x48] sm:$0xff]
    %v77 = vld [vmem:[#allocation5 + $0x50] sm:$0xff]
    %v78 = vld [vmem:[#allocation5 + $0x58] sm:$0xff]
    %v79 = vld [vmem:[#allocation5 + $0x60] sm:$0xff]
    %v80 = vld [vmem:[#allocation5 + $0x68] sm:$0xff]
    %v81 = vld [vmem:[#allocation5 + $0x70] sm:$0xff]
    %v82 = vld [vmem:[#allocation5 + $0x78] sm:$0xff]
    %v83 = vld [vmem:[#allocation5 + $0x80] sm:$0xff]
    %v84 = vld [vmem:[#allocation5 + $0x88] sm:$0xff]
    %v85 = vld [vmem:[#allocation5 + $0x90] sm:$0xff]
    %v86 = vld [vmem:[#allocation5 + $0x98] sm:$0xff]
    %v87 = vld [vmem:[#allocation5 + $0xa0] sm:$0xff]
    %v88 = vld [vmem:[#allocation5 + $0xa8] sm:$0xff]
    %v89 = vld [vmem:[#allocation5 + $0xb0] sm:$0xff]
    %v90 = vld [vmem:[#allocation5 + $0xb8] sm:$0xff]
    %v91 = vld [vmem:[#allocation5 + $0xc0] sm:$0xff]
    %v92 = vld [vmem:[#allocation5 + $0xc8] sm:$0xff]
    %v93 = vld [vmem:[#allocation5 + $0xd0] sm:$0xff]
    %v94 = vld [vmem:[#allocation5 + $0xd8] sm:$0xff]
    %v95 = vld [vmem:[#allocation5 + $0xe0] sm:$0xff]
    %v96 = vld [vmem:[#allocation5 + $0xe8] sm:$0xff]
    %v97 = vld [vmem:[#allocation5 + $0xf0] sm:$0xff]
    %v98 = vld [vmem:[#allocation5 + $0xf8] sm:$0xff]
    %v99 = vld [vmem:[#allocation5 + $0x100] sm:$0xff]
    %v100 = vld [vmem:[#allocation5 + $0x108] sm:$0xff]
    %v101 = vld [vmem:[#allocation5 + $0x110] sm:$0xff]
    %v102 = vld [vmem:[#allocation5 + $0x118] sm:$0xff]
    %v103 = vld [vmem:[#allocation5 + $0x120] sm:$0xff]
    %v104 = vld [vmem:[#allocation5 + $0x128] sm:$0xff]
    %v105 = vld [vmem:[#allocation5 + $0x130] sm:$0xff]
    %v106 = vld [vmem:[#allocation5 + $0x138] sm:$0xff]
    %v107 = vld [vmem:[#allocation5 + $0x140] sm:$0xff]
    %v108 = vld [vmem:[#allocation5 + $0x148] sm:$0xff]
    %v109 = vld [vmem:[#allocation5 + $0x150] sm:$0xff]
    %v110 = vld [vmem:[#allocation5 + $0x158] sm:$0xff]
    %v111 = vld [vmem:[#allocation5 + $0x160] sm:$0xff]
    %v112 = vld [vmem:[#allocation5 + $0x168] sm:$0xff]
    %v113 = vld [vmem:[#allocation5 + $0x170] sm:$0xff]
    %v114 = vld [vmem:[#allocation5 + $0x178] sm:$0xff]
    %v115 = vld [vmem:[#allocation5 + $0x180] sm:$0xff]
    %v116 = vld [vmem:[#allocation5 + $0x188] sm:$0xff]
    %v117 = vld [vmem:[#allocation5 + $0x190] sm:$0xff]
    %v118 = vld [vmem:[#allocation5 + $0x198] sm:$0xff]
    %v119 = vld [vmem:[#allocation5 + $0x1a0] sm:$0xff]
    %v120 = vld [vmem:[#allocation5 + $0x1a8] sm:$0xff]
    %v121 = vld [vmem:[#allocation5 + $0x1b0] sm:$0xff]
    %v122 = vld [vmem:[#allocation5 + $0x1b8] sm:$0xff]
    %v123 = vld [vmem:[#allocation5 + $0x1c0] sm:$0xff]
    %v124 = vld [vmem:[#allocation5 + $0x1c8] sm:$0xff]
    %v125 = vld [vmem:[#allocation5 + $0x1d0] sm:$0xff]
    %v126 = vld [vmem:[#allocation5 + $0x1d8] sm:$0xff]
    %v127 = vld [vmem:[#allocation5 + $0x1e0] sm:$0xff]
    %v128 = vld [vmem:[#allocation5 + $0x1e8] sm:$0xff]
    %v129 = vld [vmem:[#allocation5 + $0x1f0] sm:$0xff]
    %v130 = vld [vmem:[#allocation5 + $0x1f8] sm:$0xff]
    %v131 = vld [vmem:[#allocation5 + $0x200] sm:$0xff]
    %v132 = vld [vmem:[#allocation5 + $0x208] sm:$0xff]
    %v133 = vld [vmem:[#allocation5 + $0x210] sm:$0xff]
    %v134 = vld [vmem:[#allocation5 + $0x218] sm:$0xff]
    %v135 = vld [vmem:[#allocation5 + $0x220] sm:$0xff]
    %v136 = vld [vmem:[#allocation5 + $0x228] sm:$0xff]
    %v137 = vld [vmem:[#allocation5 + $0x230] sm:$0xff]
    %v138 = vld [vmem:[#allocation5 + $0x238] sm:$0xff]
    %v139 = vld [vmem:[#allocation5 + $0x240] sm:$0xff]
    %v140 = vld [vmem:[#allocation5 + $0x248] sm:$0xff]
    %v141 = vld [vmem:[#allocation5 + $0x250] sm:$0xff]
    %v142 = vld [vmem:[#allocation5 + $0x258] sm:$0xff]
    %v143 = vld [vmem:[#allocation5 + $0x260] sm:$0xff]
    %v144 = vld [vmem:[#allocation5 + $0x268] sm:$0xff]
    %v145 = vld [vmem:[#allocation5 + $0x270] sm:$0xff]
    %v146 = vld [vmem:[#allocation5 + $0x278] sm:$0xff]
    %v147 = vld [vmem:[#allocation5 + $0x280] sm:$0xff]
    %v148 = vld [vmem:[#allocation5 + $0x288] sm:$0xff]
    %v149 = vld [vmem:[#allocation5 + $0x290] sm:$0xff]
    %v150 = vld [vmem:[#allocation5 + $0x298] sm:$0xff]
    %v151 = vld [vmem:[#allocation5 + $0x2a0] sm:$0xff]
    %v152 = vld [vmem:[#allocation5 + $0x2a8] sm:$0xff]
    %v153 = vld [vmem:[#allocation5 + $0x2b0] sm:$0xff]
    %v154 = vld [vmem:[#allocation5 + $0x2b8] sm:$0xff]
    %v155 = vld [vmem:[#allocation5 + $0x2c0] sm:$0xff]
    %v156 = vld [vmem:[#allocation5 + $0x2c8] sm:$0xff]
    %v157 = vld [vmem:[#allocation5 + $0x2d0] sm:$0xff]
    %v158 = vld [vmem:[#allocation5 + $0x2d8] sm:$0xff]
    %v159 = vld [vmem:[#allocation5 + $0x2e0] sm:$0xff]
    %v160 = vld [vmem:[#allocation5 + $0x2e8] sm:$0xff]
    %v161 = vld [vmem:[#allocation5 + $0x2f0] sm:$0xff]
    %v162 = vld [vmem:[#allocation5 + $0x2f8] sm:$0xff]
    %v163 = vld [vmem:[#allocation5 + $0x300] sm:$0xff]
    %v164 = vld [vmem:[#allocation5 + $0x308] sm:$0xff]
    %v165 = vld [vmem:[#allocation5 + $0x310] sm:$0xff]
    %v166 = vld [vmem:[#allocation5 + $0x318] sm:$0xff]
    %v167 = vld [vmem:[#allocation5 + $0x320] sm:$0xff]
    %v168 = vld [vmem:[#allocation5 + $0x328] sm:$0xff]
    %v169 = vld [vmem:[#allocation5 + $0x330] sm:$0xff]
    %v170 = vld [vmem:[#allocation5 + $0x338] sm:$0xff]
    %v171 = vld [vmem:[#allocation5 + $0x340] sm:$0xff]
    %v172 = vld [vmem:[#allocation5 + $0x348] sm:$0xff]
    %v173 = vld [vmem:[#allocation5 + $0x350] sm:$0xff]
    %v174 = vld [vmem:[#allocation5 + $0x358] sm:$0xff]
    %v175 = vld [vmem:[#allocation5 + $0x360] sm:$0xff]
    %v176 = vld [vmem:[#allocation5 + $0x368] sm:$0xff]
    %v177 = vld [vmem:[#allocation5 + $0x370] sm:$0xff]
    %v178 = vld [vmem:[#allocation5 + $0x378] sm:$0xff]
    %v179 = vld [vmem:[#allocation5 + $0x380] sm:$0xff]
    %v180 = vld [vmem:[#allocation5 + $0x388] sm:$0xff]
    %v181 = vld [vmem:[#allocation5 + $0x390] sm:$0xff]
    %v182 = vld [vmem:[#allocation5 + $0x398] sm:$0xff]
    %v183 = vld [vmem:[#allocation5 + $0x3a0] sm:$0xff]
    %v184 = vld [vmem:[#allocation5 + $0x3a8] sm:$0xff]
    %v185 = vld [vmem:[#allocation5 + $0x3b0] sm:$0xff]
    %v186 = vld [vmem:[#allocation5 + $0x3b8] sm:$0xff]
    %v187 = vld [vmem:[#allocation5 + $0x3c0] sm:$0xff]
    %v188 = vld [vmem:[#allocation5 + $0x3c8] sm:$0xff]
    %v189 = vld [vmem:[#allocation5 + $0x3d0] sm:$0xff]
    %v190 = vld [vmem:[#allocation5 + $0x3d8] sm:$0xff]
    %v191 = vld [vmem:[#allocation5 + $0x3e0] sm:$0xff]
    %v192 = vld [vmem:[#allocation5 + $0x3e8] sm:$0xff]
    %v193 = vld [vmem:[#allocation5 + $0x3f0] sm:$0xff]
    %v194 = vld [vmem:[#allocation5 + $0x3f8] sm:$0xff]
    %v195 = vld [vmem:[#allocation5 + $0x400] sm:$0xff]
    %v196 = vld [vmem:[#allocation5 + $0x408] sm:$0xff]
    %v197 = vld [vmem:[#allocation5 + $0x410] sm:$0xff]
    %v198 = vld [vmem:[#allocation5 + $0x418] sm:$0xff]
    %v199 = vld [vmem:[#allocation5 + $0x420] sm:$0xff]
    %v200 = vld [vmem:[#allocation5 + $0x428] sm:$0xff]
    %v201 = vld [vmem:[#allocation5 + $0x430] sm:$0xff]
    %v202 = vld [vmem:[#allocation5 + $0x438] sm:$0xff]
    %v203 = vld [vmem:[#allocation5 + $0x440] sm:$0xff]
    %v204 = vld [vmem:[#allocation5 + $0x448] sm:$0xff]
    %v205 = vld [vmem:[#allocation5 + $0x450] sm:$0xff]
    %v206 = vld [vmem:[#allocation5 + $0x458] sm:$0xff]
    %v207 = vld [vmem:[#allocation5 + $0x460] sm:$0xff]
    %v208 = vld [vmem:[#allocation5 + $0x468] sm:$0xff]
    %v209 = vld [vmem:[#allocation5 + $0x470] sm:$0xff]
    %v210 = vld [vmem:[#allocation5 + $0x478] sm:$0xff]
    %v211 = vld [vmem:[#allocation5 + $0x480] sm:$0xff]
    %v212 = vld [vmem:[#allocation5 + $0x488] sm:$0xff]
    %v213 = vld [vmem:[#allocation5 + $0x490] sm:$0xff]
    %v214 = vld [vmem:[#allocation5 + $0x498] sm:$0xff]
    %v215 = vld [vmem:[#allocation5 + $0x4a0] sm:$0xff]
    %v216 = vld [vmem:[#allocation5 + $0x4a8] sm:$0xff]
    %v217 = vld [vmem:[#allocation5 + $0x4b0] sm:$0xff]
    %v218 = vld [vmem:[#allocation5 + $0x4b8] sm:$0xff]
    %v219 = vld [vmem:[#allocation5 + $0x4c0] sm:$0xff]
    %v220 = vld [vmem:[#allocation5 + $0x4c8] sm:$0xff]
    %v221 = vld [vmem:[#allocation5 + $0x4d0] sm:$0xff]
    %v222 = vld [vmem:[#allocation5 + $0x4d8] sm:$0xff]
    %v223 = vld [vmem:[#allocation5 + $0x4e0] sm:$0xff]
    %v224 = vld [vmem:[#allocation5 + $0x4e8] sm:$0xff]
    %v225 = vld [vmem:[#allocation5 + $0x4f0] sm:$0xff]
    %v226 = vld [vmem:[#allocation5 + $0x4f8] sm:$0xff]
    %v227 = vld [vmem:[#allocation5 + $0x500] sm:$0xff]
    %v228 = vld [vmem:[#allocation5 + $0x508] sm:$0xff]
    %v229 = vld [vmem:[#allocation5 + $0x510] sm:$0xff]
    %v230 = vld [vmem:[#allocation5 + $0x518] sm:$0xff]
    %v231 = vld [vmem:[#allocation5 + $0x520] sm:$0xff]
    %v232 = vld [vmem:[#allocation5 + $0x528] sm:$0xff]
    %v233 = vld [vmem:[#allocation5 + $0x530] sm:$0xff]
    %v234 = vld [vmem:[#allocation5 + $0x538] sm:$0xff]
    %v235 = vld [vmem:[#allocation5 + $0x540] sm:$0xff]
    %v236 = vld [vmem:[#allocation5 + $0x548] sm:$0xff]
    %v237 = vld [vmem:[#allocation5 + $0x550] sm:$0xff]
    %v238 = vld [vmem:[#allocation5 + $0x558] sm:$0xff]
    %v239 = vld [vmem:[#allocation5 + $0x560] sm:$0xff]
    %v240 = vld [vmem:[#allocation5 + $0x568] sm:$0xff]
    %v241 = vld [vmem:[#allocation5 + $0x570] sm:$0xff]
    %v242 = vld [vmem:[#allocation5 + $0x578] sm:$0xff]
    %v243 = vld [vmem:[#allocation5 + $0x580] sm:$0xff]
    %v244 = vld [vmem:[#allocation5 + $0x588] sm:$0xff]
    %v245 = vld [vmem:[#allocation5 + $0x590] sm:$0xff]
    %v246 = vld [vmem:[#allocation5 + $0x598] sm:$0xff]
    %v247 = vld [vmem:[#allocation5 + $0x5a0] sm:$0xff]
    %v248 = vld [vmem:[#allocation5 + $0x5a8] sm:$0xff]
    %v249 = vld [vmem:[#allocation5 + $0x5b0] sm:$0xff]
    %v250 = vld [vmem:[#allocation5 + $0x5b8] sm:$0xff]
    %v251 = vld [vmem:[#allocation5 + $0x5c0] sm:$0xff]
    %v252 = vld [vmem:[#allocation5 + $0x5c8] sm:$0xff]
    %v253 = vld [vmem:[#allocation5 + $0x5d0] sm:$0xff]
    %v254 = vld [vmem:[#allocation5 + $0x5d8] sm:$0xff]
    %v255 = vld [vmem:[#allocation5 + $0x5e0] sm:$0xff]
    %v256 = vld [vmem:[#allocation5 + $0x5e8] sm:$0xff]
    %v257 = vld [vmem:[#allocation5 + $0x5f0] sm:$0xff]
    %v258 = vld [vmem:[#allocation5 + $0x5f8] sm:$0xff]
    %259 = vmatprep.subr.mxu0 %v158
    %260 = vmatpush1.msra.mxu0 %v157
    %261 = vmatprep.subr.mxu0 %v152
    %262 = vmatpush1.msra.mxu0 %v151
    %263 = vmatprep.subr.mxu0 %v146
    %264 = vmatpush1.msra.mxu0 %v145
    %265 = vmatprep.subr.mxu0 %v140
    %266 = vmatpush1.msra.mxu0 %v139
    %267 = vmatprep.subr.mxu0 %v134
    %268 = vmatpush1.msra.mxu0 %v133
    %269 = vmatprep.subr.mxu0 %v128
    %270 = vmatpush1.msra.mxu0 %v127
    %271 = vmatprep.subr.mxu0 %v122
    %272 = vmatpush1.msra.mxu0 %v121
    %273 = vmatprep.subr.mxu0 %v116
    %274 = vmatpush1.msra.mxu0 %v115
    %275 = vmatprep.subr.mxu0 %v110
    %276 = vmatpush1.msra.mxu0 %v109
    %277 = vmatprep.subr.mxu0 %v104
    %278 = vmatpush1.msra.mxu0 %v103
    %279 = vmatprep.subr.mxu0 %v98
    %280 = vmatpush1.msra.mxu0 %v97
    %281 = vmatprep.subr.mxu0 %v92
    %282 = vmatpush1.msra.mxu0 %v91
    %283 = vmatprep.subr.mxu0 %v86
    %284 = vmatpush1.msra.mxu0 %v85
    %285 = vmatprep.subr.mxu0 %v80
    %286 = vmatpush1.msra.mxu0 %v79
    %287 = vmatprep.subr.mxu0 %v74
    %288 = vmatpush1.msra.mxu0 %v73
    %289 = vmatprep.subr.mxu0 %v68
    %290 = vmatpush1.msra.mxu0 %v67
    %291 = vmatprep.subr.mxu0 %v254
    %292 = vmatpush2.msra.mxu0 %v253
    %293 = vmatprep.subr.mxu0 %v248
    %294 = vmatpush2.msra.mxu0 %v247
    %295 = vmatprep.subr.mxu0 %v242
    %296 = vmatpush2.msra.mxu0 %v241
    %297 = vmatprep.subr.mxu0 %v236
    %298 = vmatpush2.msra.mxu0 %v235
    %299 = vmatprep.subr.mxu0 %v230
    %300 = vmatpush2.msra.mxu0 %v229
    %301 = vmatprep.subr.mxu0 %v224
    %302 = vmatpush2.msra.mxu0 %v223
    %303 = vmatprep.subr.mxu0 %v218
    %304 = vmatpush2.msra.mxu0 %v217
    %305 = vmatprep.subr.mxu0 %v212
    %306 = vmatpush2.msra.mxu0 %v211
    %307 = vmatprep.subr.mxu0 %v206
    %308 = vmatpush2.msra.mxu0 %v205
    %309 = vmatprep.subr.mxu0 %v200
    %310 = vmatpush2.msra.mxu0 %v199
    %311 = vmatprep.subr.mxu0 %v194
    %312 = vmatpush2.msra.mxu0 %v193
    %313 = vmatprep.subr.mxu0 %v188
    %314 = vmatpush2.msra.mxu0 %v187
    %315 = vmatprep.subr.mxu0 %v182
    %316 = vmatpush2.msra.mxu0 %v181
    %317 = vmatprep.subr.mxu0 %v176
    %318 = vmatpush2.msra.mxu0 %v175
    %319 = vmatprep.subr.mxu0 %v170
    %320 = vmatpush2.msra.mxu0 %v169
    %321 = vmatprep.subr.mxu0 %v164
    %322 = vmatpush2.msra.mxu0 %v163
    %323 = vmatprep.mubr.f32.mxu0 %v60
    %324 = vmatmul.mubr.f32.gmra.mxu0 %v59
    %v325 = vpop.f32.mrf.mxu0
    %v326 = vadd.f32 0.0, %v325
    %v327 = vpop.f32.mrf.mxu0
    %v328 = vadd.f32 0.0, %v327
    %329 = vmatprep.mubr.f32.mxu0 %v62
    %330 = vmatmul.mubr.f32.gmra.mxu0 %v61
    %v331 = vpop.f32.mrf.mxu0
    %v332 = vadd.f32 0.0, %v331
    %v333 = vpop.f32.mrf.mxu0
    %v334 = vadd.f32 0.0, %v333
    %335 = vmatprep.mubr.f32.mxu0 %v64
    %336 = vmatmul.mubr.f32.gmra.mxu0 %v63
    %v337 = vpop.f32.mrf.mxu0
    %v338 = vadd.f32 0.0, %v337
    %v339 = vpop.f32.mrf.mxu0
    %v340 = vadd.f32 0.0, %v339
    %341 = vmatprep.mubr.f32.mxu0 %v66
    %342 = vmatmul.mubr.f32.gmra.mxu0 %v65
    %v343 = vpop.f32.mrf.mxu0
    %v344 = vadd.f32 0.0, %v343
    %v345 = vpop.f32.mrf.mxu0
    %v346 = vadd.f32 0.0, %v345
    %347 = vdwg.mxu0
    %348 = vmatprep.subr.mxu0 %v160
    %349 = vmatpush1.msra.mxu0 %v159
    %350 = vmatprep.subr.mxu0 %v154
    %351 = vmatpush1.msra.mxu0 %v153
    %352 = vmatprep.subr.mxu0 %v148
    %353 = vmatpush1.msra.mxu0 %v147
    %354 = vmatprep.subr.mxu0 %v142
    %355 = vmatpush1.msra.mxu0 %v141
    %356 = vmatprep.subr.mxu0 %v136
    %357 = vmatpush1.msra.mxu0 %v135
    %358 = vmatprep.subr.mxu0 %v130
    %359 = vmatpush1.msra.mxu0 %v129
    %360 = vmatprep.subr.mxu0 %v124
    %361 = vmatpush1.msra.mxu0 %v123
    %362 = vmatprep.subr.mxu0 %v118
    %363 = vmatpush1.msra.mxu0 %v117
    %364 = vmatprep.subr.mxu0 %v112
    %365 = vmatpush1.msra.mxu0 %v111
    %366 = vmatprep.subr.mxu0 %v106
    %367 = vmatpush1.msra.mxu0 %v105
    %368 = vmatprep.subr.mxu0 %v100
    %369 = vmatpush1.msra.mxu0 %v99
    %370 = vmatprep.subr.mxu0 %v94
    %371 = vmatpush1.msra.mxu0 %v93
    %372 = vmatprep.subr.mxu0 %v88
    %373 = vmatpush1.msra.mxu0 %v87
    %374 = vmatprep.subr.mxu0 %v82
    %375 = vmatpush1.msra.mxu0 %v81
    %376 = vmatprep.subr.mxu0 %v76
    %377 = vmatpush1.msra.mxu0 %v75
    %378 = vmatprep.subr.mxu0 %v70
    %379 = vmatpush1.msra.mxu0 %v69
    %380 = vmatprep.subr.mxu0 %v256
    %381 = vmatpush2.msra.mxu0 %v255
    %382 = vmatprep.subr.mxu0 %v250
    %383 = vmatpush2.msra.mxu0 %v249
    %384 = vmatprep.subr.mxu0 %v244
    %385 = vmatpush2.msra.mxu0 %v243
    %386 = vmatprep.subr.mxu0 %v238
    %387 = vmatpush2.msra.mxu0 %v237
    %388 = vmatprep.subr.mxu0 %v232
    %389 = vmatpush2.msra.mxu0 %v231
    %390 = vmatprep.subr.mxu0 %v226
    %391 = vmatpush2.msra.mxu0 %v225
    %392 = vmatprep.subr.mxu0 %v220
    %393 = vmatpush2.msra.mxu0 %v219
    %394 = vmatprep.subr.mxu0 %v214
    %395 = vmatpush2.msra.mxu0 %v213
    %396 = vmatprep.subr.mxu0 %v208
    %397 = vmatpush2.msra.mxu0 %v207
    %398 = vmatprep.subr.mxu0 %v202
    %399 = vmatpush2.msra.mxu0 %v201
    %400 = vmatprep.subr.mxu0 %v196
    %401 = vmatpush2.msra.mxu0 %v195
    %402 = vmatprep.subr.mxu0 %v190
    %403 = vmatpush2.msra.mxu0 %v189
    %404 = vmatprep.subr.mxu0 %v184
    %405 = vmatpush2.msra.mxu0 %v183
    %406 = vmatprep.subr.mxu0 %v178
    %407 = vmatpush2.msra.mxu0 %v177
    %408 = vmatprep.subr.mxu0 %v172
    %409 = vmatpush2.msra.mxu0 %v171
    %410 = vmatprep.subr.mxu0 %v166
    %411 = vmatpush2.msra.mxu0 %v165
    %412 = vmatprep.mubr.f32.mxu0 %v60
    %413 = vmatmul.mubr.f32.gmra.mxu0 %v59
    %v414 = vpop.f32.mrf.mxu0
    %v415 = vadd.f32 0.0, %v414
    %v416 = vpop.f32.mrf.mxu0
    %v417 = vadd.f32 0.0, %v416
    %418 = vmatprep.mubr.f32.mxu0 %v62
    %419 = vmatmul.mubr.f32.gmra.mxu0 %v61
    %v420 = vpop.f32.mrf.mxu0
    %v421 = vadd.f32 0.0, %v420
    %v422 = vpop.f32.mrf.mxu0
    %v423 = vadd.f32 0.0, %v422
    %424 = vmatprep.mubr.f32.mxu0 %v64
    %425 = vmatmul.mubr.f32.gmra.mxu0 %v63
    %v426 = vpop.f32.mrf.mxu0
    %v427 = vadd.f32 0.0, %v426
    %v428 = vpop.f32.mrf.mxu0
    %v429 = vadd.f32 0.0, %v428
    %430 = vmatprep.mubr.f32.mxu0 %v66
    %431 = vmatmul.mubr.f32.gmra.mxu0 %v65
    %v432 = vpop.f32.mrf.mxu0
    %v433 = vadd.f32 0.0, %v432
    %v434 = vpop.f32.mrf.mxu0
    %v435 = vadd.f32 0.0, %v434
    %436 = vdwg.mxu0
    %437 = vmatprep.subr.mxu0 %v162
    %438 = vmatpush1.msra.mxu0 %v161
    %439 = vmatprep.subr.mxu0 %v156
    %440 = vmatpush1.msra.mxu0 %v155
    %441 = vmatprep.subr.mxu0 %v150
    %442 = vmatpush1.msra.mxu0 %v149
    %443 = vmatprep.subr.mxu0 %v144
    %444 = vmatpush1.msra.mxu0 %v143
    %445 = vmatprep.subr.mxu0 %v138
    %446 = vmatpush1.msra.mxu0 %v137
    %447 = vmatprep.subr.mxu0 %v132
    %448 = vmatpush1.msra.mxu0 %v131
    %449 = vmatprep.subr.mxu0 %v126
    %450 = vmatpush1.msra.mxu0 %v125
    %451 = vmatprep.subr.mxu0 %v120
    %452 = vmatpush1.msra.mxu0 %v119
    %453 = vmatprep.subr.mxu0 %v114
    %454 = vmatpush1.msra.mxu0 %v113
    %455 = vmatprep.subr.mxu0 %v108
    %456 = vmatpush1.msra.mxu0 %v107
    %457 = vmatprep.subr.mxu0 %v102
    %458 = vmatpush1.msra.mxu0 %v101
    %459 = vmatprep.subr.mxu0 %v96
    %460 = vmatpush1.msra.mxu0 %v95
    %461 = vmatprep.subr.mxu0 %v90
    %462 = vmatpush1.msra.mxu0 %v89
    %463 = vmatprep.subr.mxu0 %v84
    %464 = vmatpush1.msra.mxu0 %v83
    %465 = vmatprep.subr.mxu0 %v78
    %466 = vmatpush1.msra.mxu0 %v77
    %467 = vmatprep.subr.mxu0 %v72
    %468 = vmatpush1.msra.mxu0 %v71
    %469 = vmatprep.subr.mxu0 %v258
    %470 = vmatpush2.msra.mxu0 %v257
    %471 = vmatprep.subr.mxu0 %v252
    %472 = vmatpush2.msra.mxu0 %v251
    %473 = vmatprep.subr.mxu0 %v246
    %474 = vmatpush2.msra.mxu0 %v245
    %475 = vmatprep.subr.mxu0 %v240
    %476 = vmatpush2.msra.mxu0 %v239
    %477 = vmatprep.subr.mxu0 %v234
    %478 = vmatpush2.msra.mxu0 %v233
    %479 = vmatprep.subr.mxu0 %v228
    %480 = vmatpush2.msra.mxu0 %v227
    %481 = vmatprep.subr.mxu0 %v222
    %482 = vmatpush2.msra.mxu0 %v221
    %483 = vmatprep.subr.mxu0 %v216
    %484 = vmatpush2.msra.mxu0 %v215
    %485 = vmatprep.subr.mxu0 %v210
    %486 = vmatpush2.msra.mxu0 %v209
    %487 = vmatprep.subr.mxu0 %v204
    %488 = vmatpush2.msra.mxu0 %v203
    %489 = vmatprep.subr.mxu0 %v198
    %490 = vmatpush2.msra.mxu0 %v197
    %491 = vmatprep.subr.mxu0 %v192
    %492 = vmatpush2.msra.mxu0 %v191
    %493 = vmatprep.subr.mxu0 %v186
    %494 = vmatpush2.msra.mxu0 %v185
    %495 = vmatprep.subr.mxu0 %v180
    %496 = vmatpush2.msra.mxu0 %v179
    %497 = vmatprep.subr.mxu0 %v174
    %498 = vmatpush2.msra.mxu0 %v173
    %499 = vmatprep.subr.mxu0 %v168
    %500 = vmatpush2.msra.mxu0 %v167
    %501 = vmatprep.mubr.f32.mxu0 %v60
    %502 = vmatmul.mubr.f32.gmra.mxu0 %v59
    %v503 = vpop.f32.mrf.mxu0
    %v504 = vadd.f32 0.0, %v503
    %v505 = vpop.f32.mrf.mxu0
    %v506 = vadd.f32 0.0, %v505
    %507 = vmatprep.mubr.f32.mxu0 %v62
    %508 = vmatmul.mubr.f32.gmra.mxu0 %v61
    %v509 = vpop.f32.mrf.mxu0
    %v510 = vadd.f32 0.0, %v509
    %v511 = vpop.f32.mrf.mxu0
    %v512 = vadd.f32 0.0, %v511
    %513 = vmatprep.mubr.f32.mxu0 %v64
    %514 = vmatmul.mubr.f32.gmra.mxu0 %v63
    %v515 = vpop.f32.mrf.mxu0
    %v516 = vadd.f32 0.0, %v515
    %v517 = vpop.f32.mrf.mxu0
    %v518 = vadd.f32 0.0, %v517
    %519 = vmatprep.mubr.f32.mxu0 %v66
    %520 = vmatmul.mubr.f32.gmra.mxu0 %v65
    %v521 = vpop.f32.mrf.mxu0
    %v522 = vadd.f32 0.0, %v521
    %v523 = vpop.f32.mrf.mxu0
    %v524 = vadd.f32 0.0, %v523
    %525 = vdwg.mxu0
    %528 = vrot.lane.b32.xlu0 %v326, 96
    %v529 = vpop.permute.xlu0 %528
    %530 = vrot.lane.b32.xlu0 %v332, 96
    %v531 = vpop.permute.xlu0 %530
    %532 = vrot.lane.b32.xlu0 %v326, 64
    %v533 = vpop.permute.xlu0 %532
    %534 = vrot.lane.b32.xlu0 %v332, 64
    %v535 = vpop.permute.xlu0 %534
    %536 = vrot.lane.b32.xlu0 %v326, 32
    %v537 = vpop.permute.xlu0 %536
    %538 = vrot.lane.b32.xlu0 %v332, 32
    %v539 = vpop.permute.xlu0 %538
    %542 = vrot.lane.b32.xlu0 %v328, 96
    %v543 = vpop.permute.xlu0 %542
    %544 = vrot.lane.b32.xlu0 %v334, 96
    %v545 = vpop.permute.xlu0 %544
    %546 = vrot.lane.b32.xlu0 %v328, 64
    %v547 = vpop.permute.xlu0 %546
    %548 = vrot.lane.b32.xlu0 %v334, 64
    %v549 = vpop.permute.xlu0 %548
    %550 = vrot.lane.b32.xlu0 %v328, 32
    %v551 = vpop.permute.xlu0 %550
    %552 = vrot.lane.b32.xlu0 %v334, 32
    %v553 = vpop.permute.xlu0 %552
    %556 = vrot.lane.b32.xlu0 %v338, 96
    %v557 = vpop.permute.xlu0 %556
    %558 = vrot.lane.b32.xlu0 %v344, 96
    %v559 = vpop.permute.xlu0 %558
    %560 = vrot.lane.b32.xlu0 %v338, 64
    %v561 = vpop.permute.xlu0 %560
    %562 = vrot.lane.b32.xlu0 %v344, 64
    %v563 = vpop.permute.xlu0 %562
    %564 = vrot.lane.b32.xlu0 %v338, 32
    %v565 = vpop.permute.xlu0 %564
    %566 = vrot.lane.b32.xlu0 %v344, 32
    %v567 = vpop.permute.xlu0 %566
    %570 = vrot.lane.b32.xlu0 %v340, 96
    %v571 = vpop.permute.xlu0 %570
    %572 = vrot.lane.b32.xlu0 %v346, 96
    %v573 = vpop.permute.xlu0 %572
    %574 = vrot.lane.b32.xlu0 %v340, 64
    %v575 = vpop.permute.xlu0 %574
    %576 = vrot.lane.b32.xlu0 %v346, 64
    %v577 = vpop.permute.xlu0 %576
    %578 = vrot.lane.b32.xlu0 %v340, 32
    %v579 = vpop.permute.xlu0 %578
    %580 = vrot.lane.b32.xlu0 %v346, 32
    %v581 = vpop.permute.xlu0 %580
    %584 = vrot.lane.b32.xlu0 %v415, 96
    %v585 = vpop.permute.xlu0 %584
    %586 = vrot.lane.b32.xlu0 %v421, 96
    %v587 = vpop.permute.xlu0 %586
    %588 = vrot.lane.b32.xlu0 %v415, 64
    %v589 = vpop.permute.xlu0 %588
    %590 = vrot.lane.b32.xlu0 %v421, 64
    %v591 = vpop.permute.xlu0 %590
    %592 = vrot.lane.b32.xlu0 %v415, 32
    %v593 = vpop.permute.xlu0 %592
    %594 = vrot.lane.b32.xlu0 %v421, 32
    %v595 = vpop.permute.xlu0 %594
    %598 = vrot.lane.b32.xlu0 %v417, 96
    %v599 = vpop.permute.xlu0 %598
    %600 = vrot.lane.b32.xlu0 %v423, 96
    %v601 = vpop.permute.xlu0 %600
    %602 = vrot.lane.b32.xlu0 %v417, 64
    %v603 = vpop.permute.xlu0 %602
    %604 = vrot.lane.b32.xlu0 %v423, 64
    %v605 = vpop.permute.xlu0 %604
    %606 = vrot.lane.b32.xlu0 %v417, 32
    %v607 = vpop.permute.xlu0 %606
    %608 = vrot.lane.b32.xlu0 %v423, 32
    %v609 = vpop.permute.xlu0 %608
    %612 = vrot.lane.b32.xlu0 %v427, 96
    %v613 = vpop.permute.xlu0 %612
    %614 = vrot.lane.b32.xlu0 %v433, 96
    %v615 = vpop.permute.xlu0 %614
    %616 = vrot.lane.b32.xlu0 %v427, 64
    %v617 = vpop.permute.xlu0 %616
    %618 = vrot.lane.b32.xlu0 %v433, 64
    %v619 = vpop.permute.xlu0 %618
    %620 = vrot.lane.b32.xlu0 %v427, 32
    %v621 = vpop.permute.xlu0 %620
    %622 = vrot.lane.b32.xlu0 %v433, 32
    %v623 = vpop.permute.xlu0 %622
    %626 = vrot.lane.b32.xlu0 %v429, 96
    %v627 = vpop.permute.xlu0 %626
    %628 = vrot.lane.b32.xlu0 %v435, 96
    %v629 = vpop.permute.xlu0 %628
    %630 = vrot.lane.b32.xlu0 %v429, 64
    %v631 = vpop.permute.xlu0 %630
    %632 = vrot.lane.b32.xlu0 %v435, 64
    %v633 = vpop.permute.xlu0 %632
    %634 = vrot.lane.b32.xlu0 %v429, 32
    %v635 = vpop.permute.xlu0 %634
    %636 = vrot.lane.b32.xlu0 %v435, 32
    %v637 = vpop.permute.xlu0 %636
    %640 = vrot.lane.b32.xlu0 %v504, 96
    %v641 = vpop.permute.xlu0 %640
    %642 = vrot.lane.b32.xlu0 %v510, 96
    %v643 = vpop.permute.xlu0 %642
    %646 = vrot.lane.b32.xlu0 %v504, 64
    %v647 = vpop.permute.xlu0 %646
    %648 = vrot.lane.b32.xlu0 %v510, 64
    %v649 = vpop.permute.xlu0 %648
    %652 = vrot.lane.b32.xlu0 %v504, 32
    %v653 = vpop.permute.xlu0 %652
    %654 = vrot.lane.b32.xlu0 %v510, 32
    %v655 = vpop.permute.xlu0 %654
    %660 = vrot.lane.b32.xlu0 %v506, 96
    %v661 = vpop.permute.xlu0 %660
    %662 = vrot.lane.b32.xlu0 %v512, 96
    %v663 = vpop.permute.xlu0 %662
    %666 = vrot.lane.b32.xlu0 %v506, 64
    %v667 = vpop.permute.xlu0 %666
    %668 = vrot.lane.b32.xlu0 %v512, 64
    %v669 = vpop.permute.xlu0 %668
    %672 = vrot.lane.b32.xlu0 %v506, 32
    %v673 = vpop.permute.xlu0 %672
    %674 = vrot.lane.b32.xlu0 %v512, 32
    %v675 = vpop.permute.xlu0 %674
    %680 = vrot.lane.b32.xlu0 %v516, 96
    %v681 = vpop.permute.xlu0 %680
    %682 = vrot.lane.b32.xlu0 %v522, 96
    %v683 = vpop.permute.xlu0 %682
    %686 = vrot.lane.b32.xlu0 %v516, 64
    %v687 = vpop.permute.xlu0 %686
    %688 = vrot.lane.b32.xlu0 %v522, 64
    %v689 = vpop.permute.xlu0 %688
    %692 = vrot.lane.b32.xlu0 %v516, 32
    %v693 = vpop.permute.xlu0 %692
    %694 = vrot.lane.b32.xlu0 %v522, 32
    %v695 = vpop.permute.xlu0 %694
    %700 = vrot.lane.b32.xlu0 %v518, 96
    %v701 = vpop.permute.xlu0 %700
    %702 = vrot.lane.b32.xlu0 %v524, 96
    %v703 = vpop.permute.xlu0 %702
    %706 = vrot.lane.b32.xlu0 %v518, 64
    %v707 = vpop.permute.xlu0 %706
    %708 = vrot.lane.b32.xlu0 %v524, 64
    %v709 = vpop.permute.xlu0 %708
    %712 = vrot.lane.b32.xlu0 %v518, 32
    %v713 = vpop.permute.xlu0 %712
    %714 = vrot.lane.b32.xlu0 %v524, 32
    %v715 = vpop.permute.xlu0 %714
    %vm718 = vcmask 261120
    %v719 = vsel %vm718, %v326, 0
    %v721 = vsel %vm718, %v332, 0
    %v723 = vsel %vm718, %v415, 0
    %v725 = vsel %vm718, %v421, 0
    %727 = vmatprep.subr.mxu0 0.0
    %728 = vmatpush1.xpose.msra.mxu0 0.0
    %729 = vmatprep.subr.mxu0 0.0
    %730 = vmatpush1.xpose.msra.mxu0 0.0
    %731 = vmatprep.subr.mxu0 0.0
    %732 = vmatpush1.xpose.msra.mxu0 0.0
    %733 = vmatprep.subr.mxu0 0.0
    %734 = vmatpush1.xpose.msra.mxu0 0.0
    %735 = vmatprep.subr.mxu0 0.0
    %736 = vmatpush1.xpose.msra.mxu0 0.0
    %737 = vmatprep.subr.mxu0 0.0
    %738 = vmatpush1.xpose.msra.mxu0 0.0
    %739 = vmatprep.subr.mxu0 0.0
    %740 = vmatpush1.xpose.msra.mxu0 0.0
    %741 = vmatprep.subr.mxu0 0.0
    %742 = vmatpush1.xpose.msra.mxu0 0.0
    %743 = vmatprep.subr.mxu0 0.0
    %744 = vmatpush1.xpose.msra.mxu0 0.0
    %745 = vmatprep.subr.mxu0 0.0
    %746 = vmatpush1.xpose.msra.mxu0 0.0
    %747 = vmatprep.subr.mxu0 0.0
    %748 = vmatpush1.xpose.msra.mxu0 0.0
    %749 = vmatprep.subr.mxu0 0.0
    %750 = vmatpush1.xpose.msra.mxu0 0.0
    %751 = vmatprep.subr.mxu0 0.0
    %752 = vmatpush1.xpose.msra.mxu0 0.0
    %753 = vmatprep.subr.mxu0 0.0
    %754 = vmatpush1.xpose.msra.mxu0 0.0
    %755 = vmatprep.subr.mxu0 0.0
    %756 = vmatpush1.xpose.msra.mxu0 %v725
    %757 = vmatprep.subr.mxu0 0.0
    %758 = vmatpush1.xpose.msra.mxu0 %v723
    %759 = vmatprep.subr.mxu0 0.0
    %760 = vmatpush2.xpose.msra.mxu0 0.0
    %761 = vmatprep.subr.mxu0 0.0
    %762 = vmatpush2.xpose.msra.mxu0 0.0
    %763 = vmatprep.subr.mxu0 0.0
    %764 = vmatpush2.xpose.msra.mxu0 0.0
    %765 = vmatprep.subr.mxu0 0.0
    %766 = vmatpush2.xpose.msra.mxu0 0.0
    %767 = vmatprep.subr.mxu0 0.0
    %768 = vmatpush2.xpose.msra.mxu0 0.0
    %769 = vmatprep.subr.mxu0 0.0
    %770 = vmatpush2.xpose.msra.mxu0 0.0
    %771 = vmatprep.subr.mxu0 0.0
    %772 = vmatpush2.xpose.msra.mxu0 0.0
    %773 = vmatprep.subr.mxu0 0.0
    %774 = vmatpush2.xpose.msra.mxu0 0.0
    %775 = vmatprep.subr.mxu0 0.0
    %776 = vmatpush2.xpose.msra.mxu0 0.0
    %777 = vmatprep.subr.mxu0 0.0
    %778 = vmatpush2.xpose.msra.mxu0 0.0
    %779 = vmatprep.subr.mxu0 0.0
    %780 = vmatpush2.xpose.msra.mxu0 0.0
    %781 = vmatprep.subr.mxu0 0.0
    %782 = vmatpush2.xpose.msra.mxu0 0.0
    %783 = vmatprep.subr.mxu0 0.0
    %784 = vmatpush2.xpose.msra.mxu0 0.0
    %785 = vmatprep.subr.mxu0 0.0
    %786 = vmatpush2.xpose.msra.mxu0 0.0
    %787 = vmatprep.subr.mxu0 0.0
    %788 = vmatpush2.xpose.msra.mxu0 0.0
    %789 = vmatprep.subr.mxu0 0.0
    %790 = vmatpush2.xpose.msra.mxu0 0.0
    %791 = vmatprep.mubr.f32.mxu0 0.0
    %792 = vmatmul.mubr.f32.gmra.mxu0 %v719
    %v793 = vpop.f32.mrf.mxu0
    %v794 = vadd.f32 0.0, %v793
    %v795 = vpop.f32.mrf.mxu0
    %796 = vmatprep.mubr.f32.mxu0 0.0
    %797 = vmatmul.mubr.f32.gmra.mxu0 %v721
    %v798 = vpop.f32.mrf.mxu0
    %v799 = vadd.f32 0.0, %v798
    %v800 = vpop.f32.mrf.mxu0
    %801 = vdwg.mxu0
    %v802 = vsel %vm718, %v529, 0
    %v804 = vsel %vm718, %v531, 0
    %v806 = vsel %vm718, %v585, 0
    %v808 = vsel %vm718, %v587, 0
    %810 = vmatprep.subr.mxu0 0.0
    %811 = vmatpush1.xpose.msra.mxu0 0.0
    %812 = vmatprep.subr.mxu0 0.0
    %813 = vmatpush1.xpose.msra.mxu0 0.0
    %814 = vmatprep.subr.mxu0 0.0
    %815 = vmatpush1.xpose.msra.mxu0 0.0
    %816 = vmatprep.subr.mxu0 0.0
    %817 = vmatpush1.xpose.msra.mxu0 0.0
    %818 = vmatprep.subr.mxu0 0.0
    %819 = vmatpush1.xpose.msra.mxu0 0.0
    %820 = vmatprep.subr.mxu0 0.0
    %821 = vmatpush1.xpose.msra.mxu0 0.0
    %822 = vmatprep.subr.mxu0 0.0
    %823 = vmatpush1.xpose.msra.mxu0 0.0
    %824 = vmatprep.subr.mxu0 0.0
    %825 = vmatpush1.xpose.msra.mxu0 0.0
    %826 = vmatprep.subr.mxu0 0.0
    %827 = vmatpush1.xpose.msra.mxu0 0.0
    %828 = vmatprep.subr.mxu0 0.0
    %829 = vmatpush1.xpose.msra.mxu0 0.0
    %830 = vmatprep.subr.mxu0 0.0
    %831 = vmatpush1.xpose.msra.mxu0 0.0
    %832 = vmatprep.subr.mxu0 0.0
    %833 = vmatpush1.xpose.msra.mxu0 0.0
    %834 = vmatprep.subr.mxu0 0.0
    %835 = vmatpush1.xpose.msra.mxu0 0.0
    %836 = vmatprep.subr.mxu0 0.0
    %837 = vmatpush1.xpose.msra.mxu0 0.0
    %838 = vmatprep.subr.mxu0 0.0
    %839 = vmatpush1.xpose.msra.mxu0 %v808
    %840 = vmatprep.subr.mxu0 0.0
    %841 = vmatpush1.xpose.msra.mxu0 %v806
    %842 = vmatprep.subr.mxu0 0.0
    %843 = vmatpush2.xpose.msra.mxu0 0.0
    %844 = vmatprep.subr.mxu0 0.0
    %845 = vmatpush2.xpose.msra.mxu0 0.0
    %846 = vmatprep.subr.mxu0 0.0
    %847 = vmatpush2.xpose.msra.mxu0 0.0
    %848 = vmatprep.subr.mxu0 0.0
    %849 = vmatpush2.xpose.msra.mxu0 0.0
    %850 = vmatprep.subr.mxu0 0.0
    %851 = vmatpush2.xpose.msra.mxu0 0.0
    %852 = vmatprep.subr.mxu0 0.0
    %853 = vmatpush2.xpose.msra.mxu0 0.0
    %854 = vmatprep.subr.mxu0 0.0
    %855 = vmatpush2.xpose.msra.mxu0 0.0
    %856 = vmatprep.subr.mxu0 0.0
    %857 = vmatpush2.xpose.msra.mxu0 0.0
    %858 = vmatprep.subr.mxu0 0.0
    %859 = vmatpush2.xpose.msra.mxu0 0.0
    %860 = vmatprep.subr.mxu0 0.0
    %861 = vmatpush2.xpose.msra.mxu0 0.0
    %862 = vmatprep.subr.mxu0 0.0
    %863 = vmatpush2.xpose.msra.mxu0 0.0
    %864 = vmatprep.subr.mxu0 0.0
    %865 = vmatpush2.xpose.msra.mxu0 0.0
    %866 = vmatprep.subr.mxu0 0.0
    %867 = vmatpush2.xpose.msra.mxu0 0.0
    %868 = vmatprep.subr.mxu0 0.0
    %869 = vmatpush2.xpose.msra.mxu0 0.0
    %870 = vmatprep.subr.mxu0 0.0
    %871 = vmatpush2.xpose.msra.mxu0 0.0
    %872 = vmatprep.subr.mxu0 0.0
    %873 = vmatpush2.xpose.msra.mxu0 0.0
    %874 = vmatprep.mubr.f32.mxu0 0.0
    %875 = vmatmul.mubr.f32.gmra.mxu0 %v802
    %v876 = vpop.f32.mrf.mxu0
    %v877 = vadd.f32 0.0, %v876
    %v878 = vpop.f32.mrf.mxu0
    %879 = vmatprep.mubr.f32.mxu0 0.0
    %880 = vmatmul.mubr.f32.gmra.mxu0 %v804
    %v881 = vpop.f32.mrf.mxu0
    %v882 = vadd.f32 0.0, %v881
    %v883 = vpop.f32.mrf.mxu0
    %884 = vdwg.mxu0
    %v885 = vsel %vm718, %v533, 0
    %v887 = vsel %vm718, %v535, 0
    %v889 = vsel %vm718, %v589, 0
    %v891 = vsel %vm718, %v591, 0
    %893 = vmatprep.subr.mxu0 0.0
    %894 = vmatpush1.xpose.msra.mxu0 0.0
    %895 = vmatprep.subr.mxu0 0.0
    %896 = vmatpush1.xpose.msra.mxu0 0.0
    %897 = vmatprep.subr.mxu0 0.0
    %898 = vmatpush1.xpose.msra.mxu0 0.0
    %899 = vmatprep.subr.mxu0 0.0
    %900 = vmatpush1.xpose.msra.mxu0 0.0
    %901 = vmatprep.subr.mxu0 0.0
    %902 = vmatpush1.xpose.msra.mxu0 0.0
    %903 = vmatprep.subr.mxu0 0.0
    %904 = vmatpush1.xpose.msra.mxu0 0.0
    %905 = vmatprep.subr.mxu0 0.0
    %906 = vmatpush1.xpose.msra.mxu0 0.0
    %907 = vmatprep.subr.mxu0 0.0
    %908 = vmatpush1.xpose.msra.mxu0 0.0
    %909 = vmatprep.subr.mxu0 0.0
    %910 = vmatpush1.xpose.msra.mxu0 0.0
    %911 = vmatprep.subr.mxu0 0.0
    %912 = vmatpush1.xpose.msra.mxu0 0.0
    %913 = vmatprep.subr.mxu0 0.0
    %914 = vmatpush1.xpose.msra.mxu0 0.0
    %915 = vmatprep.subr.mxu0 0.0
    %916 = vmatpush1.xpose.msra.mxu0 0.0
    %917 = vmatprep.subr.mxu0 0.0
    %918 = vmatpush1.xpose.msra.mxu0 0.0
    %919 = vmatprep.subr.mxu0 0.0
    %920 = vmatpush1.xpose.msra.mxu0 0.0
    %921 = vmatprep.subr.mxu0 0.0
    %922 = vmatpush1.xpose.msra.mxu0 %v891
    %923 = vmatprep.subr.mxu0 0.0
    %924 = vmatpush1.xpose.msra.mxu0 %v889
    %925 = vmatprep.subr.mxu0 0.0
    %926 = vmatpush2.xpose.msra.mxu0 0.0
    %927 = vmatprep.subr.mxu0 0.0
    %928 = vmatpush2.xpose.msra.mxu0 0.0
    %929 = vmatprep.subr.mxu0 0.0
    %930 = vmatpush2.xpose.msra.mxu0 0.0
    %931 = vmatprep.subr.mxu0 0.0
    %932 = vmatpush2.xpose.msra.mxu0 0.0
    %933 = vmatprep.subr.mxu0 0.0
    %934 = vmatpush2.xpose.msra.mxu0 0.0
    %935 = vmatprep.subr.mxu0 0.0
    %936 = vmatpush2.xpose.msra.mxu0 0.0
    %937 = vmatprep.subr.mxu0 0.0
    %938 = vmatpush2.xpose.msra.mxu0 0.0
    %939 = vmatprep.subr.mxu0 0.0
    %940 = vmatpush2.xpose.msra.mxu0 0.0
    %941 = vmatprep.subr.mxu0 0.0
    %942 = vmatpush2.xpose.msra.mxu0 0.0
    %943 = vmatprep.subr.mxu0 0.0
    %944 = vmatpush2.xpose.msra.mxu0 0.0
    %945 = vmatprep.subr.mxu0 0.0
    %946 = vmatpush2.xpose.msra.mxu0 0.0
    %947 = vmatprep.subr.mxu0 0.0
    %948 = vmatpush2.xpose.msra.mxu0 0.0
    %949 = vmatprep.subr.mxu0 0.0
    %950 = vmatpush2.xpose.msra.mxu0 0.0
    %951 = vmatprep.subr.mxu0 0.0
    %952 = vmatpush2.xpose.msra.mxu0 0.0
    %953 = vmatprep.subr.mxu0 0.0
    %954 = vmatpush2.xpose.msra.mxu0 0.0
    %955 = vmatprep.subr.mxu0 0.0
    %956 = vmatpush2.xpose.msra.mxu0 0.0
    %957 = vmatprep.mubr.f32.mxu0 0.0
    %958 = vmatmul.mubr.f32.gmra.mxu0 %v885
    %v959 = vpop.f32.mrf.mxu0
    %v960 = vadd.f32 0.0, %v959
    %v961 = vpop.f32.mrf.mxu0
    %962 = vmatprep.mubr.f32.mxu0 0.0
    %963 = vmatmul.mubr.f32.gmra.mxu0 %v887
    %v964 = vpop.f32.mrf.mxu0
    %v965 = vadd.f32 0.0, %v964
    %v966 = vpop.f32.mrf.mxu0
    %967 = vdwg.mxu0
    %v968 = vsel %vm718, %v537, 0
    %v970 = vsel %vm718, %v539, 0
    %v972 = vsel %vm718, %v593, 0
    %v974 = vsel %vm718, %v595, 0
    %976 = vmatprep.subr.mxu0 0.0
    %977 = vmatpush1.xpose.msra.mxu0 0.0
    %978 = vmatprep.subr.mxu0 0.0
    %979 = vmatpush1.xpose.msra.mxu0 0.0
    %980 = vmatprep.subr.mxu0 0.0
    %981 = vmatpush1.xpose.msra.mxu0 0.0
    %982 = vmatprep.subr.mxu0 0.0
    %983 = vmatpush1.xpose.msra.mxu0 0.0
    %984 = vmatprep.subr.mxu0 0.0
    %985 = vmatpush1.xpose.msra.mxu0 0.0
    %986 = vmatprep.subr.mxu0 0.0
    %987 = vmatpush1.xpose.msra.mxu0 0.0
    %988 = vmatprep.subr.mxu0 0.0
    %989 = vmatpush1.xpose.msra.mxu0 0.0
    %990 = vmatprep.subr.mxu0 0.0
    %991 = vmatpush1.xpose.msra.mxu0 0.0
    %992 = vmatprep.subr.mxu0 0.0
    %993 = vmatpush1.xpose.msra.mxu0 0.0
    %994 = vmatprep.subr.mxu0 0.0
    %995 = vmatpush1.xpose.msra.mxu0 0.0
    %996 = vmatprep.subr.mxu0 0.0
    %997 = vmatpush1.xpose.msra.mxu0 0.0
    %998 = vmatprep.subr.mxu0 0.0
    %999 = vmatpush1.xpose.msra.mxu0 0.0
    %1000 = vmatprep.subr.mxu0 0.0
    %1001 = vmatpush1.xpose.msra.mxu0 0.0
    %1002 = vmatprep.subr.mxu0 0.0
    %1003 = vmatpush1.xpose.msra.mxu0 0.0
    %1004 = vmatprep.subr.mxu0 0.0
    %1005 = vmatpush1.xpose.msra.mxu0 %v974
    %1006 = vmatprep.subr.mxu0 0.0
    %1007 = vmatpush1.xpose.msra.mxu0 %v972
    %1008 = vmatprep.subr.mxu0 0.0
    %1009 = vmatpush2.xpose.msra.mxu0 0.0
    %1010 = vmatprep.subr.mxu0 0.0
    %1011 = vmatpush2.xpose.msra.mxu0 0.0
    %1012 = vmatprep.subr.mxu0 0.0
    %1013 = vmatpush2.xpose.msra.mxu0 0.0
    %1014 = vmatprep.subr.mxu0 0.0
    %1015 = vmatpush2.xpose.msra.mxu0 0.0
    %1016 = vmatprep.subr.mxu0 0.0
    %1017 = vmatpush2.xpose.msra.mxu0 0.0
    %1018 = vmatprep.subr.mxu0 0.0
    %1019 = vmatpush2.xpose.msra.mxu0 0.0
    %1020 = vmatprep.subr.mxu0 0.0
    %1021 = vmatpush2.xpose.msra.mxu0 0.0
    %1022 = vmatprep.subr.mxu0 0.0
    %1023 = vmatpush2.xpose.msra.mxu0 0.0
    %1024 = vmatprep.subr.mxu0 0.0
    %1025 = vmatpush2.xpose.msra.mxu0 0.0
    %1026 = vmatprep.subr.mxu0 0.0
    %1027 = vmatpush2.xpose.msra.mxu0 0.0
    %1028 = vmatprep.subr.mxu0 0.0
    %1029 = vmatpush2.xpose.msra.mxu0 0.0
    %1030 = vmatprep.subr.mxu0 0.0
    %1031 = vmatpush2.xpose.msra.mxu0 0.0
    %1032 = vmatprep.subr.mxu0 0.0
    %1033 = vmatpush2.xpose.msra.mxu0 0.0
    %1034 = vmatprep.subr.mxu0 0.0
    %1035 = vmatpush2.xpose.msra.mxu0 0.0
    %1036 = vmatprep.subr.mxu0 0.0
    %1037 = vmatpush2.xpose.msra.mxu0 0.0
    %1038 = vmatprep.subr.mxu0 0.0
    %1039 = vmatpush2.xpose.msra.mxu0 0.0
    %1040 = vmatprep.mubr.f32.mxu0 0.0
    %1041 = vmatmul.mubr.f32.gmra.mxu0 %v968
    %v1042 = vpop.f32.mrf.mxu0
    %v1043 = vadd.f32 0.0, %v1042
    %v1044 = vpop.f32.mrf.mxu0
    %1045 = vmatprep.mubr.f32.mxu0 0.0
    %1046 = vmatmul.mubr.f32.gmra.mxu0 %v970
    %v1047 = vpop.f32.mrf.mxu0
    %v1048 = vadd.f32 0.0, %v1047
    %v1049 = vpop.f32.mrf.mxu0
    %1050 = vdwg.mxu0
    %v1051 = vsel %vm718, %v328, 0
    %v1053 = vsel %vm718, %v334, 0
    %v1055 = vsel %vm718, %v417, 0
    %v1057 = vsel %vm718, %v423, 0
    %1059 = vmatprep.subr.mxu0 0.0
    %1060 = vmatpush1.xpose.msra.mxu0 0.0
    %1061 = vmatprep.subr.mxu0 0.0
    %1062 = vmatpush1.xpose.msra.mxu0 0.0
    %1063 = vmatprep.subr.mxu0 0.0
    %1064 = vmatpush1.xpose.msra.mxu0 0.0
    %1065 = vmatprep.subr.mxu0 0.0
    %1066 = vmatpush1.xpose.msra.mxu0 0.0
    %1067 = vmatprep.subr.mxu0 0.0
    %1068 = vmatpush1.xpose.msra.mxu0 0.0
    %1069 = vmatprep.subr.mxu0 0.0
    %1070 = vmatpush1.xpose.msra.mxu0 0.0
    %1071 = vmatprep.subr.mxu0 0.0
    %1072 = vmatpush1.xpose.msra.mxu0 0.0
    %1073 = vmatprep.subr.mxu0 0.0
    %1074 = vmatpush1.xpose.msra.mxu0 0.0
    %1075 = vmatprep.subr.mxu0 0.0
    %1076 = vmatpush1.xpose.msra.mxu0 0.0
    %1077 = vmatprep.subr.mxu0 0.0
    %1078 = vmatpush1.xpose.msra.mxu0 0.0
    %1079 = vmatprep.subr.mxu0 0.0
    %1080 = vmatpush1.xpose.msra.mxu0 0.0
    %1081 = vmatprep.subr.mxu0 0.0
    %1082 = vmatpush1.xpose.msra.mxu0 0.0
    %1083 = vmatprep.subr.mxu0 0.0
    %1084 = vmatpush1.xpose.msra.mxu0 0.0
    %1085 = vmatprep.subr.mxu0 0.0
    %1086 = vmatpush1.xpose.msra.mxu0 0.0
    %1087 = vmatprep.subr.mxu0 0.0
    %1088 = vmatpush1.xpose.msra.mxu0 %v1057
    %1089 = vmatprep.subr.mxu0 0.0
    %1090 = vmatpush1.xpose.msra.mxu0 %v1055
    %1091 = vmatprep.subr.mxu0 0.0
    %1092 = vmatpush2.xpose.msra.mxu0 0.0
    %1093 = vmatprep.subr.mxu0 0.0
    %1094 = vmatpush2.xpose.msra.mxu0 0.0
    %1095 = vmatprep.subr.mxu0 0.0
    %1096 = vmatpush2.xpose.msra.mxu0 0.0
    %1097 = vmatprep.subr.mxu0 0.0
    %1098 = vmatpush2.xpose.msra.mxu0 0.0
    %1099 = vmatprep.subr.mxu0 0.0
    %1100 = vmatpush2.xpose.msra.mxu0 0.0
    %1101 = vmatprep.subr.mxu0 0.0
    %1102 = vmatpush2.xpose.msra.mxu0 0.0
    %1103 = vmatprep.subr.mxu0 0.0
    %1104 = vmatpush2.xpose.msra.mxu0 0.0
    %1105 = vmatprep.subr.mxu0 0.0
    %1106 = vmatpush2.xpose.msra.mxu0 0.0
    %1107 = vmatprep.subr.mxu0 0.0
    %1108 = vmatpush2.xpose.msra.mxu0 0.0
    %1109 = vmatprep.subr.mxu0 0.0
    %1110 = vmatpush2.xpose.msra.mxu0 0.0
    %1111 = vmatprep.subr.mxu0 0.0
    %1112 = vmatpush2.xpose.msra.mxu0 0.0
    %1113 = vmatprep.subr.mxu0 0.0
    %1114 = vmatpush2.xpose.msra.mxu0 0.0
    %1115 = vmatprep.subr.mxu0 0.0
    %1116 = vmatpush2.xpose.msra.mxu0 0.0
    %1117 = vmatprep.subr.mxu0 0.0
    %1118 = vmatpush2.xpose.msra.mxu0 0.0
    %1119 = vmatprep.subr.mxu0 0.0
    %1120 = vmatpush2.xpose.msra.mxu0 0.0
    %1121 = vmatprep.subr.mxu0 0.0
    %1122 = vmatpush2.xpose.msra.mxu0 0.0
    %1123 = vmatprep.mubr.f32.mxu0 0.0
    %1124 = vmatmul.mubr.f32.gmra.mxu0 %v1051
    %v1125 = vpop.f32.mrf.mxu0
    %v1126 = vadd.f32 0.0, %v1125
    %v1127 = vpop.f32.mrf.mxu0
    %1128 = vmatprep.mubr.f32.mxu0 0.0
    %1129 = vmatmul.mubr.f32.gmra.mxu0 %v1053
    %v1130 = vpop.f32.mrf.mxu0
    %v1131 = vadd.f32 0.0, %v1130
    %v1132 = vpop.f32.mrf.mxu0
    %1133 = vdwg.mxu0
    %v1134 = vsel %vm718, %v543, 0
    %v1136 = vsel %vm718, %v545, 0
    %v1138 = vsel %vm718, %v599, 0
    %v1140 = vsel %vm718, %v601, 0
    %1142 = vmatprep.subr.mxu0 0.0
    %1143 = vmatpush1.xpose.msra.mxu0 0.0
    %1144 = vmatprep.subr.mxu0 0.0
    %1145 = vmatpush1.xpose.msra.mxu0 0.0
    %1146 = vmatprep.subr.mxu0 0.0
    %1147 = vmatpush1.xpose.msra.mxu0 0.0
    %1148 = vmatprep.subr.mxu0 0.0
    %1149 = vmatpush1.xpose.msra.mxu0 0.0
    %1150 = vmatprep.subr.mxu0 0.0
    %1151 = vmatpush1.xpose.msra.mxu0 0.0
    %1152 = vmatprep.subr.mxu0 0.0
    %1153 = vmatpush1.xpose.msra.mxu0 0.0
    %1154 = vmatprep.subr.mxu0 0.0
    %1155 = vmatpush1.xpose.msra.mxu0 0.0
    %1156 = vmatprep.subr.mxu0 0.0
    %1157 = vmatpush1.xpose.msra.mxu0 0.0
    %1158 = vmatprep.subr.mxu0 0.0
    %1159 = vmatpush1.xpose.msra.mxu0 0.0
    %1160 = vmatprep.subr.mxu0 0.0
    %1161 = vmatpush1.xpose.msra.mxu0 0.0
    %1162 = vmatprep.subr.mxu0 0.0
    %1163 = vmatpush1.xpose.msra.mxu0 0.0
    %1164 = vmatprep.subr.mxu0 0.0
    %1165 = vmatpush1.xpose.msra.mxu0 0.0
    %1166 = vmatprep.subr.mxu0 0.0
    %1167 = vmatpush1.xpose.msra.mxu0 0.0
    %1168 = vmatprep.subr.mxu0 0.0
    %1169 = vmatpush1.xpose.msra.mxu0 0.0
    %1170 = vmatprep.subr.mxu0 0.0
    %1171 = vmatpush1.xpose.msra.mxu0 %v1140
    %1172 = vmatprep.subr.mxu0 0.0
    %1173 = vmatpush1.xpose.msra.mxu0 %v1138
    %1174 = vmatprep.subr.mxu0 0.0
    %1175 = vmatpush2.xpose.msra.mxu0 0.0
    %1176 = vmatprep.subr.mxu0 0.0
    %1177 = vmatpush2.xpose.msra.mxu0 0.0
    %1178 = vmatprep.subr.mxu0 0.0
    %1179 = vmatpush2.xpose.msra.mxu0 0.0
    %1180 = vmatprep.subr.mxu0 0.0
    %1181 = vmatpush2.xpose.msra.mxu0 0.0
    %1182 = vmatprep.subr.mxu0 0.0
    %1183 = vmatpush2.xpose.msra.mxu0 0.0
    %1184 = vmatprep.subr.mxu0 0.0
    %1185 = vmatpush2.xpose.msra.mxu0 0.0
    %1186 = vmatprep.subr.mxu0 0.0
    %1187 = vmatpush2.xpose.msra.mxu0 0.0
    %1188 = vmatprep.subr.mxu0 0.0
    %1189 = vmatpush2.xpose.msra.mxu0 0.0
    %1190 = vmatprep.subr.mxu0 0.0
    %1191 = vmatpush2.xpose.msra.mxu0 0.0
    %1192 = vmatprep.subr.mxu0 0.0
    %1193 = vmatpush2.xpose.msra.mxu0 0.0
    %1194 = vmatprep.subr.mxu0 0.0
    %1195 = vmatpush2.xpose.msra.mxu0 0.0
    %1196 = vmatprep.subr.mxu0 0.0
    %1197 = vmatpush2.xpose.msra.mxu0 0.0
    %1198 = vmatprep.subr.mxu0 0.0
    %1199 = vmatpush2.xpose.msra.mxu0 0.0
    %1200 = vmatprep.subr.mxu0 0.0
    %1201 = vmatpush2.xpose.msra.mxu0 0.0
    %1202 = vmatprep.subr.mxu0 0.0
    %1203 = vmatpush2.xpose.msra.mxu0 0.0
    %1204 = vmatprep.subr.mxu0 0.0
    %1205 = vmatpush2.xpose.msra.mxu0 0.0
    %1206 = vmatprep.mubr.f32.mxu0 0.0
    %1207 = vmatmul.mubr.f32.gmra.mxu0 %v1134
    %v1208 = vpop.f32.mrf.mxu0
    %v1209 = vadd.f32 0.0, %v1208
    %v1210 = vpop.f32.mrf.mxu0
    %1211 = vmatprep.mubr.f32.mxu0 0.0
    %1212 = vmatmul.mubr.f32.gmra.mxu0 %v1136
    %v1213 = vpop.f32.mrf.mxu0
    %v1214 = vadd.f32 0.0, %v1213
    %v1215 = vpop.f32.mrf.mxu0
    %1216 = vdwg.mxu0
    %v1217 = vsel %vm718, %v547, 0
    %v1219 = vsel %vm718, %v549, 0
    %v1221 = vsel %vm718, %v603, 0
    %v1223 = vsel %vm718, %v605, 0
    %1225 = vmatprep.subr.mxu0 0.0
    %1226 = vmatpush1.xpose.msra.mxu0 0.0
    %1227 = vmatprep.subr.mxu0 0.0
    %1228 = vmatpush1.xpose.msra.mxu0 0.0
    %1229 = vmatprep.subr.mxu0 0.0
    %1230 = vmatpush1.xpose.msra.mxu0 0.0
    %1231 = vmatprep.subr.mxu0 0.0
    %1232 = vmatpush1.xpose.msra.mxu0 0.0
    %1233 = vmatprep.subr.mxu0 0.0
    %1234 = vmatpush1.xpose.msra.mxu0 0.0
    %1235 = vmatprep.subr.mxu0 0.0
    %1236 = vmatpush1.xpose.msra.mxu0 0.0
    %1237 = vmatprep.subr.mxu0 0.0
    %1238 = vmatpush1.xpose.msra.mxu0 0.0
    %1239 = vmatprep.subr.mxu0 0.0
    %1240 = vmatpush1.xpose.msra.mxu0 0.0
    %1241 = vmatprep.subr.mxu0 0.0
    %1242 = vmatpush1.xpose.msra.mxu0 0.0
    %1243 = vmatprep.subr.mxu0 0.0
    %1244 = vmatpush1.xpose.msra.mxu0 0.0
    %1245 = vmatprep.subr.mxu0 0.0
    %1246 = vmatpush1.xpose.msra.mxu0 0.0
    %1247 = vmatprep.subr.mxu0 0.0
    %1248 = vmatpush1.xpose.msra.mxu0 0.0
    %1249 = vmatprep.subr.mxu0 0.0
    %1250 = vmatpush1.xpose.msra.mxu0 0.0
    %1251 = vmatprep.subr.mxu0 0.0
    %1252 = vmatpush1.xpose.msra.mxu0 0.0
    %1253 = vmatprep.subr.mxu0 0.0
    %1254 = vmatpush1.xpose.msra.mxu0 %v1223
    %1255 = vmatprep.subr.mxu0 0.0
    %1256 = vmatpush1.xpose.msra.mxu0 %v1221
    %1257 = vmatprep.subr.mxu0 0.0
    %1258 = vmatpush2.xpose.msra.mxu0 0.0
    %1259 = vmatprep.subr.mxu0 0.0
    %1260 = vmatpush2.xpose.msra.mxu0 0.0
    %1261 = vmatprep.subr.mxu0 0.0
    %1262 = vmatpush2.xpose.msra.mxu0 0.0
    %1263 = vmatprep.subr.mxu0 0.0
    %1264 = vmatpush2.xpose.msra.mxu0 0.0
    %1265 = vmatprep.subr.mxu0 0.0
    %1266 = vmatpush2.xpose.msra.mxu0 0.0
    %1267 = vmatprep.subr.mxu0 0.0
    %1268 = vmatpush2.xpose.msra.mxu0 0.0
    %1269 = vmatprep.subr.mxu0 0.0
    %1270 = vmatpush2.xpose.msra.mxu0 0.0
    %1271 = vmatprep.subr.mxu0 0.0
    %1272 = vmatpush2.xpose.msra.mxu0 0.0
    %1273 = vmatprep.subr.mxu0 0.0
    %1274 = vmatpush2.xpose.msra.mxu0 0.0
    %1275 = vmatprep.subr.mxu0 0.0
    %1276 = vmatpush2.xpose.msra.mxu0 0.0
    %1277 = vmatprep.subr.mxu0 0.0
    %1278 = vmatpush2.xpose.msra.mxu0 0.0
    %1279 = vmatprep.subr.mxu0 0.0
    %1280 = vmatpush2.xpose.msra.mxu0 0.0
    %1281 = vmatprep.subr.mxu0 0.0
    %1282 = vmatpush2.xpose.msra.mxu0 0.0
    %1283 = vmatprep.subr.mxu0 0.0
    %1284 = vmatpush2.xpose.msra.mxu0 0.0
    %1285 = vmatprep.subr.mxu0 0.0
    %1286 = vmatpush2.xpose.msra.mxu0 0.0
    %1287 = vmatprep.subr.mxu0 0.0
    %1288 = vmatpush2.xpose.msra.mxu0 0.0
    %1289 = vmatprep.mubr.f32.mxu0 0.0
    %1290 = vmatmul.mubr.f32.gmra.mxu0 %v1217
    %v1291 = vpop.f32.mrf.mxu0
    %v1292 = vadd.f32 0.0, %v1291
    %v1293 = vpop.f32.mrf.mxu0
    %1294 = vmatprep.mubr.f32.mxu0 0.0
    %1295 = vmatmul.mubr.f32.gmra.mxu0 %v1219
    %v1296 = vpop.f32.mrf.mxu0
    %v1297 = vadd.f32 0.0, %v1296
    %v1298 = vpop.f32.mrf.mxu0
    %1299 = vdwg.mxu0
    %v1300 = vsel %vm718, %v551, 0
    %v1302 = vsel %vm718, %v553, 0
    %v1304 = vsel %vm718, %v607, 0
    %v1306 = vsel %vm718, %v609, 0
    %1308 = vmatprep.subr.mxu0 0.0
    %1309 = vmatpush1.xpose.msra.mxu0 0.0
    %1310 = vmatprep.subr.mxu0 0.0
    %1311 = vmatpush1.xpose.msra.mxu0 0.0
    %1312 = vmatprep.subr.mxu0 0.0
    %1313 = vmatpush1.xpose.msra.mxu0 0.0
    %1314 = vmatprep.subr.mxu0 0.0
    %1315 = vmatpush1.xpose.msra.mxu0 0.0
    %1316 = vmatprep.subr.mxu0 0.0
    %1317 = vmatpush1.xpose.msra.mxu0 0.0
    %1318 = vmatprep.subr.mxu0 0.0
    %1319 = vmatpush1.xpose.msra.mxu0 0.0
    %1320 = vmatprep.subr.mxu0 0.0
    %1321 = vmatpush1.xpose.msra.mxu0 0.0
    %1322 = vmatprep.subr.mxu0 0.0
    %1323 = vmatpush1.xpose.msra.mxu0 0.0
    %1324 = vmatprep.subr.mxu0 0.0
    %1325 = vmatpush1.xpose.msra.mxu0 0.0
    %1326 = vmatprep.subr.mxu0 0.0
    %1327 = vmatpush1.xpose.msra.mxu0 0.0
    %1328 = vmatprep.subr.mxu0 0.0
    %1329 = vmatpush1.xpose.msra.mxu0 0.0
    %1330 = vmatprep.subr.mxu0 0.0
    %1331 = vmatpush1.xpose.msra.mxu0 0.0
    %1332 = vmatprep.subr.mxu0 0.0
    %1333 = vmatpush1.xpose.msra.mxu0 0.0
    %1334 = vmatprep.subr.mxu0 0.0
    %1335 = vmatpush1.xpose.msra.mxu0 0.0
    %1336 = vmatprep.subr.mxu0 0.0
    %1337 = vmatpush1.xpose.msra.mxu0 %v1306
    %1338 = vmatprep.subr.mxu0 0.0
    %1339 = vmatpush1.xpose.msra.mxu0 %v1304
    %1340 = vmatprep.subr.mxu0 0.0
    %1341 = vmatpush2.xpose.msra.mxu0 0.0
    %1342 = vmatprep.subr.mxu0 0.0
    %1343 = vmatpush2.xpose.msra.mxu0 0.0
    %1344 = vmatprep.subr.mxu0 0.0
    %1345 = vmatpush2.xpose.msra.mxu0 0.0
    %1346 = vmatprep.subr.mxu0 0.0
    %1347 = vmatpush2.xpose.msra.mxu0 0.0
    %1348 = vmatprep.subr.mxu0 0.0
    %1349 = vmatpush2.xpose.msra.mxu0 0.0
    %1350 = vmatprep.subr.mxu0 0.0
    %1351 = vmatpush2.xpose.msra.mxu0 0.0
    %1352 = vmatprep.subr.mxu0 0.0
    %1353 = vmatpush2.xpose.msra.mxu0 0.0
    %1354 = vmatprep.subr.mxu0 0.0
    %1355 = vmatpush2.xpose.msra.mxu0 0.0
    %1356 = vmatprep.subr.mxu0 0.0
    %1357 = vmatpush2.xpose.msra.mxu0 0.0
    %1358 = vmatprep.subr.mxu0 0.0
    %1359 = vmatpush2.xpose.msra.mxu0 0.0
    %1360 = vmatprep.subr.mxu0 0.0
    %1361 = vmatpush2.xpose.msra.mxu0 0.0
    %1362 = vmatprep.subr.mxu0 0.0
    %1363 = vmatpush2.xpose.msra.mxu0 0.0
    %1364 = vmatprep.subr.mxu0 0.0
    %1365 = vmatpush2.xpose.msra.mxu0 0.0
    %1366 = vmatprep.subr.mxu0 0.0
    %1367 = vmatpush2.xpose.msra.mxu0 0.0
    %1368 = vmatprep.subr.mxu0 0.0
    %1369 = vmatpush2.xpose.msra.mxu0 0.0
    %1370 = vmatprep.subr.mxu0 0.0
    %1371 = vmatpush2.xpose.msra.mxu0 0.0
    %1372 = vmatprep.mubr.f32.mxu0 0.0
    %1373 = vmatmul.mubr.f32.gmra.mxu0 %v1300
    %v1374 = vpop.f32.mrf.mxu0
    %v1375 = vadd.f32 0.0, %v1374
    %v1376 = vpop.f32.mrf.mxu0
    %1377 = vmatprep.mubr.f32.mxu0 0.0
    %1378 = vmatmul.mubr.f32.gmra.mxu0 %v1302
    %v1379 = vpop.f32.mrf.mxu0
    %v1380 = vadd.f32 0.0, %v1379
    %v1381 = vpop.f32.mrf.mxu0
    %1382 = vdwg.mxu0
    %v1383 = vsel %vm718, %v338, 0
    %v1385 = vsel %vm718, %v344, 0
    %v1387 = vsel %vm718, %v427, 0
    %v1389 = vsel %vm718, %v433, 0
    %1391 = vmatprep.subr.mxu0 0.0
    %1392 = vmatpush1.xpose.msra.mxu0 0.0
    %1393 = vmatprep.subr.mxu0 0.0
    %1394 = vmatpush1.xpose.msra.mxu0 0.0
    %1395 = vmatprep.subr.mxu0 0.0
    %1396 = vmatpush1.xpose.msra.mxu0 0.0
    %1397 = vmatprep.subr.mxu0 0.0
    %1398 = vmatpush1.xpose.msra.mxu0 0.0
    %1399 = vmatprep.subr.mxu0 0.0
    %1400 = vmatpush1.xpose.msra.mxu0 0.0
    %1401 = vmatprep.subr.mxu0 0.0
    %1402 = vmatpush1.xpose.msra.mxu0 0.0
    %1403 = vmatprep.subr.mxu0 0.0
    %1404 = vmatpush1.xpose.msra.mxu0 0.0
    %1405 = vmatprep.subr.mxu0 0.0
    %1406 = vmatpush1.xpose.msra.mxu0 0.0
    %1407 = vmatprep.subr.mxu0 0.0
    %1408 = vmatpush1.xpose.msra.mxu0 0.0
    %1409 = vmatprep.subr.mxu0 0.0
    %1410 = vmatpush1.xpose.msra.mxu0 0.0
    %1411 = vmatprep.subr.mxu0 0.0
    %1412 = vmatpush1.xpose.msra.mxu0 0.0
    %1413 = vmatprep.subr.mxu0 0.0
    %1414 = vmatpush1.xpose.msra.mxu0 0.0
    %1415 = vmatprep.subr.mxu0 0.0
    %1416 = vmatpush1.xpose.msra.mxu0 0.0
    %1417 = vmatprep.subr.mxu0 0.0
    %1418 = vmatpush1.xpose.msra.mxu0 0.0
    %1419 = vmatprep.subr.mxu0 0.0
    %1420 = vmatpush1.xpose.msra.mxu0 %v1389
    %1421 = vmatprep.subr.mxu0 0.0
    %1422 = vmatpush1.xpose.msra.mxu0 %v1387
    %1423 = vmatprep.subr.mxu0 0.0
    %1424 = vmatpush2.xpose.msra.mxu0 0.0
    %1425 = vmatprep.subr.mxu0 0.0
    %1426 = vmatpush2.xpose.msra.mxu0 0.0
    %1427 = vmatprep.subr.mxu0 0.0
    %1428 = vmatpush2.xpose.msra.mxu0 0.0
    %1429 = vmatprep.subr.mxu0 0.0
    %1430 = vmatpush2.xpose.msra.mxu0 0.0
    %1431 = vmatprep.subr.mxu0 0.0
    %1432 = vmatpush2.xpose.msra.mxu0 0.0
    %1433 = vmatprep.subr.mxu0 0.0
    %1434 = vmatpush2.xpose.msra.mxu0 0.0
    %1435 = vmatprep.subr.mxu0 0.0
    %1436 = vmatpush2.xpose.msra.mxu0 0.0
    %1437 = vmatprep.subr.mxu0 0.0
    %1438 = vmatpush2.xpose.msra.mxu0 0.0
    %1439 = vmatprep.subr.mxu0 0.0
    %1440 = vmatpush2.xpose.msra.mxu0 0.0
    %1441 = vmatprep.subr.mxu0 0.0
    %1442 = vmatpush2.xpose.msra.mxu0 0.0
    %1443 = vmatprep.subr.mxu0 0.0
    %1444 = vmatpush2.xpose.msra.mxu0 0.0
    %1445 = vmatprep.subr.mxu0 0.0
    %1446 = vmatpush2.xpose.msra.mxu0 0.0
    %1447 = vmatprep.subr.mxu0 0.0
    %1448 = vmatpush2.xpose.msra.mxu0 0.0
    %1449 = vmatprep.subr.mxu0 0.0
    %1450 = vmatpush2.xpose.msra.mxu0 0.0
    %1451 = vmatprep.subr.mxu0 0.0
    %1452 = vmatpush2.xpose.msra.mxu0 0.0
    %1453 = vmatprep.subr.mxu0 0.0
    %1454 = vmatpush2.xpose.msra.mxu0 0.0
    %1455 = vmatprep.mubr.f32.mxu0 0.0
    %1456 = vmatmul.mubr.f32.gmra.mxu0 %v1383
    %v1457 = vpop.f32.mrf.mxu0
    %v1458 = vadd.f32 0.0, %v1457
    %v1459 = vpop.f32.mrf.mxu0
    %1460 = vmatprep.mubr.f32.mxu0 0.0
    %1461 = vmatmul.mubr.f32.gmra.mxu0 %v1385
    %v1462 = vpop.f32.mrf.mxu0
    %v1463 = vadd.f32 0.0, %v1462
    %v1464 = vpop.f32.mrf.mxu0
    %1465 = vdwg.mxu0
    %v1466 = vsel %vm718, %v557, 0
    %v1468 = vsel %vm718, %v559, 0
    %v1470 = vsel %vm718, %v613, 0
    %v1472 = vsel %vm718, %v615, 0
    %1474 = vmatprep.subr.mxu0 0.0
    %1475 = vmatpush1.xpose.msra.mxu0 0.0
    %1476 = vmatprep.subr.mxu0 0.0
    %1477 = vmatpush1.xpose.msra.mxu0 0.0
    %1478 = vmatprep.subr.mxu0 0.0
    %1479 = vmatpush1.xpose.msra.mxu0 0.0
    %1480 = vmatprep.subr.mxu0 0.0
    %1481 = vmatpush1.xpose.msra.mxu0 0.0
    %1482 = vmatprep.subr.mxu0 0.0
    %1483 = vmatpush1.xpose.msra.mxu0 0.0
    %1484 = vmatprep.subr.mxu0 0.0
    %1485 = vmatpush1.xpose.msra.mxu0 0.0
    %1486 = vmatprep.subr.mxu0 0.0
    %1487 = vmatpush1.xpose.msra.mxu0 0.0
    %1488 = vmatprep.subr.mxu0 0.0
    %1489 = vmatpush1.xpose.msra.mxu0 0.0
    %1490 = vmatprep.subr.mxu0 0.0
    %1491 = vmatpush1.xpose.msra.mxu0 0.0
    %1492 = vmatprep.subr.mxu0 0.0
    %1493 = vmatpush1.xpose.msra.mxu0 0.0
    %1494 = vmatprep.subr.mxu0 0.0
    %1495 = vmatpush1.xpose.msra.mxu0 0.0
    %1496 = vmatprep.subr.mxu0 0.0
    %1497 = vmatpush1.xpose.msra.mxu0 0.0
    %1498 = vmatprep.subr.mxu0 0.0
    %1499 = vmatpush1.xpose.msra.mxu0 0.0
    %1500 = vmatprep.subr.mxu0 0.0
    %1501 = vmatpush1.xpose.msra.mxu0 0.0
    %1502 = vmatprep.subr.mxu0 0.0
    %1503 = vmatpush1.xpose.msra.mxu0 %v1472
    %1504 = vmatprep.subr.mxu0 0.0
    %1505 = vmatpush1.xpose.msra.mxu0 %v1470
    %1506 = vmatprep.subr.mxu0 0.0
    %1507 = vmatpush2.xpose.msra.mxu0 0.0
    %1508 = vmatprep.subr.mxu0 0.0
    %1509 = vmatpush2.xpose.msra.mxu0 0.0
    %1510 = vmatprep.subr.mxu0 0.0
    %1511 = vmatpush2.xpose.msra.mxu0 0.0
    %1512 = vmatprep.subr.mxu0 0.0
    %1513 = vmatpush2.xpose.msra.mxu0 0.0
    %1514 = vmatprep.subr.mxu0 0.0
    %1515 = vmatpush2.xpose.msra.mxu0 0.0
    %1516 = vmatprep.subr.mxu0 0.0
    %1517 = vmatpush2.xpose.msra.mxu0 0.0
    %1518 = vmatprep.subr.mxu0 0.0
    %1519 = vmatpush2.xpose.msra.mxu0 0.0
    %1520 = vmatprep.subr.mxu0 0.0
    %1521 = vmatpush2.xpose.msra.mxu0 0.0
    %1522 = vmatprep.subr.mxu0 0.0
    %1523 = vmatpush2.xpose.msra.mxu0 0.0
    %1524 = vmatprep.subr.mxu0 0.0
    %1525 = vmatpush2.xpose.msra.mxu0 0.0
    %1526 = vmatprep.subr.mxu0 0.0
    %1527 = vmatpush2.xpose.msra.mxu0 0.0
    %1528 = vmatprep.subr.mxu0 0.0
    %1529 = vmatpush2.xpose.msra.mxu0 0.0
    %1530 = vmatprep.subr.mxu0 0.0
    %1531 = vmatpush2.xpose.msra.mxu0 0.0
    %1532 = vmatprep.subr.mxu0 0.0
    %1533 = vmatpush2.xpose.msra.mxu0 0.0
    %1534 = vmatprep.subr.mxu0 0.0
    %1535 = vmatpush2.xpose.msra.mxu0 0.0
    %1536 = vmatprep.subr.mxu0 0.0
    %1537 = vmatpush2.xpose.msra.mxu0 0.0
    %1538 = vmatprep.mubr.f32.mxu0 0.0
    %1539 = vmatmul.mubr.f32.gmra.mxu0 %v1466
    %v1540 = vpop.f32.mrf.mxu0
    %v1541 = vadd.f32 0.0, %v1540
    %v1542 = vpop.f32.mrf.mxu0
    %1543 = vmatprep.mubr.f32.mxu0 0.0
    %1544 = vmatmul.mubr.f32.gmra.mxu0 %v1468
    %v1545 = vpop.f32.mrf.mxu0
    %v1546 = vadd.f32 0.0, %v1545
    %v1547 = vpop.f32.mrf.mxu0
    %1548 = vdwg.mxu0
    %v1549 = vsel %vm718, %v561, 0
    %v1551 = vsel %vm718, %v563, 0
    %v1553 = vsel %vm718, %v617, 0
    %v1555 = vsel %vm718, %v619, 0
    %1557 = vmatprep.subr.mxu0 0.0
    %1558 = vmatpush1.xpose.msra.mxu0 0.0
    %1559 = vmatprep.subr.mxu0 0.0
    %1560 = vmatpush1.xpose.msra.mxu0 0.0
    %1561 = vmatprep.subr.mxu0 0.0
    %1562 = vmatpush1.xpose.msra.mxu0 0.0
    %1563 = vmatprep.subr.mxu0 0.0
    %1564 = vmatpush1.xpose.msra.mxu0 0.0
    %1565 = vmatprep.subr.mxu0 0.0
    %1566 = vmatpush1.xpose.msra.mxu0 0.0
    %1567 = vmatprep.subr.mxu0 0.0
    %1568 = vmatpush1.xpose.msra.mxu0 0.0
    %1569 = vmatprep.subr.mxu0 0.0
    %1570 = vmatpush1.xpose.msra.mxu0 0.0
    %1571 = vmatprep.subr.mxu0 0.0
    %1572 = vmatpush1.xpose.msra.mxu0 0.0
    %1573 = vmatprep.subr.mxu0 0.0
    %1574 = vmatpush1.xpose.msra.mxu0 0.0
    %1575 = vmatprep.subr.mxu0 0.0
    %1576 = vmatpush1.xpose.msra.mxu0 0.0
    %1577 = vmatprep.subr.mxu0 0.0
    %1578 = vmatpush1.xpose.msra.mxu0 0.0
    %1579 = vmatprep.subr.mxu0 0.0
    %1580 = vmatpush1.xpose.msra.mxu0 0.0
    %1581 = vmatprep.subr.mxu0 0.0
    %1582 = vmatpush1.xpose.msra.mxu0 0.0
    %1583 = vmatprep.subr.mxu0 0.0
    %1584 = vmatpush1.xpose.msra.mxu0 0.0
    %1585 = vmatprep.subr.mxu0 0.0
    %1586 = vmatpush1.xpose.msra.mxu0 %v1555
    %1587 = vmatprep.subr.mxu0 0.0
    %1588 = vmatpush1.xpose.msra.mxu0 %v1553
    %1589 = vmatprep.subr.mxu0 0.0
    %1590 = vmatpush2.xpose.msra.mxu0 0.0
    %1591 = vmatprep.subr.mxu0 0.0
    %1592 = vmatpush2.xpose.msra.mxu0 0.0
    %1593 = vmatprep.subr.mxu0 0.0
    %1594 = vmatpush2.xpose.msra.mxu0 0.0
    %1595 = vmatprep.subr.mxu0 0.0
    %1596 = vmatpush2.xpose.msra.mxu0 0.0
    %1597 = vmatprep.subr.mxu0 0.0
    %1598 = vmatpush2.xpose.msra.mxu0 0.0
    %1599 = vmatprep.subr.mxu0 0.0
    %1600 = vmatpush2.xpose.msra.mxu0 0.0
    %1601 = vmatprep.subr.mxu0 0.0
    %1602 = vmatpush2.xpose.msra.mxu0 0.0
    %1603 = vmatprep.subr.mxu0 0.0
    %1604 = vmatpush2.xpose.msra.mxu0 0.0
    %1605 = vmatprep.subr.mxu0 0.0
    %1606 = vmatpush2.xpose.msra.mxu0 0.0
    %1607 = vmatprep.subr.mxu0 0.0
    %1608 = vmatpush2.xpose.msra.mxu0 0.0
    %1609 = vmatprep.subr.mxu0 0.0
    %1610 = vmatpush2.xpose.msra.mxu0 0.0
    %1611 = vmatprep.subr.mxu0 0.0
    %1612 = vmatpush2.xpose.msra.mxu0 0.0
    %1613 = vmatprep.subr.mxu0 0.0
    %1614 = vmatpush2.xpose.msra.mxu0 0.0
    %1615 = vmatprep.subr.mxu0 0.0
    %1616 = vmatpush2.xpose.msra.mxu0 0.0
    %1617 = vmatprep.subr.mxu0 0.0
    %1618 = vmatpush2.xpose.msra.mxu0 0.0
    %1619 = vmatprep.subr.mxu0 0.0
    %1620 = vmatpush2.xpose.msra.mxu0 0.0
    %1621 = vmatprep.mubr.f32.mxu0 0.0
    %1622 = vmatmul.mubr.f32.gmra.mxu0 %v1549
    %v1623 = vpop.f32.mrf.mxu0
    %v1624 = vadd.f32 0.0, %v1623
    %v1625 = vpop.f32.mrf.mxu0
    %1626 = vmatprep.mubr.f32.mxu0 0.0
    %1627 = vmatmul.mubr.f32.gmra.mxu0 %v1551
    %v1628 = vpop.f32.mrf.mxu0
    %v1629 = vadd.f32 0.0, %v1628
    %v1630 = vpop.f32.mrf.mxu0
    %1631 = vdwg.mxu0
    %v1632 = vsel %vm718, %v565, 0
    %v1634 = vsel %vm718, %v567, 0
    %v1636 = vsel %vm718, %v621, 0
    %v1638 = vsel %vm718, %v623, 0
    %1640 = vmatprep.subr.mxu0 0.0
    %1641 = vmatpush1.xpose.msra.mxu0 0.0
    %1642 = vmatprep.subr.mxu0 0.0
    %1643 = vmatpush1.xpose.msra.mxu0 0.0
    %1644 = vmatprep.subr.mxu0 0.0
    %1645 = vmatpush1.xpose.msra.mxu0 0.0
    %1646 = vmatprep.subr.mxu0 0.0
    %1647 = vmatpush1.xpose.msra.mxu0 0.0
    %1648 = vmatprep.subr.mxu0 0.0
    %1649 = vmatpush1.xpose.msra.mxu0 0.0
    %1650 = vmatprep.subr.mxu0 0.0
    %1651 = vmatpush1.xpose.msra.mxu0 0.0
    %1652 = vmatprep.subr.mxu0 0.0
    %1653 = vmatpush1.xpose.msra.mxu0 0.0
    %1654 = vmatprep.subr.mxu0 0.0
    %1655 = vmatpush1.xpose.msra.mxu0 0.0
    %1656 = vmatprep.subr.mxu0 0.0
    %1657 = vmatpush1.xpose.msra.mxu0 0.0
    %1658 = vmatprep.subr.mxu0 0.0
    %1659 = vmatpush1.xpose.msra.mxu0 0.0
    %1660 = vmatprep.subr.mxu0 0.0
    %1661 = vmatpush1.xpose.msra.mxu0 0.0
    %1662 = vmatprep.subr.mxu0 0.0
    %1663 = vmatpush1.xpose.msra.mxu0 0.0
    %1664 = vmatprep.subr.mxu0 0.0
    %1665 = vmatpush1.xpose.msra.mxu0 0.0
    %1666 = vmatprep.subr.mxu0 0.0
    %1667 = vmatpush1.xpose.msra.mxu0 0.0
    %1668 = vmatprep.subr.mxu0 0.0
    %1669 = vmatpush1.xpose.msra.mxu0 %v1638
    %1670 = vmatprep.subr.mxu0 0.0
    %1671 = vmatpush1.xpose.msra.mxu0 %v1636
    %1672 = vmatprep.subr.mxu0 0.0
    %1673 = vmatpush2.xpose.msra.mxu0 0.0
    %1674 = vmatprep.subr.mxu0 0.0
    %1675 = vmatpush2.xpose.msra.mxu0 0.0
    %1676 = vmatprep.subr.mxu0 0.0
    %1677 = vmatpush2.xpose.msra.mxu0 0.0
    %1678 = vmatprep.subr.mxu0 0.0
    %1679 = vmatpush2.xpose.msra.mxu0 0.0
    %1680 = vmatprep.subr.mxu0 0.0
    %1681 = vmatpush2.xpose.msra.mxu0 0.0
    %1682 = vmatprep.subr.mxu0 0.0
    %1683 = vmatpush2.xpose.msra.mxu0 0.0
    %1684 = vmatprep.subr.mxu0 0.0
    %1685 = vmatpush2.xpose.msra.mxu0 0.0
    %1686 = vmatprep.subr.mxu0 0.0
    %1687 = vmatpush2.xpose.msra.mxu0 0.0
    %1688 = vmatprep.subr.mxu0 0.0
    %1689 = vmatpush2.xpose.msra.mxu0 0.0
    %1690 = vmatprep.subr.mxu0 0.0
    %1691 = vmatpush2.xpose.msra.mxu0 0.0
    %1692 = vmatprep.subr.mxu0 0.0
    %1693 = vmatpush2.xpose.msra.mxu0 0.0
    %1694 = vmatprep.subr.mxu0 0.0
    %1695 = vmatpush2.xpose.msra.mxu0 0.0
    %1696 = vmatprep.subr.mxu0 0.0
    %1697 = vmatpush2.xpose.msra.mxu0 0.0
    %1698 = vmatprep.subr.mxu0 0.0
    %1699 = vmatpush2.xpose.msra.mxu0 0.0
    %1700 = vmatprep.subr.mxu0 0.0
    %1701 = vmatpush2.xpose.msra.mxu0 0.0
    %1702 = vmatprep.subr.mxu0 0.0
    %1703 = vmatpush2.xpose.msra.mxu0 0.0
    %1704 = vmatprep.mubr.f32.mxu0 0.0
    %1705 = vmatmul.mubr.f32.gmra.mxu0 %v1632
    %v1706 = vpop.f32.mrf.mxu0
    %v1707 = vadd.f32 0.0, %v1706
    %v1708 = vpop.f32.mrf.mxu0
    %1709 = vmatprep.mubr.f32.mxu0 0.0
    %1710 = vmatmul.mubr.f32.gmra.mxu0 %v1634
    %v1711 = vpop.f32.mrf.mxu0
    %v1712 = vadd.f32 0.0, %v1711
    %v1713 = vpop.f32.mrf.mxu0
    %1714 = vdwg.mxu0
    %v1715 = vsel %vm718, %v340, 0
    %v1717 = vsel %vm718, %v346, 0
    %v1719 = vsel %vm718, %v429, 0
    %v1721 = vsel %vm718, %v435, 0
    %1723 = vmatprep.subr.mxu0 0.0
    %1724 = vmatpush1.xpose.msra.mxu0 0.0
    %1725 = vmatprep.subr.mxu0 0.0
    %1726 = vmatpush1.xpose.msra.mxu0 0.0
    %1727 = vmatprep.subr.mxu0 0.0
    %1728 = vmatpush1.xpose.msra.mxu0 0.0
    %1729 = vmatprep.subr.mxu0 0.0
    %1730 = vmatpush1.xpose.msra.mxu0 0.0
    %1731 = vmatprep.subr.mxu0 0.0
    %1732 = vmatpush1.xpose.msra.mxu0 0.0
    %1733 = vmatprep.subr.mxu0 0.0
    %1734 = vmatpush1.xpose.msra.mxu0 0.0
    %1735 = vmatprep.subr.mxu0 0.0
    %1736 = vmatpush1.xpose.msra.mxu0 0.0
    %1737 = vmatprep.subr.mxu0 0.0
    %1738 = vmatpush1.xpose.msra.mxu0 0.0
    %1739 = vmatprep.subr.mxu0 0.0
    %1740 = vmatpush1.xpose.msra.mxu0 0.0
    %1741 = vmatprep.subr.mxu0 0.0
    %1742 = vmatpush1.xpose.msra.mxu0 0.0
    %1743 = vmatprep.subr.mxu0 0.0
    %1744 = vmatpush1.xpose.msra.mxu0 0.0
    %1745 = vmatprep.subr.mxu0 0.0
    %1746 = vmatpush1.xpose.msra.mxu0 0.0
    %1747 = vmatprep.subr.mxu0 0.0
    %1748 = vmatpush1.xpose.msra.mxu0 0.0
    %1749 = vmatprep.subr.mxu0 0.0
    %1750 = vmatpush1.xpose.msra.mxu0 0.0
    %1751 = vmatprep.subr.mxu0 0.0
    %1752 = vmatpush1.xpose.msra.mxu0 %v1721
    %1753 = vmatprep.subr.mxu0 0.0
    %1754 = vmatpush1.xpose.msra.mxu0 %v1719
    %1755 = vmatprep.subr.mxu0 0.0
    %1756 = vmatpush2.xpose.msra.mxu0 0.0
    %1757 = vmatprep.subr.mxu0 0.0
    %1758 = vmatpush2.xpose.msra.mxu0 0.0
    %1759 = vmatprep.subr.mxu0 0.0
    %1760 = vmatpush2.xpose.msra.mxu0 0.0
    %1761 = vmatprep.subr.mxu0 0.0
    %1762 = vmatpush2.xpose.msra.mxu0 0.0
    %1763 = vmatprep.subr.mxu0 0.0
    %1764 = vmatpush2.xpose.msra.mxu0 0.0
    %1765 = vmatprep.subr.mxu0 0.0
    %1766 = vmatpush2.xpose.msra.mxu0 0.0
    %1767 = vmatprep.subr.mxu0 0.0
    %1768 = vmatpush2.xpose.msra.mxu0 0.0
    %1769 = vmatprep.subr.mxu0 0.0
    %1770 = vmatpush2.xpose.msra.mxu0 0.0
    %1771 = vmatprep.subr.mxu0 0.0
    %1772 = vmatpush2.xpose.msra.mxu0 0.0
    %1773 = vmatprep.subr.mxu0 0.0
    %1774 = vmatpush2.xpose.msra.mxu0 0.0
    %1775 = vmatprep.subr.mxu0 0.0
    %1776 = vmatpush2.xpose.msra.mxu0 0.0
    %1777 = vmatprep.subr.mxu0 0.0
    %1778 = vmatpush2.xpose.msra.mxu0 0.0
    %1779 = vmatprep.subr.mxu0 0.0
    %1780 = vmatpush2.xpose.msra.mxu0 0.0
    %1781 = vmatprep.subr.mxu0 0.0
    %1782 = vmatpush2.xpose.msra.mxu0 0.0
    %1783 = vmatprep.subr.mxu0 0.0
    %1784 = vmatpush2.xpose.msra.mxu0 0.0
    %1785 = vmatprep.subr.mxu0 0.0
    %1786 = vmatpush2.xpose.msra.mxu0 0.0
    %1787 = vmatprep.mubr.f32.mxu0 0.0
    %1788 = vmatmul.mubr.f32.gmra.mxu0 %v1715
    %v1789 = vpop.f32.mrf.mxu0
    %v1790 = vadd.f32 0.0, %v1789
    %v1791 = vpop.f32.mrf.mxu0
    %1792 = vmatprep.mubr.f32.mxu0 0.0
    %1793 = vmatmul.mubr.f32.gmra.mxu0 %v1717
    %v1794 = vpop.f32.mrf.mxu0
    %v1795 = vadd.f32 0.0, %v1794
    %v1796 = vpop.f32.mrf.mxu0
    %1797 = vdwg.mxu0
    %v1798 = vsel %vm718, %v571, 0
    %v1800 = vsel %vm718, %v573, 0
    %v1802 = vsel %vm718, %v627, 0
    %v1804 = vsel %vm718, %v629, 0
    %1806 = vmatprep.subr.mxu0 0.0
    %1807 = vmatpush1.xpose.msra.mxu0 0.0
    %1808 = vmatprep.subr.mxu0 0.0
    %1809 = vmatpush1.xpose.msra.mxu0 0.0
    %1810 = vmatprep.subr.mxu0 0.0
    %1811 = vmatpush1.xpose.msra.mxu0 0.0
    %1812 = vmatprep.subr.mxu0 0.0
    %1813 = vmatpush1.xpose.msra.mxu0 0.0
    %1814 = vmatprep.subr.mxu0 0.0
    %1815 = vmatpush1.xpose.msra.mxu0 0.0
    %1816 = vmatprep.subr.mxu0 0.0
    %1817 = vmatpush1.xpose.msra.mxu0 0.0
    %1818 = vmatprep.subr.mxu0 0.0
    %1819 = vmatpush1.xpose.msra.mxu0 0.0
    %1820 = vmatprep.subr.mxu0 0.0
    %1821 = vmatpush1.xpose.msra.mxu0 0.0
    %1822 = vmatprep.subr.mxu0 0.0
    %1823 = vmatpush1.xpose.msra.mxu0 0.0
    %1824 = vmatprep.subr.mxu0 0.0
    %1825 = vmatpush1.xpose.msra.mxu0 0.0
    %1826 = vmatprep.subr.mxu0 0.0
    %1827 = vmatpush1.xpose.msra.mxu0 0.0
    %1828 = vmatprep.subr.mxu0 0.0
    %1829 = vmatpush1.xpose.msra.mxu0 0.0
    %1830 = vmatprep.subr.mxu0 0.0
    %1831 = vmatpush1.xpose.msra.mxu0 0.0
    %1832 = vmatprep.subr.mxu0 0.0
    %1833 = vmatpush1.xpose.msra.mxu0 0.0
    %1834 = vmatprep.subr.mxu0 0.0
    %1835 = vmatpush1.xpose.msra.mxu0 %v1804
    %1836 = vmatprep.subr.mxu0 0.0
    %1837 = vmatpush1.xpose.msra.mxu0 %v1802
    %1838 = vmatprep.subr.mxu0 0.0
    %1839 = vmatpush2.xpose.msra.mxu0 0.0
    %1840 = vmatprep.subr.mxu0 0.0
    %1841 = vmatpush2.xpose.msra.mxu0 0.0
    %1842 = vmatprep.subr.mxu0 0.0
    %1843 = vmatpush2.xpose.msra.mxu0 0.0
    %1844 = vmatprep.subr.mxu0 0.0
    %1845 = vmatpush2.xpose.msra.mxu0 0.0
    %1846 = vmatprep.subr.mxu0 0.0
    %1847 = vmatpush2.xpose.msra.mxu0 0.0
    %1848 = vmatprep.subr.mxu0 0.0
    %1849 = vmatpush2.xpose.msra.mxu0 0.0
    %1850 = vmatprep.subr.mxu0 0.0
    %1851 = vmatpush2.xpose.msra.mxu0 0.0
    %1852 = vmatprep.subr.mxu0 0.0
    %1853 = vmatpush2.xpose.msra.mxu0 0.0
    %1854 = vmatprep.subr.mxu0 0.0
    %1855 = vmatpush2.xpose.msra.mxu0 0.0
    %1856 = vmatprep.subr.mxu0 0.0
    %1857 = vmatpush2.xpose.msra.mxu0 0.0
    %1858 = vmatprep.subr.mxu0 0.0
    %1859 = vmatpush2.xpose.msra.mxu0 0.0
    %1860 = vmatprep.subr.mxu0 0.0
    %1861 = vmatpush2.xpose.msra.mxu0 0.0
    %1862 = vmatprep.subr.mxu0 0.0
    %1863 = vmatpush2.xpose.msra.mxu0 0.0
    %1864 = vmatprep.subr.mxu0 0.0
    %1865 = vmatpush2.xpose.msra.mxu0 0.0
    %1866 = vmatprep.subr.mxu0 0.0
    %1867 = vmatpush2.xpose.msra.mxu0 0.0
    %1868 = vmatprep.subr.mxu0 0.0
    %1869 = vmatpush2.xpose.msra.mxu0 0.0
    %1870 = vmatprep.mubr.f32.mxu0 0.0
    %1871 = vmatmul.mubr.f32.gmra.mxu0 %v1798
    %v1872 = vpop.f32.mrf.mxu0
    %v1873 = vadd.f32 0.0, %v1872
    %v1874 = vpop.f32.mrf.mxu0
    %1875 = vmatprep.mubr.f32.mxu0 0.0
    %1876 = vmatmul.mubr.f32.gmra.mxu0 %v1800
    %v1877 = vpop.f32.mrf.mxu0
    %v1878 = vadd.f32 0.0, %v1877
    %v1879 = vpop.f32.mrf.mxu0
    %1880 = vdwg.mxu0
    %v1881 = vsel %vm718, %v575, 0
    %v1883 = vsel %vm718, %v577, 0
    %v1885 = vsel %vm718, %v631, 0
    %v1887 = vsel %vm718, %v633, 0
    %1889 = vmatprep.subr.mxu0 0.0
    %1890 = vmatpush1.xpose.msra.mxu0 0.0
    %1891 = vmatprep.subr.mxu0 0.0
    %1892 = vmatpush1.xpose.msra.mxu0 0.0
    %1893 = vmatprep.subr.mxu0 0.0
    %1894 = vmatpush1.xpose.msra.mxu0 0.0
    %1895 = vmatprep.subr.mxu0 0.0
    %1896 = vmatpush1.xpose.msra.mxu0 0.0
    %1897 = vmatprep.subr.mxu0 0.0
    %1898 = vmatpush1.xpose.msra.mxu0 0.0
    %1899 = vmatprep.subr.mxu0 0.0
    %1900 = vmatpush1.xpose.msra.mxu0 0.0
    %1901 = vmatprep.subr.mxu0 0.0
    %1902 = vmatpush1.xpose.msra.mxu0 0.0
    %1903 = vmatprep.subr.mxu0 0.0
    %1904 = vmatpush1.xpose.msra.mxu0 0.0
    %1905 = vmatprep.subr.mxu0 0.0
    %1906 = vmatpush1.xpose.msra.mxu0 0.0
    %1907 = vmatprep.subr.mxu0 0.0
    %1908 = vmatpush1.xpose.msra.mxu0 0.0
    %1909 = vmatprep.subr.mxu0 0.0
    %1910 = vmatpush1.xpose.msra.mxu0 0.0
    %1911 = vmatprep.subr.mxu0 0.0
    %1912 = vmatpush1.xpose.msra.mxu0 0.0
    %1913 = vmatprep.subr.mxu0 0.0
    %1914 = vmatpush1.xpose.msra.mxu0 0.0
    %1915 = vmatprep.subr.mxu0 0.0
    %1916 = vmatpush1.xpose.msra.mxu0 0.0
    %1917 = vmatprep.subr.mxu0 0.0
    %1918 = vmatpush1.xpose.msra.mxu0 %v1887
    %1919 = vmatprep.subr.mxu0 0.0
    %1920 = vmatpush1.xpose.msra.mxu0 %v1885
    %1921 = vmatprep.subr.mxu0 0.0
    %1922 = vmatpush2.xpose.msra.mxu0 0.0
    %1923 = vmatprep.subr.mxu0 0.0
    %1924 = vmatpush2.xpose.msra.mxu0 0.0
    %1925 = vmatprep.subr.mxu0 0.0
    %1926 = vmatpush2.xpose.msra.mxu0 0.0
    %1927 = vmatprep.subr.mxu0 0.0
    %1928 = vmatpush2.xpose.msra.mxu0 0.0
    %1929 = vmatprep.subr.mxu0 0.0
    %1930 = vmatpush2.xpose.msra.mxu0 0.0
    %1931 = vmatprep.subr.mxu0 0.0
    %1932 = vmatpush2.xpose.msra.mxu0 0.0
    %1933 = vmatprep.subr.mxu0 0.0
    %1934 = vmatpush2.xpose.msra.mxu0 0.0
    %1935 = vmatprep.subr.mxu0 0.0
    %1936 = vmatpush2.xpose.msra.mxu0 0.0
    %1937 = vmatprep.subr.mxu0 0.0
    %1938 = vmatpush2.xpose.msra.mxu0 0.0
    %1939 = vmatprep.subr.mxu0 0.0
    %1940 = vmatpush2.xpose.msra.mxu0 0.0
    %1941 = vmatprep.subr.mxu0 0.0
    %1942 = vmatpush2.xpose.msra.mxu0 0.0
    %1943 = vmatprep.subr.mxu0 0.0
    %1944 = vmatpush2.xpose.msra.mxu0 0.0
    %1945 = vmatprep.subr.mxu0 0.0
    %1946 = vmatpush2.xpose.msra.mxu0 0.0
    %1947 = vmatprep.subr.mxu0 0.0
    %1948 = vmatpush2.xpose.msra.mxu0 0.0
    %1949 = vmatprep.subr.mxu0 0.0
    %1950 = vmatpush2.xpose.msra.mxu0 0.0
    %1951 = vmatprep.subr.mxu0 0.0
    %1952 = vmatpush2.xpose.msra.mxu0 0.0
    %1953 = vmatprep.mubr.f32.mxu0 0.0
    %1954 = vmatmul.mubr.f32.gmra.mxu0 %v1881
    %v1955 = vpop.f32.mrf.mxu0
    %v1956 = vadd.f32 0.0, %v1955
    %v1957 = vpop.f32.mrf.mxu0
    %1958 = vmatprep.mubr.f32.mxu0 0.0
    %1959 = vmatmul.mubr.f32.gmra.mxu0 %v1883
    %v1960 = vpop.f32.mrf.mxu0
    %v1961 = vadd.f32 0.0, %v1960
    %v1962 = vpop.f32.mrf.mxu0
    %1963 = vdwg.mxu0
    %v1964 = vsel %vm718, %v579, 0
    %v1966 = vsel %vm718, %v581, 0
    %v1968 = vsel %vm718, %v635, 0
    %v1970 = vsel %vm718, %v637, 0
    %1972 = vmatprep.subr.mxu0 0.0
    %1973 = vmatpush1.xpose.msra.mxu0 0.0
    %1974 = vmatprep.subr.mxu0 0.0
    %1975 = vmatpush1.xpose.msra.mxu0 0.0
    %1976 = vmatprep.subr.mxu0 0.0
    %1977 = vmatpush1.xpose.msra.mxu0 0.0
    %1978 = vmatprep.subr.mxu0 0.0
    %1979 = vmatpush1.xpose.msra.mxu0 0.0
    %1980 = vmatprep.subr.mxu0 0.0
    %1981 = vmatpush1.xpose.msra.mxu0 0.0
    %1982 = vmatprep.subr.mxu0 0.0
    %1983 = vmatpush1.xpose.msra.mxu0 0.0
    %1984 = vmatprep.subr.mxu0 0.0
    %1985 = vmatpush1.xpose.msra.mxu0 0.0
    %1986 = vmatprep.subr.mxu0 0.0
    %1987 = vmatpush1.xpose.msra.mxu0 0.0
    %1988 = vmatprep.subr.mxu0 0.0
    %1989 = vmatpush1.xpose.msra.mxu0 0.0
    %1990 = vmatprep.subr.mxu0 0.0
    %1991 = vmatpush1.xpose.msra.mxu0 0.0
    %1992 = vmatprep.subr.mxu0 0.0
    %1993 = vmatpush1.xpose.msra.mxu0 0.0
    %1994 = vmatprep.subr.mxu0 0.0
    %1995 = vmatpush1.xpose.msra.mxu0 0.0
    %1996 = vmatprep.subr.mxu0 0.0
    %1997 = vmatpush1.xpose.msra.mxu0 0.0
    %1998 = vmatprep.subr.mxu0 0.0
    %1999 = vmatpush1.xpose.msra.mxu0 0.0
    %2000 = vmatprep.subr.mxu0 0.0
    %2001 = vmatpush1.xpose.msra.mxu0 %v1970
    %2002 = vmatprep.subr.mxu0 0.0
    %2003 = vmatpush1.xpose.msra.mxu0 %v1968
    %2004 = vmatprep.subr.mxu0 0.0
    %2005 = vmatpush2.xpose.msra.mxu0 0.0
    %2006 = vmatprep.subr.mxu0 0.0
    %2007 = vmatpush2.xpose.msra.mxu0 0.0
    %2008 = vmatprep.subr.mxu0 0.0
    %2009 = vmatpush2.xpose.msra.mxu0 0.0
    %2010 = vmatprep.subr.mxu0 0.0
    %2011 = vmatpush2.xpose.msra.mxu0 0.0
    %2012 = vmatprep.subr.mxu0 0.0
    %2013 = vmatpush2.xpose.msra.mxu0 0.0
    %2014 = vmatprep.subr.mxu0 0.0
    %2015 = vmatpush2.xpose.msra.mxu0 0.0
    %2016 = vmatprep.subr.mxu0 0.0
    %2017 = vmatpush2.xpose.msra.mxu0 0.0
    %2018 = vmatprep.subr.mxu0 0.0
    %2019 = vmatpush2.xpose.msra.mxu0 0.0
    %2020 = vmatprep.subr.mxu0 0.0
    %2021 = vmatpush2.xpose.msra.mxu0 0.0
    %2022 = vmatprep.subr.mxu0 0.0
    %2023 = vmatpush2.xpose.msra.mxu0 0.0
    %2024 = vmatprep.subr.mxu0 0.0
    %2025 = vmatpush2.xpose.msra.mxu0 0.0
    %2026 = vmatprep.subr.mxu0 0.0
    %2027 = vmatpush2.xpose.msra.mxu0 0.0
    %2028 = vmatprep.subr.mxu0 0.0
    %2029 = vmatpush2.xpose.msra.mxu0 0.0
    %2030 = vmatprep.subr.mxu0 0.0
    %2031 = vmatpush2.xpose.msra.mxu0 0.0
    %2032 = vmatprep.subr.mxu0 0.0
    %2033 = vmatpush2.xpose.msra.mxu0 0.0
    %2034 = vmatprep.subr.mxu0 0.0
    %2035 = vmatpush2.xpose.msra.mxu0 0.0
    %2036 = vmatprep.mubr.f32.mxu0 0.0
    %2037 = vmatmul.mubr.f32.gmra.mxu0 %v1964
    %v2038 = vpop.f32.mrf.mxu0
    %v2039 = vadd.f32 0.0, %v2038
    %v2040 = vpop.f32.mrf.mxu0
    %2041 = vmatprep.mubr.f32.mxu0 0.0
    %2042 = vmatmul.mubr.f32.gmra.mxu0 %v1966
    %v2043 = vpop.f32.mrf.mxu0
    %v2044 = vadd.f32 0.0, %v2043
    %v2045 = vpop.f32.mrf.mxu0
    %2046 = vdwg.mxu0
    %vm2047 = vcmask 130048
    %v2048 = vsel %vm2047, %v794, -inf
    %2049 = vmax.xlane.f32.xlu0 %v2048
    %v2050 = vpop.xlane.xlu0 %2049
    %v2051 = vsel %vm2047, %v799, -inf
    %2052 = vmax.xlane.f32.xlu0 %v2051
    %v2053 = vpop.xlane.xlu0 %2052
    %v2054 = vsel %vm2047, %v877, -inf
    %2055 = vmax.xlane.f32.xlu0 %v2054
    %v2056 = vpop.xlane.xlu0 %2055
    %v2057 = vsel %vm2047, %v882, -inf
    %2058 = vmax.xlane.f32.xlu0 %v2057
    %v2059 = vpop.xlane.xlu0 %2058
    %v2060 = vsel %vm2047, %v960, -inf
    %2061 = vmax.xlane.f32.xlu0 %v2060
    %v2062 = vpop.xlane.xlu0 %2061
    %v2063 = vsel %vm2047, %v965, -inf
    %2064 = vmax.xlane.f32.xlu0 %v2063
    %v2065 = vpop.xlane.xlu0 %2064
    %v2066 = vsel %vm2047, %v1043, -inf
    %2067 = vmax.xlane.f32.xlu0 %v2066
    %v2068 = vpop.xlane.xlu0 %2067
    %v2069 = vsel %vm2047, %v1048, -inf
    %2070 = vmax.xlane.f32.xlu0 %v2069
    %v2071 = vpop.xlane.xlu0 %2070
    %v2072 = vsel %vm2047, %v1126, -inf
    %2073 = vmax.xlane.f32.xlu0 %v2072
    %v2074 = vpop.xlane.xlu0 %2073
    %v2075 = vsel %vm2047, %v1131, -inf
    %2076 = vmax.xlane.f32.xlu0 %v2075
    %v2077 = vpop.xlane.xlu0 %2076
    %v2078 = vsel %vm2047, %v1209, -inf
    %2079 = vmax.xlane.f32.xlu0 %v2078
    %v2080 = vpop.xlane.xlu0 %2079
    %v2081 = vsel %vm2047, %v1214, -inf
    %2082 = vmax.xlane.f32.xlu0 %v2081
    %v2083 = vpop.xlane.xlu0 %2082
    %v2084 = vsel %vm2047, %v1292, -inf
    %2085 = vmax.xlane.f32.xlu0 %v2084
    %v2086 = vpop.xlane.xlu0 %2085
    %v2087 = vsel %vm2047, %v1297, -inf
    %2088 = vmax.xlane.f32.xlu0 %v2087
    %v2089 = vpop.xlane.xlu0 %2088
    %v2090 = vsel %vm2047, %v1375, -inf
    %2091 = vmax.xlane.f32.xlu0 %v2090
    %v2092 = vpop.xlane.xlu0 %2091
    %v2093 = vsel %vm2047, %v1380, -inf
    %2094 = vmax.xlane.f32.xlu0 %v2093
    %v2095 = vpop.xlane.xlu0 %2094
    %v2096 = vsel %vm2047, %v1458, -inf
    %2097 = vmax.xlane.f32.xlu0 %v2096
    %v2098 = vpop.xlane.xlu0 %2097
    %v2099 = vsel %vm2047, %v1463, -inf
    %2100 = vmax.xlane.f32.xlu0 %v2099
    %v2101 = vpop.xlane.xlu0 %2100
    %v2102 = vsel %vm2047, %v1541, -inf
    %2103 = vmax.xlane.f32.xlu0 %v2102
    %v2104 = vpop.xlane.xlu0 %2103
    %v2105 = vsel %vm2047, %v1546, -inf
    %2106 = vmax.xlane.f32.xlu0 %v2105
    %v2107 = vpop.xlane.xlu0 %2106
    %v2108 = vsel %vm2047, %v1624, -inf
    %2109 = vmax.xlane.f32.xlu0 %v2108
    %v2110 = vpop.xlane.xlu0 %2109
    %v2111 = vsel %vm2047, %v1629, -inf
    %2112 = vmax.xlane.f32.xlu0 %v2111
    %v2113 = vpop.xlane.xlu0 %2112
    %v2114 = vsel %vm2047, %v1707, -inf
    %2115 = vmax.xlane.f32.xlu0 %v2114
    %v2116 = vpop.xlane.xlu0 %2115
    %v2117 = vsel %vm2047, %v1712, -inf
    %2118 = vmax.xlane.f32.xlu0 %v2117
    %v2119 = vpop.xlane.xlu0 %2118
    %v2120 = vsel %vm2047, %v1790, -inf
    %2121 = vmax.xlane.f32.xlu0 %v2120
    %v2122 = vpop.xlane.xlu0 %2121
    %v2123 = vsel %vm2047, %v1795, -inf
    %2124 = vmax.xlane.f32.xlu0 %v2123
    %v2125 = vpop.xlane.xlu0 %2124
    %v2126 = vsel %vm2047, %v1873, -inf
    %2127 = vmax.xlane.f32.xlu0 %v2126
    %v2128 = vpop.xlane.xlu0 %2127
    %v2129 = vsel %vm2047, %v1878, -inf
    %2130 = vmax.xlane.f32.xlu0 %v2129
    %v2131 = vpop.xlane.xlu0 %2130
    %v2132 = vsel %vm2047, %v1956, -inf
    %2133 = vmax.xlane.f32.xlu0 %v2132
    %v2134 = vpop.xlane.xlu0 %2133
    %v2135 = vsel %vm2047, %v1961, -inf
    %2136 = vmax.xlane.f32.xlu0 %v2135
    %v2137 = vpop.xlane.xlu0 %2136
    %v2138 = vsel %vm2047, %v2039, -inf
    %2139 = vmax.xlane.f32.xlu0 %v2138
    %v2140 = vpop.xlane.xlu0 %2139
    %v2141 = vsel %vm2047, %v2044, -inf
    %2142 = vmax.xlane.f32.xlu0 %v2141
    %v2143 = vpop.xlane.xlu0 %2142
    %v2144 = vsub.f32 %v794, %v2050
    %v2145 = vsub.f32 %v799, %v2053
    %v2146 = vsub.f32 %v877, %v2056
    %v2147 = vsub.f32 %v882, %v2059
    %v2148 = vsub.f32 %v960, %v2062
    %v2149 = vsub.f32 %v965, %v2065
    %v2150 = vsub.f32 %v1043, %v2068
    %v2151 = vsub.f32 %v1048, %v2071
    %v2152 = vsub.f32 %v1126, %v2074
    %v2153 = vsub.f32 %v1131, %v2077
    %v2154 = vsub.f32 %v1209, %v2080
    %v2155 = vsub.f32 %v1214, %v2083
    %v2156 = vsub.f32 %v1292, %v2086
    %v2157 = vsub.f32 %v1297, %v2089
    %v2158 = vsub.f32 %v1375, %v2092
    %v2159 = vsub.f32 %v1380, %v2095
    %v2160 = vsub.f32 %v1458, %v2098
    %v2161 = vsub.f32 %v1463, %v2101
    %v2162 = vsub.f32 %v1541, %v2104
    %v2163 = vsub.f32 %v1546, %v2107
    %v2164 = vsub.f32 %v1624, %v2110
    %v2165 = vsub.f32 %v1629, %v2113
    %v2166 = vsub.f32 %v1707, %v2116
    %v2167 = vsub.f32 %v1712, %v2119
    %v2168 = vsub.f32 %v1790, %v2122
    %v2169 = vsub.f32 %v1795, %v2125
    %v2170 = vsub.f32 %v1873, %v2128
    %v2171 = vsub.f32 %v1878, %v2131
    %v2172 = vsub.f32 %v1956, %v2134
    %v2173 = vsub.f32 %v1961, %v2137
    %v2174 = vsub.f32 %v2039, %v2140
    %v2175 = vsub.f32 %v2044, %v2143
    %v2176 = vmul.f32 %v2144, 1.442695
    %v2177 = vpow.pop %v2176
    %v2178 = vmul.f32 %v2145, 1.442695
    %v2179 = vpow.pop %v2178
    %v2180 = vmul.f32 %v2146, 1.442695
    %v2181 = vpow.pop %v2180
    %v2182 = vmul.f32 %v2147, 1.442695
    %v2183 = vpow.pop %v2182
    %v2184 = vmul.f32 %v2148, 1.442695
    %v2185 = vpow.pop %v2184
    %v2186 = vmul.f32 %v2149, 1.442695
    %v2187 = vpow.pop %v2186
    %v2188 = vmul.f32 %v2150, 1.442695
    %v2189 = vpow.pop %v2188
    %v2190 = vmul.f32 %v2151, 1.442695
    %v2191 = vpow.pop %v2190
    %v2192 = vmul.f32 %v2152, 1.442695
    %v2193 = vpow.pop %v2192
    %v2194 = vmul.f32 %v2153, 1.442695
    %v2195 = vpow.pop %v2194
    %v2196 = vmul.f32 %v2154, 1.442695
    %v2197 = vpow.pop %v2196
    %v2198 = vmul.f32 %v2155, 1.442695
    %v2199 = vpow.pop %v2198
    %v2200 = vmul.f32 %v2156, 1.442695
    %v2201 = vpow.pop %v2200
    %v2202 = vmul.f32 %v2157, 1.442695
    %v2203 = vpow.pop %v2202
    %v2204 = vmul.f32 %v2158, 1.442695
    %v2205 = vpow.pop %v2204
    %v2206 = vmul.f32 %v2159, 1.442695
    %v2207 = vpow.pop %v2206
    %v2208 = vmul.f32 %v2160, 1.442695
    %v2209 = vpow.pop %v2208
    %v2210 = vmul.f32 %v2161, 1.442695
    %v2211 = vpow.pop %v2210
    %v2212 = vmul.f32 %v2162, 1.442695
    %v2213 = vpow.pop %v2212
    %v2214 = vmul.f32 %v2163, 1.442695
    %v2215 = vpow.pop %v2214
    %v2216 = vmul.f32 %v2164, 1.442695
    %v2217 = vpow.pop %v2216
    %v2218 = vmul.f32 %v2165, 1.442695
    %v2219 = vpow.pop %v2218
    %v2220 = vmul.f32 %v2166, 1.442695
    %v2221 = vpow.pop %v2220
    %v2222 = vmul.f32 %v2167, 1.442695
    %v2223 = vpow.pop %v2222
    %v2224 = vmul.f32 %v2168, 1.442695
    %v2225 = vpow.pop %v2224
    %v2226 = vmul.f32 %v2169, 1.442695
    %v2227 = vpow.pop %v2226
    %v2228 = vmul.f32 %v2170, 1.442695
    %v2229 = vpow.pop %v2228
    %v2230 = vmul.f32 %v2171, 1.442695
    %v2231 = vpow.pop %v2230
    %v2232 = vmul.f32 %v2172, 1.442695
    %v2233 = vpow.pop %v2232
    %v2234 = vmul.f32 %v2173, 1.442695
    %v2235 = vpow.pop %v2234
    %v2236 = vmul.f32 %v2174, 1.442695
    %v2237 = vpow.pop %v2236
    %v2238 = vmul.f32 %v2175, 1.442695
    %v2239 = vpow.pop %v2238
    %v2240 = vsel %vm2047, %v2177, 0.0
    %2241 = vadd.xlane.f32.xlu0 %v2240
    %v2242 = vpop.xlane.xlu0 %2241
    %v2243 = vsel %vm2047, %v2179, 0.0
    %2244 = vadd.xlane.f32.xlu0 %v2243
    %v2245 = vpop.xlane.xlu0 %2244
    %v2246 = vsel %vm2047, %v2181, 0.0
    %2247 = vadd.xlane.f32.xlu0 %v2246
    %v2248 = vpop.xlane.xlu0 %2247
    %v2249 = vsel %vm2047, %v2183, 0.0
    %2250 = vadd.xlane.f32.xlu0 %v2249
    %v2251 = vpop.xlane.xlu0 %2250
    %v2252 = vsel %vm2047, %v2185, 0.0
    %2253 = vadd.xlane.f32.xlu0 %v2252
    %v2254 = vpop.xlane.xlu0 %2253
    %v2255 = vsel %vm2047, %v2187, 0.0
    %2256 = vadd.xlane.f32.xlu0 %v2255
    %v2257 = vpop.xlane.xlu0 %2256
    %v2258 = vsel %vm2047, %v2189, 0.0
    %2259 = vadd.xlane.f32.xlu0 %v2258
    %v2260 = vpop.xlane.xlu0 %2259
    %v2261 = vsel %vm2047, %v2191, 0.0
    %2262 = vadd.xlane.f32.xlu0 %v2261
    %v2263 = vpop.xlane.xlu0 %2262
    %v2264 = vsel %vm2047, %v2193, 0.0
    %2265 = vadd.xlane.f32.xlu0 %v2264
    %v2266 = vpop.xlane.xlu0 %2265
    %v2267 = vsel %vm2047, %v2195, 0.0
    %2268 = vadd.xlane.f32.xlu0 %v2267
    %v2269 = vpop.xlane.xlu0 %2268
    %v2270 = vsel %vm2047, %v2197, 0.0
    %2271 = vadd.xlane.f32.xlu0 %v2270
    %v2272 = vpop.xlane.xlu0 %2271
    %v2273 = vsel %vm2047, %v2199, 0.0
    %2274 = vadd.xlane.f32.xlu0 %v2273
    %v2275 = vpop.xlane.xlu0 %2274
    %v2276 = vsel %vm2047, %v2201, 0.0
    %2277 = vadd.xlane.f32.xlu0 %v2276
    %v2278 = vpop.xlane.xlu0 %2277
    %v2279 = vsel %vm2047, %v2203, 0.0
    %2280 = vadd.xlane.f32.xlu0 %v2279
    %v2281 = vpop.xlane.xlu0 %2280
    %v2282 = vsel %vm2047, %v2205, 0.0
    %2283 = vadd.xlane.f32.xlu0 %v2282
    %v2284 = vpop.xlane.xlu0 %2283
    %v2285 = vsel %vm2047, %v2207, 0.0
    %2286 = vadd.xlane.f32.xlu0 %v2285
    %v2287 = vpop.xlane.xlu0 %2286
    %v2288 = vsel %vm2047, %v2209, 0.0
    %2289 = vadd.xlane.f32.xlu0 %v2288
    %v2290 = vpop.xlane.xlu0 %2289
    %v2291 = vsel %vm2047, %v2211, 0.0
    %2292 = vadd.xlane.f32.xlu0 %v2291
    %v2293 = vpop.xlane.xlu0 %2292
    %v2294 = vsel %vm2047, %v2213, 0.0
    %2295 = vadd.xlane.f32.xlu0 %v2294
    %v2296 = vpop.xlane.xlu0 %2295
    %v2297 = vsel %vm2047, %v2215, 0.0
    %2298 = vadd.xlane.f32.xlu0 %v2297
    %v2299 = vpop.xlane.xlu0 %2298
    %v2300 = vsel %vm2047, %v2217, 0.0
    %2301 = vadd.xlane.f32.xlu0 %v2300
    %v2302 = vpop.xlane.xlu0 %2301
    %v2303 = vsel %vm2047, %v2219, 0.0
    %2304 = vadd.xlane.f32.xlu0 %v2303
    %v2305 = vpop.xlane.xlu0 %2304
    %v2306 = vsel %vm2047, %v2221, 0.0
    %2307 = vadd.xlane.f32.xlu0 %v2306
    %v2308 = vpop.xlane.xlu0 %2307
    %v2309 = vsel %vm2047, %v2223, 0.0
    %2310 = vadd.xlane.f32.xlu0 %v2309
    %v2311 = vpop.xlane.xlu0 %2310
    %v2312 = vsel %vm2047, %v2225, 0.0
    %2313 = vadd.xlane.f32.xlu0 %v2312
    %v2314 = vpop.xlane.xlu0 %2313
    %v2315 = vsel %vm2047, %v2227, 0.0
    %2316 = vadd.xlane.f32.xlu0 %v2315
    %v2317 = vpop.xlane.xlu0 %2316
    %v2318 = vsel %vm2047, %v2229, 0.0
    %2319 = vadd.xlane.f32.xlu0 %v2318
    %v2320 = vpop.xlane.xlu0 %2319
    %v2321 = vsel %vm2047, %v2231, 0.0
    %2322 = vadd.xlane.f32.xlu0 %v2321
    %v2323 = vpop.xlane.xlu0 %2322
    %v2324 = vsel %vm2047, %v2233, 0.0
    %2325 = vadd.xlane.f32.xlu0 %v2324
    %v2326 = vpop.xlane.xlu0 %2325
    %v2327 = vsel %vm2047, %v2235, 0.0
    %2328 = vadd.xlane.f32.xlu0 %v2327
    %v2329 = vpop.xlane.xlu0 %2328
    %v2330 = vsel %vm2047, %v2237, 0.0
    %2331 = vadd.xlane.f32.xlu0 %v2330
    %v2332 = vpop.xlane.xlu0 %2331
    %v2333 = vsel %vm2047, %v2239, 0.0
    %2334 = vadd.xlane.f32.xlu0 %v2333
    %v2335 = vpop.xlane.xlu0 %2334
    %v2337 = vsel %vm2047, %v2177, 0
    %v2340 = vsel %vm2047, %v2179, 0
    %2342 = vmatprep.subr.mxu0 0.0
    %2343 = vmatpush1.msra.mxu0 0.0
    %2344 = vmatprep.subr.mxu0 0.0
    %2345 = vmatpush1.msra.mxu0 0.0
    %2346 = vmatprep.subr.mxu0 0.0
    %2347 = vmatpush1.msra.mxu0 0.0
    %2348 = vmatprep.subr.mxu0 0.0
    %2349 = vmatpush1.msra.mxu0 0.0
    %2350 = vmatprep.subr.mxu0 0.0
    %2351 = vmatpush1.msra.mxu0 0.0
    %2352 = vmatprep.subr.mxu0 0.0
    %2353 = vmatpush1.msra.mxu0 0.0
    %2354 = vmatprep.subr.mxu0 0.0
    %2355 = vmatpush1.msra.mxu0 0.0
    %2356 = vmatprep.subr.mxu0 0.0
    %2357 = vmatpush1.msra.mxu0 0.0
    %2358 = vmatprep.subr.mxu0 0.0
    %2359 = vmatpush1.msra.mxu0 0.0
    %2360 = vmatprep.subr.mxu0 0.0
    %2361 = vmatpush1.msra.mxu0 0.0
    %2362 = vmatprep.subr.mxu0 0.0
    %2363 = vmatpush1.msra.mxu0 0.0
    %2364 = vmatprep.subr.mxu0 0.0
    %2365 = vmatpush1.msra.mxu0 0.0
    %2366 = vmatprep.subr.mxu0 0.0
    %2367 = vmatpush1.msra.mxu0 0.0
    %2368 = vmatprep.subr.mxu0 0.0
    %2369 = vmatpush1.msra.mxu0 0.0
    %2370 = vmatprep.subr.mxu0 0.0
    %2371 = vmatpush1.msra.mxu0 %v510
    %2372 = vmatprep.subr.mxu0 0.0
    %2373 = vmatpush1.msra.mxu0 %v504
    %2374 = vmatprep.subr.mxu0 0.0
    %2375 = vmatpush2.msra.mxu0 0.0
    %2376 = vmatprep.subr.mxu0 0.0
    %2377 = vmatpush2.msra.mxu0 0.0
    %2378 = vmatprep.subr.mxu0 0.0
    %2379 = vmatpush2.msra.mxu0 0.0
    %2380 = vmatprep.subr.mxu0 0.0
    %2381 = vmatpush2.msra.mxu0 0.0
    %2382 = vmatprep.subr.mxu0 0.0
    %2383 = vmatpush2.msra.mxu0 0.0
    %2384 = vmatprep.subr.mxu0 0.0
    %2385 = vmatpush2.msra.mxu0 0.0
    %2386 = vmatprep.subr.mxu0 0.0
    %2387 = vmatpush2.msra.mxu0 0.0
    %2388 = vmatprep.subr.mxu0 0.0
    %2389 = vmatpush2.msra.mxu0 0.0
    %2390 = vmatprep.subr.mxu0 0.0
    %2391 = vmatpush2.msra.mxu0 0.0
    %2392 = vmatprep.subr.mxu0 0.0
    %2393 = vmatpush2.msra.mxu0 0.0
    %2394 = vmatprep.subr.mxu0 0.0
    %2395 = vmatpush2.msra.mxu0 0.0
    %2396 = vmatprep.subr.mxu0 0.0
    %2397 = vmatpush2.msra.mxu0 0.0
    %2398 = vmatprep.subr.mxu0 0.0
    %2399 = vmatpush2.msra.mxu0 0.0
    %2400 = vmatprep.subr.mxu0 0.0
    %2401 = vmatpush2.msra.mxu0 0.0
    %2402 = vmatprep.subr.mxu0 0.0
    %2403 = vmatpush2.msra.mxu0 0.0
    %2404 = vmatprep.subr.mxu0 0.0
    %2405 = vmatpush2.msra.mxu0 0.0
    %2406 = vmatprep.mubr.f32.mxu0 0.0
    %2407 = vmatmul.mubr.f32.gmra.mxu0 %v2337
    %v2408 = vpop.f32.mrf.mxu0
    %v2409 = vadd.f32 0.0, %v2408
    %v2410 = vpop.f32.mrf.mxu0
    %2411 = vmatprep.mubr.f32.mxu0 0.0
    %2412 = vmatmul.mubr.f32.gmra.mxu0 %v2340
    %v2413 = vpop.f32.mrf.mxu0
    %v2414 = vadd.f32 0.0, %v2413
    %v2415 = vpop.f32.mrf.mxu0
    %2416 = vdwg.mxu0
    %v2418 = vsel %vm2047, %v2181, 0
    %v2421 = vsel %vm2047, %v2183, 0
    %2423 = vmatprep.subr.mxu0 0.0
    %2424 = vmatpush1.msra.mxu0 0.0
    %2425 = vmatprep.subr.mxu0 0.0
    %2426 = vmatpush1.msra.mxu0 0.0
    %2427 = vmatprep.subr.mxu0 0.0
    %2428 = vmatpush1.msra.mxu0 0.0
    %2429 = vmatprep.subr.mxu0 0.0
    %2430 = vmatpush1.msra.mxu0 0.0
    %2431 = vmatprep.subr.mxu0 0.0
    %2432 = vmatpush1.msra.mxu0 0.0
    %2433 = vmatprep.subr.mxu0 0.0
    %2434 = vmatpush1.msra.mxu0 0.0
    %2435 = vmatprep.subr.mxu0 0.0
    %2436 = vmatpush1.msra.mxu0 0.0
    %2437 = vmatprep.subr.mxu0 0.0
    %2438 = vmatpush1.msra.mxu0 0.0
    %2439 = vmatprep.subr.mxu0 0.0
    %2440 = vmatpush1.msra.mxu0 0.0
    %2441 = vmatprep.subr.mxu0 0.0
    %2442 = vmatpush1.msra.mxu0 0.0
    %2443 = vmatprep.subr.mxu0 0.0
    %2444 = vmatpush1.msra.mxu0 0.0
    %2445 = vmatprep.subr.mxu0 0.0
    %2446 = vmatpush1.msra.mxu0 0.0
    %2447 = vmatprep.subr.mxu0 0.0
    %2448 = vmatpush1.msra.mxu0 0.0
    %2449 = vmatprep.subr.mxu0 0.0
    %2450 = vmatpush1.msra.mxu0 0.0
    %2451 = vmatprep.subr.mxu0 0.0
    %2452 = vmatpush1.msra.mxu0 %v643
    %2453 = vmatprep.subr.mxu0 0.0
    %2454 = vmatpush1.msra.mxu0 %v641
    %2455 = vmatprep.subr.mxu0 0.0
    %2456 = vmatpush2.msra.mxu0 0.0
    %2457 = vmatprep.subr.mxu0 0.0
    %2458 = vmatpush2.msra.mxu0 0.0
    %2459 = vmatprep.subr.mxu0 0.0
    %2460 = vmatpush2.msra.mxu0 0.0
    %2461 = vmatprep.subr.mxu0 0.0
    %2462 = vmatpush2.msra.mxu0 0.0
    %2463 = vmatprep.subr.mxu0 0.0
    %2464 = vmatpush2.msra.mxu0 0.0
    %2465 = vmatprep.subr.mxu0 0.0
    %2466 = vmatpush2.msra.mxu0 0.0
    %2467 = vmatprep.subr.mxu0 0.0
    %2468 = vmatpush2.msra.mxu0 0.0
    %2469 = vmatprep.subr.mxu0 0.0
    %2470 = vmatpush2.msra.mxu0 0.0
    %2471 = vmatprep.subr.mxu0 0.0
    %2472 = vmatpush2.msra.mxu0 0.0
    %2473 = vmatprep.subr.mxu0 0.0
    %2474 = vmatpush2.msra.mxu0 0.0
    %2475 = vmatprep.subr.mxu0 0.0
    %2476 = vmatpush2.msra.mxu0 0.0
    %2477 = vmatprep.subr.mxu0 0.0
    %2478 = vmatpush2.msra.mxu0 0.0
    %2479 = vmatprep.subr.mxu0 0.0
    %2480 = vmatpush2.msra.mxu0 0.0
    %2481 = vmatprep.subr.mxu0 0.0
    %2482 = vmatpush2.msra.mxu0 0.0
    %2483 = vmatprep.subr.mxu0 0.0
    %2484 = vmatpush2.msra.mxu0 0.0
    %2485 = vmatprep.subr.mxu0 0.0
    %2486 = vmatpush2.msra.mxu0 0.0
    %2487 = vmatprep.mubr.f32.mxu0 0.0
    %2488 = vmatmul.mubr.f32.gmra.mxu0 %v2418
    %v2489 = vpop.f32.mrf.mxu0
    %v2490 = vadd.f32 0.0, %v2489
    %v2491 = vpop.f32.mrf.mxu0
    %2492 = vmatprep.mubr.f32.mxu0 0.0
    %2493 = vmatmul.mubr.f32.gmra.mxu0 %v2421
    %v2494 = vpop.f32.mrf.mxu0
    %v2495 = vadd.f32 0.0, %v2494
    %v2496 = vpop.f32.mrf.mxu0
    %2497 = vdwg.mxu0
    %v2499 = vsel %vm2047, %v2185, 0
    %v2502 = vsel %vm2047, %v2187, 0
    %2504 = vmatprep.subr.mxu0 0.0
    %2505 = vmatpush1.msra.mxu0 0.0
    %2506 = vmatprep.subr.mxu0 0.0
    %2507 = vmatpush1.msra.mxu0 0.0
    %2508 = vmatprep.subr.mxu0 0.0
    %2509 = vmatpush1.msra.mxu0 0.0
    %2510 = vmatprep.subr.mxu0 0.0
    %2511 = vmatpush1.msra.mxu0 0.0
    %2512 = vmatprep.subr.mxu0 0.0
    %2513 = vmatpush1.msra.mxu0 0.0
    %2514 = vmatprep.subr.mxu0 0.0
    %2515 = vmatpush1.msra.mxu0 0.0
    %2516 = vmatprep.subr.mxu0 0.0
    %2517 = vmatpush1.msra.mxu0 0.0
    %2518 = vmatprep.subr.mxu0 0.0
    %2519 = vmatpush1.msra.mxu0 0.0
    %2520 = vmatprep.subr.mxu0 0.0
    %2521 = vmatpush1.msra.mxu0 0.0
    %2522 = vmatprep.subr.mxu0 0.0
    %2523 = vmatpush1.msra.mxu0 0.0
    %2524 = vmatprep.subr.mxu0 0.0
    %2525 = vmatpush1.msra.mxu0 0.0
    %2526 = vmatprep.subr.mxu0 0.0
    %2527 = vmatpush1.msra.mxu0 0.0
    %2528 = vmatprep.subr.mxu0 0.0
    %2529 = vmatpush1.msra.mxu0 0.0
    %2530 = vmatprep.subr.mxu0 0.0
    %2531 = vmatpush1.msra.mxu0 0.0
    %2532 = vmatprep.subr.mxu0 0.0
    %2533 = vmatpush1.msra.mxu0 %v649
    %2534 = vmatprep.subr.mxu0 0.0
    %2535 = vmatpush1.msra.mxu0 %v647
    %2536 = vmatprep.subr.mxu0 0.0
    %2537 = vmatpush2.msra.mxu0 0.0
    %2538 = vmatprep.subr.mxu0 0.0
    %2539 = vmatpush2.msra.mxu0 0.0
    %2540 = vmatprep.subr.mxu0 0.0
    %2541 = vmatpush2.msra.mxu0 0.0
    %2542 = vmatprep.subr.mxu0 0.0
    %2543 = vmatpush2.msra.mxu0 0.0
    %2544 = vmatprep.subr.mxu0 0.0
    %2545 = vmatpush2.msra.mxu0 0.0
    %2546 = vmatprep.subr.mxu0 0.0
    %2547 = vmatpush2.msra.mxu0 0.0
    %2548 = vmatprep.subr.mxu0 0.0
    %2549 = vmatpush2.msra.mxu0 0.0
    %2550 = vmatprep.subr.mxu0 0.0
    %2551 = vmatpush2.msra.mxu0 0.0
    %2552 = vmatprep.subr.mxu0 0.0
    %2553 = vmatpush2.msra.mxu0 0.0
    %2554 = vmatprep.subr.mxu0 0.0
    %2555 = vmatpush2.msra.mxu0 0.0
    %2556 = vmatprep.subr.mxu0 0.0
    %2557 = vmatpush2.msra.mxu0 0.0
    %2558 = vmatprep.subr.mxu0 0.0
    %2559 = vmatpush2.msra.mxu0 0.0
    %2560 = vmatprep.subr.mxu0 0.0
    %2561 = vmatpush2.msra.mxu0 0.0
    %2562 = vmatprep.subr.mxu0 0.0
    %2563 = vmatpush2.msra.mxu0 0.0
    %2564 = vmatprep.subr.mxu0 0.0
    %2565 = vmatpush2.msra.mxu0 0.0
    %2566 = vmatprep.subr.mxu0 0.0
    %2567 = vmatpush2.msra.mxu0 0.0
    %2568 = vmatprep.mubr.f32.mxu0 0.0
    %2569 = vmatmul.mubr.f32.gmra.mxu0 %v2499
    %v2570 = vpop.f32.mrf.mxu0
    %v2571 = vadd.f32 0.0, %v2570
    %v2572 = vpop.f32.mrf.mxu0
    %2573 = vmatprep.mubr.f32.mxu0 0.0
    %2574 = vmatmul.mubr.f32.gmra.mxu0 %v2502
    %v2575 = vpop.f32.mrf.mxu0
    %v2576 = vadd.f32 0.0, %v2575
    %v2577 = vpop.f32.mrf.mxu0
    %2578 = vdwg.mxu0
    %v2580 = vsel %vm2047, %v2189, 0
    %v2583 = vsel %vm2047, %v2191, 0
    %2585 = vmatprep.subr.mxu0 0.0
    %2586 = vmatpush1.msra.mxu0 0.0
    %2587 = vmatprep.subr.mxu0 0.0
    %2588 = vmatpush1.msra.mxu0 0.0
    %2589 = vmatprep.subr.mxu0 0.0
    %2590 = vmatpush1.msra.mxu0 0.0
    %2591 = vmatprep.subr.mxu0 0.0
    %2592 = vmatpush1.msra.mxu0 0.0
    %2593 = vmatprep.subr.mxu0 0.0
    %2594 = vmatpush1.msra.mxu0 0.0
    %2595 = vmatprep.subr.mxu0 0.0
    %2596 = vmatpush1.msra.mxu0 0.0
    %2597 = vmatprep.subr.mxu0 0.0
    %2598 = vmatpush1.msra.mxu0 0.0
    %2599 = vmatprep.subr.mxu0 0.0
    %2600 = vmatpush1.msra.mxu0 0.0
    %2601 = vmatprep.subr.mxu0 0.0
    %2602 = vmatpush1.msra.mxu0 0.0
    %2603 = vmatprep.subr.mxu0 0.0
    %2604 = vmatpush1.msra.mxu0 0.0
    %2605 = vmatprep.subr.mxu0 0.0
    %2606 = vmatpush1.msra.mxu0 0.0
    %2607 = vmatprep.subr.mxu0 0.0
    %2608 = vmatpush1.msra.mxu0 0.0
    %2609 = vmatprep.subr.mxu0 0.0
    %2610 = vmatpush1.msra.mxu0 0.0
    %2611 = vmatprep.subr.mxu0 0.0
    %2612 = vmatpush1.msra.mxu0 0.0
    %2613 = vmatprep.subr.mxu0 0.0
    %2614 = vmatpush1.msra.mxu0 %v655
    %2615 = vmatprep.subr.mxu0 0.0
    %2616 = vmatpush1.msra.mxu0 %v653
    %2617 = vmatprep.subr.mxu0 0.0
    %2618 = vmatpush2.msra.mxu0 0.0
    %2619 = vmatprep.subr.mxu0 0.0
    %2620 = vmatpush2.msra.mxu0 0.0
    %2621 = vmatprep.subr.mxu0 0.0
    %2622 = vmatpush2.msra.mxu0 0.0
    %2623 = vmatprep.subr.mxu0 0.0
    %2624 = vmatpush2.msra.mxu0 0.0
    %2625 = vmatprep.subr.mxu0 0.0
    %2626 = vmatpush2.msra.mxu0 0.0
    %2627 = vmatprep.subr.mxu0 0.0
    %2628 = vmatpush2.msra.mxu0 0.0
    %2629 = vmatprep.subr.mxu0 0.0
    %2630 = vmatpush2.msra.mxu0 0.0
    %2631 = vmatprep.subr.mxu0 0.0
    %2632 = vmatpush2.msra.mxu0 0.0
    %2633 = vmatprep.subr.mxu0 0.0
    %2634 = vmatpush2.msra.mxu0 0.0
    %2635 = vmatprep.subr.mxu0 0.0
    %2636 = vmatpush2.msra.mxu0 0.0
    %2637 = vmatprep.subr.mxu0 0.0
    %2638 = vmatpush2.msra.mxu0 0.0
    %2639 = vmatprep.subr.mxu0 0.0
    %2640 = vmatpush2.msra.mxu0 0.0
    %2641 = vmatprep.subr.mxu0 0.0
    %2642 = vmatpush2.msra.mxu0 0.0
    %2643 = vmatprep.subr.mxu0 0.0
    %2644 = vmatpush2.msra.mxu0 0.0
    %2645 = vmatprep.subr.mxu0 0.0
    %2646 = vmatpush2.msra.mxu0 0.0
    %2647 = vmatprep.subr.mxu0 0.0
    %2648 = vmatpush2.msra.mxu0 0.0
    %2649 = vmatprep.mubr.f32.mxu0 0.0
    %2650 = vmatmul.mubr.f32.gmra.mxu0 %v2580
    %v2651 = vpop.f32.mrf.mxu0
    %v2652 = vadd.f32 0.0, %v2651
    %v2653 = vpop.f32.mrf.mxu0
    %2654 = vmatprep.mubr.f32.mxu0 0.0
    %2655 = vmatmul.mubr.f32.gmra.mxu0 %v2583
    %v2656 = vpop.f32.mrf.mxu0
    %v2657 = vadd.f32 0.0, %v2656
    %v2658 = vpop.f32.mrf.mxu0
    %2659 = vdwg.mxu0
    %v2661 = vsel %vm2047, %v2193, 0
    %v2664 = vsel %vm2047, %v2195, 0
    %2666 = vmatprep.subr.mxu0 0.0
    %2667 = vmatpush1.msra.mxu0 0.0
    %2668 = vmatprep.subr.mxu0 0.0
    %2669 = vmatpush1.msra.mxu0 0.0
    %2670 = vmatprep.subr.mxu0 0.0
    %2671 = vmatpush1.msra.mxu0 0.0
    %2672 = vmatprep.subr.mxu0 0.0
    %2673 = vmatpush1.msra.mxu0 0.0
    %2674 = vmatprep.subr.mxu0 0.0
    %2675 = vmatpush1.msra.mxu0 0.0
    %2676 = vmatprep.subr.mxu0 0.0
    %2677 = vmatpush1.msra.mxu0 0.0
    %2678 = vmatprep.subr.mxu0 0.0
    %2679 = vmatpush1.msra.mxu0 0.0
    %2680 = vmatprep.subr.mxu0 0.0
    %2681 = vmatpush1.msra.mxu0 0.0
    %2682 = vmatprep.subr.mxu0 0.0
    %2683 = vmatpush1.msra.mxu0 0.0
    %2684 = vmatprep.subr.mxu0 0.0
    %2685 = vmatpush1.msra.mxu0 0.0
    %2686 = vmatprep.subr.mxu0 0.0
    %2687 = vmatpush1.msra.mxu0 0.0
    %2688 = vmatprep.subr.mxu0 0.0
    %2689 = vmatpush1.msra.mxu0 0.0
    %2690 = vmatprep.subr.mxu0 0.0
    %2691 = vmatpush1.msra.mxu0 0.0
    %2692 = vmatprep.subr.mxu0 0.0
    %2693 = vmatpush1.msra.mxu0 0.0
    %2694 = vmatprep.subr.mxu0 0.0
    %2695 = vmatpush1.msra.mxu0 %v512
    %2696 = vmatprep.subr.mxu0 0.0
    %2697 = vmatpush1.msra.mxu0 %v506
    %2698 = vmatprep.subr.mxu0 0.0
    %2699 = vmatpush2.msra.mxu0 0.0
    %2700 = vmatprep.subr.mxu0 0.0
    %2701 = vmatpush2.msra.mxu0 0.0
    %2702 = vmatprep.subr.mxu0 0.0
    %2703 = vmatpush2.msra.mxu0 0.0
    %2704 = vmatprep.subr.mxu0 0.0
    %2705 = vmatpush2.msra.mxu0 0.0
    %2706 = vmatprep.subr.mxu0 0.0
    %2707 = vmatpush2.msra.mxu0 0.0
    %2708 = vmatprep.subr.mxu0 0.0
    %2709 = vmatpush2.msra.mxu0 0.0
    %2710 = vmatprep.subr.mxu0 0.0
    %2711 = vmatpush2.msra.mxu0 0.0
    %2712 = vmatprep.subr.mxu0 0.0
    %2713 = vmatpush2.msra.mxu0 0.0
    %2714 = vmatprep.subr.mxu0 0.0
    %2715 = vmatpush2.msra.mxu0 0.0
    %2716 = vmatprep.subr.mxu0 0.0
    %2717 = vmatpush2.msra.mxu0 0.0
    %2718 = vmatprep.subr.mxu0 0.0
    %2719 = vmatpush2.msra.mxu0 0.0
    %2720 = vmatprep.subr.mxu0 0.0
    %2721 = vmatpush2.msra.mxu0 0.0
    %2722 = vmatprep.subr.mxu0 0.0
    %2723 = vmatpush2.msra.mxu0 0.0
    %2724 = vmatprep.subr.mxu0 0.0
    %2725 = vmatpush2.msra.mxu0 0.0
    %2726 = vmatprep.subr.mxu0 0.0
    %2727 = vmatpush2.msra.mxu0 0.0
    %2728 = vmatprep.subr.mxu0 0.0
    %2729 = vmatpush2.msra.mxu0 0.0
    %2730 = vmatprep.mubr.f32.mxu0 0.0
    %2731 = vmatmul.mubr.f32.gmra.mxu0 %v2661
    %v2732 = vpop.f32.mrf.mxu0
    %v2733 = vadd.f32 0.0, %v2732
    %v2734 = vpop.f32.mrf.mxu0
    %2735 = vmatprep.mubr.f32.mxu0 0.0
    %2736 = vmatmul.mubr.f32.gmra.mxu0 %v2664
    %v2737 = vpop.f32.mrf.mxu0
    %v2738 = vadd.f32 0.0, %v2737
    %v2739 = vpop.f32.mrf.mxu0
    %2740 = vdwg.mxu0
    %v2742 = vsel %vm2047, %v2197, 0
    %v2745 = vsel %vm2047, %v2199, 0
    %2747 = vmatprep.subr.mxu0 0.0
    %2748 = vmatpush1.msra.mxu0 0.0
    %2749 = vmatprep.subr.mxu0 0.0
    %2750 = vmatpush1.msra.mxu0 0.0
    %2751 = vmatprep.subr.mxu0 0.0
    %2752 = vmatpush1.msra.mxu0 0.0
    %2753 = vmatprep.subr.mxu0 0.0
    %2754 = vmatpush1.msra.mxu0 0.0
    %2755 = vmatprep.subr.mxu0 0.0
    %2756 = vmatpush1.msra.mxu0 0.0
    %2757 = vmatprep.subr.mxu0 0.0
    %2758 = vmatpush1.msra.mxu0 0.0
    %2759 = vmatprep.subr.mxu0 0.0
    %2760 = vmatpush1.msra.mxu0 0.0
    %2761 = vmatprep.subr.mxu0 0.0
    %2762 = vmatpush1.msra.mxu0 0.0
    %2763 = vmatprep.subr.mxu0 0.0
    %2764 = vmatpush1.msra.mxu0 0.0
    %2765 = vmatprep.subr.mxu0 0.0
    %2766 = vmatpush1.msra.mxu0 0.0
    %2767 = vmatprep.subr.mxu0 0.0
    %2768 = vmatpush1.msra.mxu0 0.0
    %2769 = vmatprep.subr.mxu0 0.0
    %2770 = vmatpush1.msra.mxu0 0.0
    %2771 = vmatprep.subr.mxu0 0.0
    %2772 = vmatpush1.msra.mxu0 0.0
    %2773 = vmatprep.subr.mxu0 0.0
    %2774 = vmatpush1.msra.mxu0 0.0
    %2775 = vmatprep.subr.mxu0 0.0
    %2776 = vmatpush1.msra.mxu0 %v663
    %2777 = vmatprep.subr.mxu0 0.0
    %2778 = vmatpush1.msra.mxu0 %v661
    %2779 = vmatprep.subr.mxu0 0.0
    %2780 = vmatpush2.msra.mxu0 0.0
    %2781 = vmatprep.subr.mxu0 0.0
    %2782 = vmatpush2.msra.mxu0 0.0
    %2783 = vmatprep.subr.mxu0 0.0
    %2784 = vmatpush2.msra.mxu0 0.0
    %2785 = vmatprep.subr.mxu0 0.0
    %2786 = vmatpush2.msra.mxu0 0.0
    %2787 = vmatprep.subr.mxu0 0.0
    %2788 = vmatpush2.msra.mxu0 0.0
    %2789 = vmatprep.subr.mxu0 0.0
    %2790 = vmatpush2.msra.mxu0 0.0
    %2791 = vmatprep.subr.mxu0 0.0
    %2792 = vmatpush2.msra.mxu0 0.0
    %2793 = vmatprep.subr.mxu0 0.0
    %2794 = vmatpush2.msra.mxu0 0.0
    %2795 = vmatprep.subr.mxu0 0.0
    %2796 = vmatpush2.msra.mxu0 0.0
    %2797 = vmatprep.subr.mxu0 0.0
    %2798 = vmatpush2.msra.mxu0 0.0
    %2799 = vmatprep.subr.mxu0 0.0
    %2800 = vmatpush2.msra.mxu0 0.0
    %2801 = vmatprep.subr.mxu0 0.0
    %2802 = vmatpush2.msra.mxu0 0.0
    %2803 = vmatprep.subr.mxu0 0.0
    %2804 = vmatpush2.msra.mxu0 0.0
    %2805 = vmatprep.subr.mxu0 0.0
    %2806 = vmatpush2.msra.mxu0 0.0
    %2807 = vmatprep.subr.mxu0 0.0
    %2808 = vmatpush2.msra.mxu0 0.0
    %2809 = vmatprep.subr.mxu0 0.0
    %2810 = vmatpush2.msra.mxu0 0.0
    %2811 = vmatprep.mubr.f32.mxu0 0.0
    %2812 = vmatmul.mubr.f32.gmra.mxu0 %v2742
    %v2813 = vpop.f32.mrf.mxu0
    %v2814 = vadd.f32 0.0, %v2813
    %v2815 = vpop.f32.mrf.mxu0
    %2816 = vmatprep.mubr.f32.mxu0 0.0
    %2817 = vmatmul.mubr.f32.gmra.mxu0 %v2745
    %v2818 = vpop.f32.mrf.mxu0
    %v2819 = vadd.f32 0.0, %v2818
    %v2820 = vpop.f32.mrf.mxu0
    %2821 = vdwg.mxu0
    %v2823 = vsel %vm2047, %v2201, 0
    %v2826 = vsel %vm2047, %v2203, 0
    %2828 = vmatprep.subr.mxu0 0.0
    %2829 = vmatpush1.msra.mxu0 0.0
    %2830 = vmatprep.subr.mxu0 0.0
    %2831 = vmatpush1.msra.mxu0 0.0
    %2832 = vmatprep.subr.mxu0 0.0
    %2833 = vmatpush1.msra.mxu0 0.0
    %2834 = vmatprep.subr.mxu0 0.0
    %2835 = vmatpush1.msra.mxu0 0.0
    %2836 = vmatprep.subr.mxu0 0.0
    %2837 = vmatpush1.msra.mxu0 0.0
    %2838 = vmatprep.subr.mxu0 0.0
    %2839 = vmatpush1.msra.mxu0 0.0
    %2840 = vmatprep.subr.mxu0 0.0
    %2841 = vmatpush1.msra.mxu0 0.0
    %2842 = vmatprep.subr.mxu0 0.0
    %2843 = vmatpush1.msra.mxu0 0.0
    %2844 = vmatprep.subr.mxu0 0.0
    %2845 = vmatpush1.msra.mxu0 0.0
    %2846 = vmatprep.subr.mxu0 0.0
    %2847 = vmatpush1.msra.mxu0 0.0
    %2848 = vmatprep.subr.mxu0 0.0
    %2849 = vmatpush1.msra.mxu0 0.0
    %2850 = vmatprep.subr.mxu0 0.0
    %2851 = vmatpush1.msra.mxu0 0.0
    %2852 = vmatprep.subr.mxu0 0.0
    %2853 = vmatpush1.msra.mxu0 0.0
    %2854 = vmatprep.subr.mxu0 0.0
    %2855 = vmatpush1.msra.mxu0 0.0
    %2856 = vmatprep.subr.mxu0 0.0
    %2857 = vmatpush1.msra.mxu0 %v669
    %2858 = vmatprep.subr.mxu0 0.0
    %2859 = vmatpush1.msra.mxu0 %v667
    %2860 = vmatprep.subr.mxu0 0.0
    %2861 = vmatpush2.msra.mxu0 0.0
    %2862 = vmatprep.subr.mxu0 0.0
    %2863 = vmatpush2.msra.mxu0 0.0
    %2864 = vmatprep.subr.mxu0 0.0
    %2865 = vmatpush2.msra.mxu0 0.0
    %2866 = vmatprep.subr.mxu0 0.0
    %2867 = vmatpush2.msra.mxu0 0.0
    %2868 = vmatprep.subr.mxu0 0.0
    %2869 = vmatpush2.msra.mxu0 0.0
    %2870 = vmatprep.subr.mxu0 0.0
    %2871 = vmatpush2.msra.mxu0 0.0
    %2872 = vmatprep.subr.mxu0 0.0
    %2873 = vmatpush2.msra.mxu0 0.0
    %2874 = vmatprep.subr.mxu0 0.0
    %2875 = vmatpush2.msra.mxu0 0.0
    %2876 = vmatprep.subr.mxu0 0.0
    %2877 = vmatpush2.msra.mxu0 0.0
    %2878 = vmatprep.subr.mxu0 0.0
    %2879 = vmatpush2.msra.mxu0 0.0
    %2880 = vmatprep.subr.mxu0 0.0
    %2881 = vmatpush2.msra.mxu0 0.0
    %2882 = vmatprep.subr.mxu0 0.0
    %2883 = vmatpush2.msra.mxu0 0.0
    %2884 = vmatprep.subr.mxu0 0.0
    %2885 = vmatpush2.msra.mxu0 0.0
    %2886 = vmatprep.subr.mxu0 0.0
    %2887 = vmatpush2.msra.mxu0 0.0
    %2888 = vmatprep.subr.mxu0 0.0
    %2889 = vmatpush2.msra.mxu0 0.0
    %2890 = vmatprep.subr.mxu0 0.0
    %2891 = vmatpush2.msra.mxu0 0.0
    %2892 = vmatprep.mubr.f32.mxu0 0.0
    %2893 = vmatmul.mubr.f32.gmra.mxu0 %v2823
    %v2894 = vpop.f32.mrf.mxu0
    %v2895 = vadd.f32 0.0, %v2894
    %v2896 = vpop.f32.mrf.mxu0
    %2897 = vmatprep.mubr.f32.mxu0 0.0
    %2898 = vmatmul.mubr.f32.gmra.mxu0 %v2826
    %v2899 = vpop.f32.mrf.mxu0
    %v2900 = vadd.f32 0.0, %v2899
    %v2901 = vpop.f32.mrf.mxu0
    %2902 = vdwg.mxu0
    %v2904 = vsel %vm2047, %v2205, 0
    %v2907 = vsel %vm2047, %v2207, 0
    %2909 = vmatprep.subr.mxu0 0.0
    %2910 = vmatpush1.msra.mxu0 0.0
    %2911 = vmatprep.subr.mxu0 0.0
    %2912 = vmatpush1.msra.mxu0 0.0
    %2913 = vmatprep.subr.mxu0 0.0
    %2914 = vmatpush1.msra.mxu0 0.0
    %2915 = vmatprep.subr.mxu0 0.0
    %2916 = vmatpush1.msra.mxu0 0.0
    %2917 = vmatprep.subr.mxu0 0.0
    %2918 = vmatpush1.msra.mxu0 0.0
    %2919 = vmatprep.subr.mxu0 0.0
    %2920 = vmatpush1.msra.mxu0 0.0
    %2921 = vmatprep.subr.mxu0 0.0
    %2922 = vmatpush1.msra.mxu0 0.0
    %2923 = vmatprep.subr.mxu0 0.0
    %2924 = vmatpush1.msra.mxu0 0.0
    %2925 = vmatprep.subr.mxu0 0.0
    %2926 = vmatpush1.msra.mxu0 0.0
    %2927 = vmatprep.subr.mxu0 0.0
    %2928 = vmatpush1.msra.mxu0 0.0
    %2929 = vmatprep.subr.mxu0 0.0
    %2930 = vmatpush1.msra.mxu0 0.0
    %2931 = vmatprep.subr.mxu0 0.0
    %2932 = vmatpush1.msra.mxu0 0.0
    %2933 = vmatprep.subr.mxu0 0.0
    %2934 = vmatpush1.msra.mxu0 0.0
    %2935 = vmatprep.subr.mxu0 0.0
    %2936 = vmatpush1.msra.mxu0 0.0
    %2937 = vmatprep.subr.mxu0 0.0
    %2938 = vmatpush1.msra.mxu0 %v675
    %2939 = vmatprep.subr.mxu0 0.0
    %2940 = vmatpush1.msra.mxu0 %v673
    %2941 = vmatprep.subr.mxu0 0.0
    %2942 = vmatpush2.msra.mxu0 0.0
    %2943 = vmatprep.subr.mxu0 0.0
    %2944 = vmatpush2.msra.mxu0 0.0
    %2945 = vmatprep.subr.mxu0 0.0
    %2946 = vmatpush2.msra.mxu0 0.0
    %2947 = vmatprep.subr.mxu0 0.0
    %2948 = vmatpush2.msra.mxu0 0.0
    %2949 = vmatprep.subr.mxu0 0.0
    %2950 = vmatpush2.msra.mxu0 0.0
    %2951 = vmatprep.subr.mxu0 0.0
    %2952 = vmatpush2.msra.mxu0 0.0
    %2953 = vmatprep.subr.mxu0 0.0
    %2954 = vmatpush2.msra.mxu0 0.0
    %2955 = vmatprep.subr.mxu0 0.0
    %2956 = vmatpush2.msra.mxu0 0.0
    %2957 = vmatprep.subr.mxu0 0.0
    %2958 = vmatpush2.msra.mxu0 0.0
    %2959 = vmatprep.subr.mxu0 0.0
    %2960 = vmatpush2.msra.mxu0 0.0
    %2961 = vmatprep.subr.mxu0 0.0
    %2962 = vmatpush2.msra.mxu0 0.0
    %2963 = vmatprep.subr.mxu0 0.0
    %2964 = vmatpush2.msra.mxu0 0.0
    %2965 = vmatprep.subr.mxu0 0.0
    %2966 = vmatpush2.msra.mxu0 0.0
    %2967 = vmatprep.subr.mxu0 0.0
    %2968 = vmatpush2.msra.mxu0 0.0
    %2969 = vmatprep.subr.mxu0 0.0
    %2970 = vmatpush2.msra.mxu0 0.0
    %2971 = vmatprep.subr.mxu0 0.0
    %2972 = vmatpush2.msra.mxu0 0.0
    %2973 = vmatprep.mubr.f32.mxu0 0.0
    %2974 = vmatmul.mubr.f32.gmra.mxu0 %v2904
    %v2975 = vpop.f32.mrf.mxu0
    %v2976 = vadd.f32 0.0, %v2975
    %v2977 = vpop.f32.mrf.mxu0
    %2978 = vmatprep.mubr.f32.mxu0 0.0
    %2979 = vmatmul.mubr.f32.gmra.mxu0 %v2907
    %v2980 = vpop.f32.mrf.mxu0
    %v2981 = vadd.f32 0.0, %v2980
    %v2982 = vpop.f32.mrf.mxu0
    %2983 = vdwg.mxu0
    %v2985 = vsel %vm2047, %v2209, 0
    %v2988 = vsel %vm2047, %v2211, 0
    %2990 = vmatprep.subr.mxu0 0.0
    %2991 = vmatpush1.msra.mxu0 0.0
    %2992 = vmatprep.subr.mxu0 0.0
    %2993 = vmatpush1.msra.mxu0 0.0
    %2994 = vmatprep.subr.mxu0 0.0
    %2995 = vmatpush1.msra.mxu0 0.0
    %2996 = vmatprep.subr.mxu0 0.0
    %2997 = vmatpush1.msra.mxu0 0.0
    %2998 = vmatprep.subr.mxu0 0.0
    %2999 = vmatpush1.msra.mxu0 0.0
    %3000 = vmatprep.subr.mxu0 0.0
    %3001 = vmatpush1.msra.mxu0 0.0
    %3002 = vmatprep.subr.mxu0 0.0
    %3003 = vmatpush1.msra.mxu0 0.0
    %3004 = vmatprep.subr.mxu0 0.0
    %3005 = vmatpush1.msra.mxu0 0.0
    %3006 = vmatprep.subr.mxu0 0.0
    %3007 = vmatpush1.msra.mxu0 0.0
    %3008 = vmatprep.subr.mxu0 0.0
    %3009 = vmatpush1.msra.mxu0 0.0
    %3010 = vmatprep.subr.mxu0 0.0
    %3011 = vmatpush1.msra.mxu0 0.0
    %3012 = vmatprep.subr.mxu0 0.0
    %3013 = vmatpush1.msra.mxu0 0.0
    %3014 = vmatprep.subr.mxu0 0.0
    %3015 = vmatpush1.msra.mxu0 0.0
    %3016 = vmatprep.subr.mxu0 0.0
    %3017 = vmatpush1.msra.mxu0 0.0
    %3018 = vmatprep.subr.mxu0 0.0
    %3019 = vmatpush1.msra.mxu0 %v522
    %3020 = vmatprep.subr.mxu0 0.0
    %3021 = vmatpush1.msra.mxu0 %v516
    %3022 = vmatprep.subr.mxu0 0.0
    %3023 = vmatpush2.msra.mxu0 0.0
    %3024 = vmatprep.subr.mxu0 0.0
    %3025 = vmatpush2.msra.mxu0 0.0
    %3026 = vmatprep.subr.mxu0 0.0
    %3027 = vmatpush2.msra.mxu0 0.0
    %3028 = vmatprep.subr.mxu0 0.0
    %3029 = vmatpush2.msra.mxu0 0.0
    %3030 = vmatprep.subr.mxu0 0.0
    %3031 = vmatpush2.msra.mxu0 0.0
    %3032 = vmatprep.subr.mxu0 0.0
    %3033 = vmatpush2.msra.mxu0 0.0
    %3034 = vmatprep.subr.mxu0 0.0
    %3035 = vmatpush2.msra.mxu0 0.0
    %3036 = vmatprep.subr.mxu0 0.0
    %3037 = vmatpush2.msra.mxu0 0.0
    %3038 = vmatprep.subr.mxu0 0.0
    %3039 = vmatpush2.msra.mxu0 0.0
    %3040 = vmatprep.subr.mxu0 0.0
    %3041 = vmatpush2.msra.mxu0 0.0
    %3042 = vmatprep.subr.mxu0 0.0
    %3043 = vmatpush2.msra.mxu0 0.0
    %3044 = vmatprep.subr.mxu0 0.0
    %3045 = vmatpush2.msra.mxu0 0.0
    %3046 = vmatprep.subr.mxu0 0.0
    %3047 = vmatpush2.msra.mxu0 0.0
    %3048 = vmatprep.subr.mxu0 0.0
    %3049 = vmatpush2.msra.mxu0 0.0
    %3050 = vmatprep.subr.mxu0 0.0
    %3051 = vmatpush2.msra.mxu0 0.0
    %3052 = vmatprep.subr.mxu0 0.0
    %3053 = vmatpush2.msra.mxu0 0.0
    %3054 = vmatprep.mubr.f32.mxu0 0.0
    %3055 = vmatmul.mubr.f32.gmra.mxu0 %v2985
    %v3056 = vpop.f32.mrf.mxu0
    %v3057 = vadd.f32 0.0, %v3056
    %v3058 = vpop.f32.mrf.mxu0
    %3059 = vmatprep.mubr.f32.mxu0 0.0
    %3060 = vmatmul.mubr.f32.gmra.mxu0 %v2988
    %v3061 = vpop.f32.mrf.mxu0
    %v3062 = vadd.f32 0.0, %v3061
    %v3063 = vpop.f32.mrf.mxu0
    %3064 = vdwg.mxu0
    %v3066 = vsel %vm2047, %v2213, 0
    %v3069 = vsel %vm2047, %v2215, 0
    %3071 = vmatprep.subr.mxu0 0.0
    %3072 = vmatpush1.msra.mxu0 0.0
    %3073 = vmatprep.subr.mxu0 0.0
    %3074 = vmatpush1.msra.mxu0 0.0
    %3075 = vmatprep.subr.mxu0 0.0
    %3076 = vmatpush1.msra.mxu0 0.0
    %3077 = vmatprep.subr.mxu0 0.0
    %3078 = vmatpush1.msra.mxu0 0.0
    %3079 = vmatprep.subr.mxu0 0.0
    %3080 = vmatpush1.msra.mxu0 0.0
    %3081 = vmatprep.subr.mxu0 0.0
    %3082 = vmatpush1.msra.mxu0 0.0
    %3083 = vmatprep.subr.mxu0 0.0
    %3084 = vmatpush1.msra.mxu0 0.0
    %3085 = vmatprep.subr.mxu0 0.0
    %3086 = vmatpush1.msra.mxu0 0.0
    %3087 = vmatprep.subr.mxu0 0.0
    %3088 = vmatpush1.msra.mxu0 0.0
    %3089 = vmatprep.subr.mxu0 0.0
    %3090 = vmatpush1.msra.mxu0 0.0
    %3091 = vmatprep.subr.mxu0 0.0
    %3092 = vmatpush1.msra.mxu0 0.0
    %3093 = vmatprep.subr.mxu0 0.0
    %3094 = vmatpush1.msra.mxu0 0.0
    %3095 = vmatprep.subr.mxu0 0.0
    %3096 = vmatpush1.msra.mxu0 0.0
    %3097 = vmatprep.subr.mxu0 0.0
    %3098 = vmatpush1.msra.mxu0 0.0
    %3099 = vmatprep.subr.mxu0 0.0
    %3100 = vmatpush1.msra.mxu0 %v683
    %3101 = vmatprep.subr.mxu0 0.0
    %3102 = vmatpush1.msra.mxu0 %v681
    %3103 = vmatprep.subr.mxu0 0.0
    %3104 = vmatpush2.msra.mxu0 0.0
    %3105 = vmatprep.subr.mxu0 0.0
    %3106 = vmatpush2.msra.mxu0 0.0
    %3107 = vmatprep.subr.mxu0 0.0
    %3108 = vmatpush2.msra.mxu0 0.0
    %3109 = vmatprep.subr.mxu0 0.0
    %3110 = vmatpush2.msra.mxu0 0.0
    %3111 = vmatprep.subr.mxu0 0.0
    %3112 = vmatpush2.msra.mxu0 0.0
    %3113 = vmatprep.subr.mxu0 0.0
    %3114 = vmatpush2.msra.mxu0 0.0
    %3115 = vmatprep.subr.mxu0 0.0
    %3116 = vmatpush2.msra.mxu0 0.0
    %3117 = vmatprep.subr.mxu0 0.0
    %3118 = vmatpush2.msra.mxu0 0.0
    %3119 = vmatprep.subr.mxu0 0.0
    %3120 = vmatpush2.msra.mxu0 0.0
    %3121 = vmatprep.subr.mxu0 0.0
    %3122 = vmatpush2.msra.mxu0 0.0
    %3123 = vmatprep.subr.mxu0 0.0
    %3124 = vmatpush2.msra.mxu0 0.0
    %3125 = vmatprep.subr.mxu0 0.0
    %3126 = vmatpush2.msra.mxu0 0.0
    %3127 = vmatprep.subr.mxu0 0.0
    %3128 = vmatpush2.msra.mxu0 0.0
    %3129 = vmatprep.subr.mxu0 0.0
    %3130 = vmatpush2.msra.mxu0 0.0
    %3131 = vmatprep.subr.mxu0 0.0
    %3132 = vmatpush2.msra.mxu0 0.0
    %3133 = vmatprep.subr.mxu0 0.0
    %3134 = vmatpush2.msra.mxu0 0.0
    %3135 = vmatprep.mubr.f32.mxu0 0.0
    %3136 = vmatmul.mubr.f32.gmra.mxu0 %v3066
    %v3137 = vpop.f32.mrf.mxu0
    %v3138 = vadd.f32 0.0, %v3137
    %v3139 = vpop.f32.mrf.mxu0
    %3140 = vmatprep.mubr.f32.mxu0 0.0
    %3141 = vmatmul.mubr.f32.gmra.mxu0 %v3069
    %v3142 = vpop.f32.mrf.mxu0
    %v3143 = vadd.f32 0.0, %v3142
    %v3144 = vpop.f32.mrf.mxu0
    %3145 = vdwg.mxu0
    %v3147 = vsel %vm2047, %v2217, 0
    %v3150 = vsel %vm2047, %v2219, 0
    %3152 = vmatprep.subr.mxu0 0.0
    %3153 = vmatpush1.msra.mxu0 0.0
    %3154 = vmatprep.subr.mxu0 0.0
    %3155 = vmatpush1.msra.mxu0 0.0
    %3156 = vmatprep.subr.mxu0 0.0
    %3157 = vmatpush1.msra.mxu0 0.0
    %3158 = vmatprep.subr.mxu0 0.0
    %3159 = vmatpush1.msra.mxu0 0.0
    %3160 = vmatprep.subr.mxu0 0.0
    %3161 = vmatpush1.msra.mxu0 0.0
    %3162 = vmatprep.subr.mxu0 0.0
    %3163 = vmatpush1.msra.mxu0 0.0
    %3164 = vmatprep.subr.mxu0 0.0
    %3165 = vmatpush1.msra.mxu0 0.0
    %3166 = vmatprep.subr.mxu0 0.0
    %3167 = vmatpush1.msra.mxu0 0.0
    %3168 = vmatprep.subr.mxu0 0.0
    %3169 = vmatpush1.msra.mxu0 0.0
    %3170 = vmatprep.subr.mxu0 0.0
    %3171 = vmatpush1.msra.mxu0 0.0
    %3172 = vmatprep.subr.mxu0 0.0
    %3173 = vmatpush1.msra.mxu0 0.0
    %3174 = vmatprep.subr.mxu0 0.0
    %3175 = vmatpush1.msra.mxu0 0.0
    %3176 = vmatprep.subr.mxu0 0.0
    %3177 = vmatpush1.msra.mxu0 0.0
    %3178 = vmatprep.subr.mxu0 0.0
    %3179 = vmatpush1.msra.mxu0 0.0
    %3180 = vmatprep.subr.mxu0 0.0
    %3181 = vmatpush1.msra.mxu0 %v689
    %3182 = vmatprep.subr.mxu0 0.0
    %3183 = vmatpush1.msra.mxu0 %v687
    %3184 = vmatprep.subr.mxu0 0.0
    %3185 = vmatpush2.msra.mxu0 0.0
    %3186 = vmatprep.subr.mxu0 0.0
    %3187 = vmatpush2.msra.mxu0 0.0
    %3188 = vmatprep.subr.mxu0 0.0
    %3189 = vmatpush2.msra.mxu0 0.0
    %3190 = vmatprep.subr.mxu0 0.0
    %3191 = vmatpush2.msra.mxu0 0.0
    %3192 = vmatprep.subr.mxu0 0.0
    %3193 = vmatpush2.msra.mxu0 0.0
    %3194 = vmatprep.subr.mxu0 0.0
    %3195 = vmatpush2.msra.mxu0 0.0
    %3196 = vmatprep.subr.mxu0 0.0
    %3197 = vmatpush2.msra.mxu0 0.0
    %3198 = vmatprep.subr.mxu0 0.0
    %3199 = vmatpush2.msra.mxu0 0.0
    %3200 = vmatprep.subr.mxu0 0.0
    %3201 = vmatpush2.msra.mxu0 0.0
    %3202 = vmatprep.subr.mxu0 0.0
    %3203 = vmatpush2.msra.mxu0 0.0
    %3204 = vmatprep.subr.mxu0 0.0
    %3205 = vmatpush2.msra.mxu0 0.0
    %3206 = vmatprep.subr.mxu0 0.0
    %3207 = vmatpush2.msra.mxu0 0.0
    %3208 = vmatprep.subr.mxu0 0.0
    %3209 = vmatpush2.msra.mxu0 0.0
    %3210 = vmatprep.subr.mxu0 0.0
    %3211 = vmatpush2.msra.mxu0 0.0
    %3212 = vmatprep.subr.mxu0 0.0
    %3213 = vmatpush2.msra.mxu0 0.0
    %3214 = vmatprep.subr.mxu0 0.0
    %3215 = vmatpush2.msra.mxu0 0.0
    %3216 = vmatprep.mubr.f32.mxu0 0.0
    %3217 = vmatmul.mubr.f32.gmra.mxu0 %v3147
    %v3218 = vpop.f32.mrf.mxu0
    %v3219 = vadd.f32 0.0, %v3218
    %v3220 = vpop.f32.mrf.mxu0
    %3221 = vmatprep.mubr.f32.mxu0 0.0
    %3222 = vmatmul.mubr.f32.gmra.mxu0 %v3150
    %v3223 = vpop.f32.mrf.mxu0
    %v3224 = vadd.f32 0.0, %v3223
    %v3225 = vpop.f32.mrf.mxu0
    %3226 = vdwg.mxu0
    %v3228 = vsel %vm2047, %v2221, 0
    %v3231 = vsel %vm2047, %v2223, 0
    %3233 = vmatprep.subr.mxu0 0.0
    %3234 = vmatpush1.msra.mxu0 0.0
    %3235 = vmatprep.subr.mxu0 0.0
    %3236 = vmatpush1.msra.mxu0 0.0
    %3237 = vmatprep.subr.mxu0 0.0
    %3238 = vmatpush1.msra.mxu0 0.0
    %3239 = vmatprep.subr.mxu0 0.0
    %3240 = vmatpush1.msra.mxu0 0.0
    %3241 = vmatprep.subr.mxu0 0.0
    %3242 = vmatpush1.msra.mxu0 0.0
    %3243 = vmatprep.subr.mxu0 0.0
    %3244 = vmatpush1.msra.mxu0 0.0
    %3245 = vmatprep.subr.mxu0 0.0
    %3246 = vmatpush1.msra.mxu0 0.0
    %3247 = vmatprep.subr.mxu0 0.0
    %3248 = vmatpush1.msra.mxu0 0.0
    %3249 = vmatprep.subr.mxu0 0.0
    %3250 = vmatpush1.msra.mxu0 0.0
    %3251 = vmatprep.subr.mxu0 0.0
    %3252 = vmatpush1.msra.mxu0 0.0
    %3253 = vmatprep.subr.mxu0 0.0
    %3254 = vmatpush1.msra.mxu0 0.0
    %3255 = vmatprep.subr.mxu0 0.0
    %3256 = vmatpush1.msra.mxu0 0.0
    %3257 = vmatprep.subr.mxu0 0.0
    %3258 = vmatpush1.msra.mxu0 0.0
    %3259 = vmatprep.subr.mxu0 0.0
    %3260 = vmatpush1.msra.mxu0 0.0
    %3261 = vmatprep.subr.mxu0 0.0
    %3262 = vmatpush1.msra.mxu0 %v695
    %3263 = vmatprep.subr.mxu0 0.0
    %3264 = vmatpush1.msra.mxu0 %v693
    %3265 = vmatprep.subr.mxu0 0.0
    %3266 = vmatpush2.msra.mxu0 0.0
    %3267 = vmatprep.subr.mxu0 0.0
    %3268 = vmatpush2.msra.mxu0 0.0
    %3269 = vmatprep.subr.mxu0 0.0
    %3270 = vmatpush2.msra.mxu0 0.0
    %3271 = vmatprep.subr.mxu0 0.0
    %3272 = vmatpush2.msra.mxu0 0.0
    %3273 = vmatprep.subr.mxu0 0.0
    %3274 = vmatpush2.msra.mxu0 0.0
    %3275 = vmatprep.subr.mxu0 0.0
    %3276 = vmatpush2.msra.mxu0 0.0
    %3277 = vmatprep.subr.mxu0 0.0
    %3278 = vmatpush2.msra.mxu0 0.0
    %3279 = vmatprep.subr.mxu0 0.0
    %3280 = vmatpush2.msra.mxu0 0.0
    %3281 = vmatprep.subr.mxu0 0.0
    %3282 = vmatpush2.msra.mxu0 0.0
    %3283 = vmatprep.subr.mxu0 0.0
    %3284 = vmatpush2.msra.mxu0 0.0
    %3285 = vmatprep.subr.mxu0 0.0
    %3286 = vmatpush2.msra.mxu0 0.0
    %3287 = vmatprep.subr.mxu0 0.0
    %3288 = vmatpush2.msra.mxu0 0.0
    %3289 = vmatprep.subr.mxu0 0.0
    %3290 = vmatpush2.msra.mxu0 0.0
    %3291 = vmatprep.subr.mxu0 0.0
    %3292 = vmatpush2.msra.mxu0 0.0
    %3293 = vmatprep.subr.mxu0 0.0
    %3294 = vmatpush2.msra.mxu0 0.0
    %3295 = vmatprep.subr.mxu0 0.0
    %3296 = vmatpush2.msra.mxu0 0.0
    %3297 = vmatprep.mubr.f32.mxu0 0.0
    %3298 = vmatmul.mubr.f32.gmra.mxu0 %v3228
    %v3299 = vpop.f32.mrf.mxu0
    %v3300 = vadd.f32 0.0, %v3299
    %v3301 = vpop.f32.mrf.mxu0
    %3302 = vmatprep.mubr.f32.mxu0 0.0
    %3303 = vmatmul.mubr.f32.gmra.mxu0 %v3231
    %v3304 = vpop.f32.mrf.mxu0
    %v3305 = vadd.f32 0.0, %v3304
    %v3306 = vpop.f32.mrf.mxu0
    %3307 = vdwg.mxu0
    %v3309 = vsel %vm2047, %v2225, 0
    %v3312 = vsel %vm2047, %v2227, 0
    %3314 = vmatprep.subr.mxu0 0.0
    %3315 = vmatpush1.msra.mxu0 0.0
    %3316 = vmatprep.subr.mxu0 0.0
    %3317 = vmatpush1.msra.mxu0 0.0
    %3318 = vmatprep.subr.mxu0 0.0
    %3319 = vmatpush1.msra.mxu0 0.0
    %3320 = vmatprep.subr.mxu0 0.0
    %3321 = vmatpush1.msra.mxu0 0.0
    %3322 = vmatprep.subr.mxu0 0.0
    %3323 = vmatpush1.msra.mxu0 0.0
    %3324 = vmatprep.subr.mxu0 0.0
    %3325 = vmatpush1.msra.mxu0 0.0
    %3326 = vmatprep.subr.mxu0 0.0
    %3327 = vmatpush1.msra.mxu0 0.0
    %3328 = vmatprep.subr.mxu0 0.0
    %3329 = vmatpush1.msra.mxu0 0.0
    %3330 = vmatprep.subr.mxu0 0.0
    %3331 = vmatpush1.msra.mxu0 0.0
    %3332 = vmatprep.subr.mxu0 0.0
    %3333 = vmatpush1.msra.mxu0 0.0
    %3334 = vmatprep.subr.mxu0 0.0
    %3335 = vmatpush1.msra.mxu0 0.0
    %3336 = vmatprep.subr.mxu0 0.0
    %3337 = vmatpush1.msra.mxu0 0.0
    %3338 = vmatprep.subr.mxu0 0.0
    %3339 = vmatpush1.msra.mxu0 0.0
    %3340 = vmatprep.subr.mxu0 0.0
    %3341 = vmatpush1.msra.mxu0 0.0
    %3342 = vmatprep.subr.mxu0 0.0
    %3343 = vmatpush1.msra.mxu0 %v524
    %3344 = vmatprep.subr.mxu0 0.0
    %3345 = vmatpush1.msra.mxu0 %v518
    %3346 = vmatprep.subr.mxu0 0.0
    %3347 = vmatpush2.msra.mxu0 0.0
    %3348 = vmatprep.subr.mxu0 0.0
    %3349 = vmatpush2.msra.mxu0 0.0
    %3350 = vmatprep.subr.mxu0 0.0
    %3351 = vmatpush2.msra.mxu0 0.0
    %3352 = vmatprep.subr.mxu0 0.0
    %3353 = vmatpush2.msra.mxu0 0.0
    %3354 = vmatprep.subr.mxu0 0.0
    %3355 = vmatpush2.msra.mxu0 0.0
    %3356 = vmatprep.subr.mxu0 0.0
    %3357 = vmatpush2.msra.mxu0 0.0
    %3358 = vmatprep.subr.mxu0 0.0
    %3359 = vmatpush2.msra.mxu0 0.0
    %3360 = vmatprep.subr.mxu0 0.0
    %3361 = vmatpush2.msra.mxu0 0.0
    %3362 = vmatprep.subr.mxu0 0.0
    %3363 = vmatpush2.msra.mxu0 0.0
    %3364 = vmatprep.subr.mxu0 0.0
    %3365 = vmatpush2.msra.mxu0 0.0
    %3366 = vmatprep.subr.mxu0 0.0
    %3367 = vmatpush2.msra.mxu0 0.0
    %3368 = vmatprep.subr.mxu0 0.0
    %3369 = vmatpush2.msra.mxu0 0.0
    %3370 = vmatprep.subr.mxu0 0.0
    %3371 = vmatpush2.msra.mxu0 0.0
    %3372 = vmatprep.subr.mxu0 0.0
    %3373 = vmatpush2.msra.mxu0 0.0
    %3374 = vmatprep.subr.mxu0 0.0
    %3375 = vmatpush2.msra.mxu0 0.0
    %3376 = vmatprep.subr.mxu0 0.0
    %3377 = vmatpush2.msra.mxu0 0.0
    %3378 = vmatprep.mubr.f32.mxu0 0.0
    %3379 = vmatmul.mubr.f32.gmra.mxu0 %v3309
    %v3380 = vpop.f32.mrf.mxu0
    %v3381 = vadd.f32 0.0, %v3380
    %v3382 = vpop.f32.mrf.mxu0
    %3383 = vmatprep.mubr.f32.mxu0 0.0
    %3384 = vmatmul.mubr.f32.gmra.mxu0 %v3312
    %v3385 = vpop.f32.mrf.mxu0
    %v3386 = vadd.f32 0.0, %v3385
    %v3387 = vpop.f32.mrf.mxu0
    %3388 = vdwg.mxu0
    %v3390 = vsel %vm2047, %v2229, 0
    %v3393 = vsel %vm2047, %v2231, 0
    %3395 = vmatprep.subr.mxu0 0.0
    %3396 = vmatpush1.msra.mxu0 0.0
    %3397 = vmatprep.subr.mxu0 0.0
    %3398 = vmatpush1.msra.mxu0 0.0
    %3399 = vmatprep.subr.mxu0 0.0
    %3400 = vmatpush1.msra.mxu0 0.0
    %3401 = vmatprep.subr.mxu0 0.0
    %3402 = vmatpush1.msra.mxu0 0.0
    %3403 = vmatprep.subr.mxu0 0.0
    %3404 = vmatpush1.msra.mxu0 0.0
    %3405 = vmatprep.subr.mxu0 0.0
    %3406 = vmatpush1.msra.mxu0 0.0
    %3407 = vmatprep.subr.mxu0 0.0
    %3408 = vmatpush1.msra.mxu0 0.0
    %3409 = vmatprep.subr.mxu0 0.0
    %3410 = vmatpush1.msra.mxu0 0.0
    %3411 = vmatprep.subr.mxu0 0.0
    %3412 = vmatpush1.msra.mxu0 0.0
    %3413 = vmatprep.subr.mxu0 0.0
    %3414 = vmatpush1.msra.mxu0 0.0
    %3415 = vmatprep.subr.mxu0 0.0
    %3416 = vmatpush1.msra.mxu0 0.0
    %3417 = vmatprep.subr.mxu0 0.0
    %3418 = vmatpush1.msra.mxu0 0.0
    %3419 = vmatprep.subr.mxu0 0.0
    %3420 = vmatpush1.msra.mxu0 0.0
    %3421 = vmatprep.subr.mxu0 0.0
    %3422 = vmatpush1.msra.mxu0 0.0
    %3423 = vmatprep.subr.mxu0 0.0
    %3424 = vmatpush1.msra.mxu0 %v703
    %3425 = vmatprep.subr.mxu0 0.0
    %3426 = vmatpush1.msra.mxu0 %v701
    %3427 = vmatprep.subr.mxu0 0.0
    %3428 = vmatpush2.msra.mxu0 0.0
    %3429 = vmatprep.subr.mxu0 0.0
    %3430 = vmatpush2.msra.mxu0 0.0
    %3431 = vmatprep.subr.mxu0 0.0
    %3432 = vmatpush2.msra.mxu0 0.0
    %3433 = vmatprep.subr.mxu0 0.0
    %3434 = vmatpush2.msra.mxu0 0.0
    %3435 = vmatprep.subr.mxu0 0.0
    %3436 = vmatpush2.msra.mxu0 0.0
    %3437 = vmatprep.subr.mxu0 0.0
    %3438 = vmatpush2.msra.mxu0 0.0
    %3439 = vmatprep.subr.mxu0 0.0
    %3440 = vmatpush2.msra.mxu0 0.0
    %3441 = vmatprep.subr.mxu0 0.0
    %3442 = vmatpush2.msra.mxu0 0.0
    %3443 = vmatprep.subr.mxu0 0.0
    %3444 = vmatpush2.msra.mxu0 0.0
    %3445 = vmatprep.subr.mxu0 0.0
    %3446 = vmatpush2.msra.mxu0 0.0
    %3447 = vmatprep.subr.mxu0 0.0
    %3448 = vmatpush2.msra.mxu0 0.0
    %3449 = vmatprep.subr.mxu0 0.0
    %3450 = vmatpush2.msra.mxu0 0.0
    %3451 = vmatprep.subr.mxu0 0.0
    %3452 = vmatpush2.msra.mxu0 0.0
    %3453 = vmatprep.subr.mxu0 0.0
    %3454 = vmatpush2.msra.mxu0 0.0
    %3455 = vmatprep.subr.mxu0 0.0
    %3456 = vmatpush2.msra.mxu0 0.0
    %3457 = vmatprep.subr.mxu0 0.0
    %3458 = vmatpush2.msra.mxu0 0.0
    %3459 = vmatprep.mubr.f32.mxu0 0.0
    %3460 = vmatmul.mubr.f32.gmra.mxu0 %v3390
    %v3461 = vpop.f32.mrf.mxu0
    %v3462 = vadd.f32 0.0, %v3461
    %v3463 = vpop.f32.mrf.mxu0
    %3464 = vmatprep.mubr.f32.mxu0 0.0
    %3465 = vmatmul.mubr.f32.gmra.mxu0 %v3393
    %v3466 = vpop.f32.mrf.mxu0
    %v3467 = vadd.f32 0.0, %v3466
    %v3468 = vpop.f32.mrf.mxu0
    %3469 = vdwg.mxu0
    %v3471 = vsel %vm2047, %v2233, 0
    %v3474 = vsel %vm2047, %v2235, 0
    %3476 = vmatprep.subr.mxu0 0.0
    %3477 = vmatpush1.msra.mxu0 0.0
    %3478 = vmatprep.subr.mxu0 0.0
    %3479 = vmatpush1.msra.mxu0 0.0
    %3480 = vmatprep.subr.mxu0 0.0
    %3481 = vmatpush1.msra.mxu0 0.0
    %3482 = vmatprep.subr.mxu0 0.0
    %3483 = vmatpush1.msra.mxu0 0.0
    %3484 = vmatprep.subr.mxu0 0.0
    %3485 = vmatpush1.msra.mxu0 0.0
    %3486 = vmatprep.subr.mxu0 0.0
    %3487 = vmatpush1.msra.mxu0 0.0
    %3488 = vmatprep.subr.mxu0 0.0
    %3489 = vmatpush1.msra.mxu0 0.0
    %3490 = vmatprep.subr.mxu0 0.0
    %3491 = vmatpush1.msra.mxu0 0.0
    %3492 = vmatprep.subr.mxu0 0.0
    %3493 = vmatpush1.msra.mxu0 0.0
    %3494 = vmatprep.subr.mxu0 0.0
    %3495 = vmatpush1.msra.mxu0 0.0
    %3496 = vmatprep.subr.mxu0 0.0
    %3497 = vmatpush1.msra.mxu0 0.0
    %3498 = vmatprep.subr.mxu0 0.0
    %3499 = vmatpush1.msra.mxu0 0.0
    %3500 = vmatprep.subr.mxu0 0.0
    %3501 = vmatpush1.msra.mxu0 0.0
    %3502 = vmatprep.subr.mxu0 0.0
    %3503 = vmatpush1.msra.mxu0 0.0
    %3504 = vmatprep.subr.mxu0 0.0
    %3505 = vmatpush1.msra.mxu0 %v709
    %3506 = vmatprep.subr.mxu0 0.0
    %3507 = vmatpush1.msra.mxu0 %v707
    %3508 = vmatprep.subr.mxu0 0.0
    %3509 = vmatpush2.msra.mxu0 0.0
    %3510 = vmatprep.subr.mxu0 0.0
    %3511 = vmatpush2.msra.mxu0 0.0
    %3512 = vmatprep.subr.mxu0 0.0
    %3513 = vmatpush2.msra.mxu0 0.0
    %3514 = vmatprep.subr.mxu0 0.0
    %3515 = vmatpush2.msra.mxu0 0.0
    %3516 = vmatprep.subr.mxu0 0.0
    %3517 = vmatpush2.msra.mxu0 0.0
    %3518 = vmatprep.subr.mxu0 0.0
    %3519 = vmatpush2.msra.mxu0 0.0
    %3520 = vmatprep.subr.mxu0 0.0
    %3521 = vmatpush2.msra.mxu0 0.0
    %3522 = vmatprep.subr.mxu0 0.0
    %3523 = vmatpush2.msra.mxu0 0.0
    %3524 = vmatprep.subr.mxu0 0.0
    %3525 = vmatpush2.msra.mxu0 0.0
    %3526 = vmatprep.subr.mxu0 0.0
    %3527 = vmatpush2.msra.mxu0 0.0
    %3528 = vmatprep.subr.mxu0 0.0
    %3529 = vmatpush2.msra.mxu0 0.0
    %3530 = vmatprep.subr.mxu0 0.0
    %3531 = vmatpush2.msra.mxu0 0.0
    %3532 = vmatprep.subr.mxu0 0.0
    %3533 = vmatpush2.msra.mxu0 0.0
    %3534 = vmatprep.subr.mxu0 0.0
    %3535 = vmatpush2.msra.mxu0 0.0
    %3536 = vmatprep.subr.mxu0 0.0
    %3537 = vmatpush2.msra.mxu0 0.0
    %3538 = vmatprep.subr.mxu0 0.0
    %3539 = vmatpush2.msra.mxu0 0.0
    %3540 = vmatprep.mubr.f32.mxu0 0.0
    %3541 = vmatmul.mubr.f32.gmra.mxu0 %v3471
    %v3542 = vpop.f32.mrf.mxu0
    %v3543 = vadd.f32 0.0, %v3542
    %v3544 = vpop.f32.mrf.mxu0
    %3545 = vmatprep.mubr.f32.mxu0 0.0
    %3546 = vmatmul.mubr.f32.gmra.mxu0 %v3474
    %v3547 = vpop.f32.mrf.mxu0
    %v3548 = vadd.f32 0.0, %v3547
    %v3549 = vpop.f32.mrf.mxu0
    %3550 = vdwg.mxu0
    %v3552 = vsel %vm2047, %v2237, 0
    %v3555 = vsel %vm2047, %v2239, 0
    %3557 = vmatprep.subr.mxu0 0.0
    %3558 = vmatpush1.msra.mxu0 0.0
    %3559 = vmatprep.subr.mxu0 0.0
    %3560 = vmatpush1.msra.mxu0 0.0
    %3561 = vmatprep.subr.mxu0 0.0
    %3562 = vmatpush1.msra.mxu0 0.0
    %3563 = vmatprep.subr.mxu0 0.0
    %3564 = vmatpush1.msra.mxu0 0.0
    %3565 = vmatprep.subr.mxu0 0.0
    %3566 = vmatpush1.msra.mxu0 0.0
    %3567 = vmatprep.subr.mxu0 0.0
    %3568 = vmatpush1.msra.mxu0 0.0
    %3569 = vmatprep.subr.mxu0 0.0
    %3570 = vmatpush1.msra.mxu0 0.0
    %3571 = vmatprep.subr.mxu0 0.0
    %3572 = vmatpush1.msra.mxu0 0.0
    %3573 = vmatprep.subr.mxu0 0.0
    %3574 = vmatpush1.msra.mxu0 0.0
    %3575 = vmatprep.subr.mxu0 0.0
    %3576 = vmatpush1.msra.mxu0 0.0
    %3577 = vmatprep.subr.mxu0 0.0
    %3578 = vmatpush1.msra.mxu0 0.0
    %3579 = vmatprep.subr.mxu0 0.0
    %3580 = vmatpush1.msra.mxu0 0.0
    %3581 = vmatprep.subr.mxu0 0.0
    %3582 = vmatpush1.msra.mxu0 0.0
    %3583 = vmatprep.subr.mxu0 0.0
    %3584 = vmatpush1.msra.mxu0 0.0
    %3585 = vmatprep.subr.mxu0 0.0
    %3586 = vmatpush1.msra.mxu0 %v715
    %3587 = vmatprep.subr.mxu0 0.0
    %3588 = vmatpush1.msra.mxu0 %v713
    %3589 = vmatprep.subr.mxu0 0.0
    %3590 = vmatpush2.msra.mxu0 0.0
    %3591 = vmatprep.subr.mxu0 0.0
    %3592 = vmatpush2.msra.mxu0 0.0
    %3593 = vmatprep.subr.mxu0 0.0
    %3594 = vmatpush2.msra.mxu0 0.0
    %3595 = vmatprep.subr.mxu0 0.0
    %3596 = vmatpush2.msra.mxu0 0.0
    %3597 = vmatprep.subr.mxu0 0.0
    %3598 = vmatpush2.msra.mxu0 0.0
    %3599 = vmatprep.subr.mxu0 0.0
    %3600 = vmatpush2.msra.mxu0 0.0
    %3601 = vmatprep.subr.mxu0 0.0
    %3602 = vmatpush2.msra.mxu0 0.0
    %3603 = vmatprep.subr.mxu0 0.0
    %3604 = vmatpush2.msra.mxu0 0.0
    %3605 = vmatprep.subr.mxu0 0.0
    %3606 = vmatpush2.msra.mxu0 0.0
    %3607 = vmatprep.subr.mxu0 0.0
    %3608 = vmatpush2.msra.mxu0 0.0
    %3609 = vmatprep.subr.mxu0 0.0
    %3610 = vmatpush2.msra.mxu0 0.0
    %3611 = vmatprep.subr.mxu0 0.0
    %3612 = vmatpush2.msra.mxu0 0.0
    %3613 = vmatprep.subr.mxu0 0.0
    %3614 = vmatpush2.msra.mxu0 0.0
    %3615 = vmatprep.subr.mxu0 0.0
    %3616 = vmatpush2.msra.mxu0 0.0
    %3617 = vmatprep.subr.mxu0 0.0
    %3618 = vmatpush2.msra.mxu0 0.0
    %3619 = vmatprep.subr.mxu0 0.0
    %3620 = vmatpush2.msra.mxu0 0.0
    %3621 = vmatprep.mubr.f32.mxu0 0.0
    %3622 = vmatmul.mubr.f32.gmra.mxu0 %v3552
    %v3623 = vpop.f32.mrf.mxu0
    %v3624 = vadd.f32 0.0, %v3623
    %v3625 = vpop.f32.mrf.mxu0
    %3626 = vmatprep.mubr.f32.mxu0 0.0
    %3627 = vmatmul.mubr.f32.gmra.mxu0 %v3555
    %v3628 = vpop.f32.mrf.mxu0
    %v3629 = vadd.f32 0.0, %v3628
    %v3630 = vpop.f32.mrf.mxu0
    %3631 = vdwg.mxu0
    %v3632 = vrcp.pop %v2242
    %v3633 = vrcp.pop %v2245
    %v3634 = vrcp.pop %v2248
    %v3635 = vrcp.pop %v2251
    %v3636 = vrcp.pop %v2254
    %v3637 = vrcp.pop %v2257
    %v3638 = vrcp.pop %v2260
    %v3639 = vrcp.pop %v2263
    %v3640 = vrcp.pop %v2266
    %v3641 = vrcp.pop %v2269
    %v3642 = vrcp.pop %v2272
    %v3643 = vrcp.pop %v2275
    %v3644 = vrcp.pop %v2278
    %v3645 = vrcp.pop %v2281
    %v3646 = vrcp.pop %v2284
    %v3647 = vrcp.pop %v2287
    %v3648 = vrcp.pop %v2290
    %v3649 = vrcp.pop %v2293
    %v3650 = vrcp.pop %v2296
    %v3651 = vrcp.pop %v2299
    %v3652 = vrcp.pop %v2302
    %v3653 = vrcp.pop %v2305
    %v3654 = vrcp.pop %v2308
    %v3655 = vrcp.pop %v2311
    %v3656 = vrcp.pop %v2314
    %v3657 = vrcp.pop %v2317
    %v3658 = vrcp.pop %v2320
    %v3659 = vrcp.pop %v2323
    %v3660 = vrcp.pop %v2326
    %v3661 = vrcp.pop %v2329
    %v3662 = vrcp.pop %v2332
    %v3663 = vrcp.pop %v2335
    %v3664 = vmul.f32 %v2409, %v3632
    %v3665 = vmul.f32 %v2414, %v3633
    %v3666 = vmul.f32 %v2490, %v3634
    %v3667 = vmul.f32 %v2495, %v3635
    %v3668 = vmul.f32 %v2571, %v3636
    %v3669 = vmul.f32 %v2576, %v3637
    %v3670 = vmul.f32 %v2652, %v3638
    %v3671 = vmul.f32 %v2657, %v3639
    %v3672 = vmul.f32 %v2733, %v3640
    %v3673 = vmul.f32 %v2738, %v3641
    %v3674 = vmul.f32 %v2814, %v3642
    %v3675 = vmul.f32 %v2819, %v3643
    %v3676 = vmul.f32 %v2895, %v3644
    %v3677 = vmul.f32 %v2900, %v3645
    %v3678 = vmul.f32 %v2976, %v3646
    %v3679 = vmul.f32 %v2981, %v3647
    %v3680 = vmul.f32 %v3057, %v3648
    %v3681 = vmul.f32 %v3062, %v3649
    %v3682 = vmul.f32 %v3138, %v3650
    %v3683 = vmul.f32 %v3143, %v3651
    %v3684 = vmul.f32 %v3219, %v3652
    %v3685 = vmul.f32 %v3224, %v3653
    %v3686 = vmul.f32 %v3300, %v3654
    %v3687 = vmul.f32 %v3305, %v3655
    %v3688 = vmul.f32 %v3381, %v3656
    %v3689 = vmul.f32 %v3386, %v3657
    %v3690 = vmul.f32 %v3462, %v3658
    %v3691 = vmul.f32 %v3467, %v3659
    %v3692 = vmul.f32 %v3543, %v3660
    %v3693 = vmul.f32 %v3548, %v3661
    %v3694 = vmul.f32 %v3624, %v3662
    %v3695 = vmul.f32 %v3629, %v3663
    %3698 = vrot.lane.b32.xlu0 %v3666, 32
    %v3699 = vpop.permute.xlu0 %3698
    %3700 = vrot.lane.b32.xlu0 %v3667, 32
    %v3701 = vpop.permute.xlu0 %3700
    %3706 = vrot.lane.b32.xlu0 %v3668, 64
    %v3707 = vpop.permute.xlu0 %3706
    %3708 = vrot.lane.b32.xlu0 %v3669, 64
    %v3709 = vpop.permute.xlu0 %3708
    %3714 = vrot.lane.b32.xlu0 %v3670, 96
    %v3715 = vpop.permute.xlu0 %3714
    %3716 = vrot.lane.b32.xlu0 %v3671, 96
    %v3717 = vpop.permute.xlu0 %3716
    %3722 = vrot.lane.b32.xlu0 %v3674, 32
    %v3723 = vpop.permute.xlu0 %3722
    %3724 = vrot.lane.b32.xlu0 %v3675, 32
    %v3725 = vpop.permute.xlu0 %3724
    %3730 = vrot.lane.b32.xlu0 %v3676, 64
    %v3731 = vpop.permute.xlu0 %3730
    %3732 = vrot.lane.b32.xlu0 %v3677, 64
    %v3733 = vpop.permute.xlu0 %3732
    %3738 = vrot.lane.b32.xlu0 %v3678, 96
    %v3739 = vpop.permute.xlu0 %3738
    %3740 = vrot.lane.b32.xlu0 %v3679, 96
    %v3741 = vpop.permute.xlu0 %3740
    %v3744 = vsel %vm718, %v3664, %v3699
    %v3745 = vsel %vm718, %v3665, %v3701
    %vm3746 = vcmask 523264
    %v3747 = vsel %vm3746, %v3744, %v3707
    %v3748 = vsel %vm3746, %v3745, %v3709
    %vm3749 = vcmask 785408
    %v3750 = vsel %vm3749, %v3747, %v3715
    %v3751 = vsel %vm3749, %v3748, %v3717
    %v3752 = vsel %vm718, %v3672, %v3723
    %v3753 = vsel %vm718, %v3673, %v3725
    %v3754 = vsel %vm3746, %v3752, %v3731
    %v3755 = vsel %vm3746, %v3753, %v3733
    %v3756 = vsel %vm3749, %v3754, %v3739
    %v3757 = vsel %vm3749, %v3755, %v3741
    %3760 = vrot.lane.b32.xlu0 %v3682, 32
    %v3761 = vpop.permute.xlu0 %3760
    %3762 = vrot.lane.b32.xlu0 %v3683, 32
    %v3763 = vpop.permute.xlu0 %3762
    %3768 = vrot.lane.b32.xlu0 %v3684, 64
    %v3769 = vpop.permute.xlu0 %3768
    %3770 = vrot.lane.b32.xlu0 %v3685, 64
    %v3771 = vpop.permute.xlu0 %3770
    %3776 = vrot.lane.b32.xlu0 %v3686, 96
    %v3777 = vpop.permute.xlu0 %3776
    %3778 = vrot.lane.b32.xlu0 %v3687, 96
    %v3779 = vpop.permute.xlu0 %3778
    %3784 = vrot.lane.b32.xlu0 %v3690, 32
    %v3785 = vpop.permute.xlu0 %3784
    %3786 = vrot.lane.b32.xlu0 %v3691, 32
    %v3787 = vpop.permute.xlu0 %3786
    %3792 = vrot.lane.b32.xlu0 %v3692, 64
    %v3793 = vpop.permute.xlu0 %3792
    %3794 = vrot.lane.b32.xlu0 %v3693, 64
    %v3795 = vpop.permute.xlu0 %3794
    %3800 = vrot.lane.b32.xlu0 %v3694, 96
    %v3801 = vpop.permute.xlu0 %3800
    %3802 = vrot.lane.b32.xlu0 %v3695, 96
    %v3803 = vpop.permute.xlu0 %3802
    %v3806 = vsel %vm718, %v3680, %v3761
    %v3807 = vsel %vm718, %v3681, %v3763
    %v3808 = vsel %vm3746, %v3806, %v3769
    %v3809 = vsel %vm3746, %v3807, %v3771
    %v3810 = vsel %vm3749, %v3808, %v3777
    %v3811 = vsel %vm3749, %v3809, %v3779
    %v3812 = vsel %vm718, %v3688, %v3785
    %v3813 = vsel %vm718, %v3689, %v3787
    %v3814 = vsel %vm3746, %v3812, %v3793
    %v3815 = vsel %vm3746, %v3813, %v3795
    %v3816 = vsel %vm3749, %v3814, %v3801
    %v3817 = vsel %vm3749, %v3815, %v3803
    %v3818 = vld [vmem:[#allocation7] sm:$0xff]
    %v3819 = vld [vmem:[#allocation7 + $0x8] sm:$0xff]
    %v3820 = vld [vmem:[#allocation7 + $0x10] sm:$0xff]
    %v3821 = vld [vmem:[#allocation7 + $0x18] sm:$0xff]
    %v3822 = vld [vmem:[#allocation7 + $0x20] sm:$0xff]
    %v3823 = vld [vmem:[#allocation7 + $0x28] sm:$0xff]
    %v3824 = vld [vmem:[#allocation7 + $0x30] sm:$0xff]
    %v3825 = vld [vmem:[#allocation7 + $0x38] sm:$0xff]
    %v3826 = vld [vmem:[#allocation7 + $0x40] sm:$0xff]
    %v3827 = vld [vmem:[#allocation7 + $0x48] sm:$0xff]
    %v3828 = vld [vmem:[#allocation7 + $0x50] sm:$0xff]
    %v3829 = vld [vmem:[#allocation7 + $0x58] sm:$0xff]
    %v3830 = vld [vmem:[#allocation7 + $0x60] sm:$0xff]
    %v3831 = vld [vmem:[#allocation7 + $0x68] sm:$0xff]
    %v3832 = vld [vmem:[#allocation7 + $0x70] sm:$0xff]
    %v3833 = vld [vmem:[#allocation7 + $0x78] sm:$0xff]
    %v3834 = vld [vmem:[#allocation7 + $0x80] sm:$0xff]
    %v3835 = vld [vmem:[#allocation7 + $0x88] sm:$0xff]
    %v3836 = vld [vmem:[#allocation7 + $0x90] sm:$0xff]
    %v3837 = vld [vmem:[#allocation7 + $0x98] sm:$0xff]
    %v3838 = vld [vmem:[#allocation7 + $0xa0] sm:$0xff]
    %v3839 = vld [vmem:[#allocation7 + $0xa8] sm:$0xff]
    %v3840 = vld [vmem:[#allocation7 + $0xb0] sm:$0xff]
    %v3841 = vld [vmem:[#allocation7 + $0xb8] sm:$0xff]
    %v3842 = vld [vmem:[#allocation7 + $0xc0] sm:$0xff]
    %v3843 = vld [vmem:[#allocation7 + $0xc8] sm:$0xff]
    %v3844 = vld [vmem:[#allocation7 + $0xd0] sm:$0xff]
    %v3845 = vld [vmem:[#allocation7 + $0xd8] sm:$0xff]
    %v3846 = vld [vmem:[#allocation7 + $0xe0] sm:$0xff]
    %v3847 = vld [vmem:[#allocation7 + $0xe8] sm:$0xff]
    %v3848 = vld [vmem:[#allocation7 + $0xf0] sm:$0xff]
    %v3849 = vld [vmem:[#allocation7 + $0xf8] sm:$0xff]
    %v3850 = vld [vmem:[#allocation7 + $0x100] sm:$0xff]
    %v3851 = vld [vmem:[#allocation7 + $0x108] sm:$0xff]
    %v3852 = vld [vmem:[#allocation7 + $0x110] sm:$0xff]
    %v3853 = vld [vmem:[#allocation7 + $0x118] sm:$0xff]
    %v3854 = vld [vmem:[#allocation7 + $0x120] sm:$0xff]
    %v3855 = vld [vmem:[#allocation7 + $0x128] sm:$0xff]
    %v3856 = vld [vmem:[#allocation7 + $0x130] sm:$0xff]
    %v3857 = vld [vmem:[#allocation7 + $0x138] sm:$0xff]
    %v3858 = vld [vmem:[#allocation7 + $0x140] sm:$0xff]
    %v3859 = vld [vmem:[#allocation7 + $0x148] sm:$0xff]
    %v3860 = vld [vmem:[#allocation7 + $0x150] sm:$0xff]
    %v3861 = vld [vmem:[#allocation7 + $0x158] sm:$0xff]
    %v3862 = vld [vmem:[#allocation7 + $0x160] sm:$0xff]
    %v3863 = vld [vmem:[#allocation7 + $0x168] sm:$0xff]
    %v3864 = vld [vmem:[#allocation7 + $0x170] sm:$0xff]
    %v3865 = vld [vmem:[#allocation7 + $0x178] sm:$0xff]
    %v3866 = vld [vmem:[#allocation7 + $0x180] sm:$0xff]
    %v3867 = vld [vmem:[#allocation7 + $0x188] sm:$0xff]
    %v3868 = vld [vmem:[#allocation7 + $0x190] sm:$0xff]
    %v3869 = vld [vmem:[#allocation7 + $0x198] sm:$0xff]
    %v3870 = vld [vmem:[#allocation7 + $0x1a0] sm:$0xff]
    %v3871 = vld [vmem:[#allocation7 + $0x1a8] sm:$0xff]
    %v3872 = vld [vmem:[#allocation7 + $0x1b0] sm:$0xff]
    %v3873 = vld [vmem:[#allocation7 + $0x1b8] sm:$0xff]
    %v3874 = vld [vmem:[#allocation7 + $0x1c0] sm:$0xff]
    %v3875 = vld [vmem:[#allocation7 + $0x1c8] sm:$0xff]
    %v3876 = vld [vmem:[#allocation7 + $0x1d0] sm:$0xff]
    %v3877 = vld [vmem:[#allocation7 + $0x1d8] sm:$0xff]
    %v3878 = vld [vmem:[#allocation7 + $0x1e0] sm:$0xff]
    %v3879 = vld [vmem:[#allocation7 + $0x1e8] sm:$0xff]
    %v3880 = vld [vmem:[#allocation7 + $0x1f0] sm:$0xff]
    %v3881 = vld [vmem:[#allocation7 + $0x1f8] sm:$0xff]
    %v3882 = vld [vmem:[%s3] sm:$0x3]
    %v3884 = vlaneseq
    %v3885 = vshrl.u32 %v3884, 7
    %v3886 = vsub.s32 0, %v3885
    %v3887 = vrot.slane %v3882, %v3886
    %v3888 = vlaneseq
    %v3889 = vshrl.u32 %v3888, 7
    %v3890 = vsub.s32 1, %v3889
    %v3891 = vrot.slane %v3882, %v3890
    %3894 = vmatprep.subr.mxu0 %v3849
    %3895 = vmatpush1.msra.mxu0 %v3848
    %3896 = vmatprep.subr.mxu0 %v3847
    %3897 = vmatpush1.msra.mxu0 %v3846
    %3898 = vmatprep.subr.mxu0 %v3845
    %3899 = vmatpush1.msra.mxu0 %v3844
    %3900 = vmatprep.subr.mxu0 %v3843
    %3901 = vmatpush1.msra.mxu0 %v3842
    %3902 = vmatprep.subr.mxu0 %v3841
    %3903 = vmatpush1.msra.mxu0 %v3840
    %3904 = vmatprep.subr.mxu0 %v3839
    %3905 = vmatpush1.msra.mxu0 %v3838
    %3906 = vmatprep.subr.mxu0 %v3837
    %3907 = vmatpush1.msra.mxu0 %v3836
    %3908 = vmatprep.subr.mxu0 %v3835
    %3909 = vmatpush1.msra.mxu0 %v3834
    %3910 = vmatprep.subr.mxu0 %v3833
    %3911 = vmatpush1.msra.mxu0 %v3832
    %3912 = vmatprep.subr.mxu0 %v3831
    %3913 = vmatpush1.msra.mxu0 %v3830
    %3914 = vmatprep.subr.mxu0 %v3829
    %3915 = vmatpush1.msra.mxu0 %v3828
    %3916 = vmatprep.subr.mxu0 %v3827
    %3917 = vmatpush1.msra.mxu0 %v3826
    %3918 = vmatprep.subr.mxu0 %v3825
    %3919 = vmatpush1.msra.mxu0 %v3824
    %3920 = vmatprep.subr.mxu0 %v3823
    %3921 = vmatpush1.msra.mxu0 %v3822
    %3922 = vmatprep.subr.mxu0 %v3821
    %3923 = vmatpush1.msra.mxu0 %v3820
    %3924 = vmatprep.subr.mxu0 %v3819
    %3925 = vmatpush1.msra.mxu0 %v3818
    %3926 = vmatprep.subr.mxu0 %v3881
    %3927 = vmatpush2.msra.mxu0 %v3880
    %3928 = vmatprep.subr.mxu0 %v3879
    %3929 = vmatpush2.msra.mxu0 %v3878
    %3930 = vmatprep.subr.mxu0 %v3877
    %3931 = vmatpush2.msra.mxu0 %v3876
    %3932 = vmatprep.subr.mxu0 %v3875
    %3933 = vmatpush2.msra.mxu0 %v3874
    %3934 = vmatprep.subr.mxu0 %v3873
    %3935 = vmatpush2.msra.mxu0 %v3872
    %3936 = vmatprep.subr.mxu0 %v3871
    %3937 = vmatpush2.msra.mxu0 %v3870
    %3938 = vmatprep.subr.mxu0 %v3869
    %3939 = vmatpush2.msra.mxu0 %v3868
    %3940 = vmatprep.subr.mxu0 %v3867
    %3941 = vmatpush2.msra.mxu0 %v3866
    %3942 = vmatprep.subr.mxu0 %v3865
    %3943 = vmatpush2.msra.mxu0 %v3864
    %3944 = vmatprep.subr.mxu0 %v3863
    %3945 = vmatpush2.msra.mxu0 %v3862
    %3946 = vmatprep.subr.mxu0 %v3861
    %3947 = vmatpush2.msra.mxu0 %v3860
    %3948 = vmatprep.subr.mxu0 %v3859
    %3949 = vmatpush2.msra.mxu0 %v3858
    %3950 = vmatprep.subr.mxu0 %v3857
    %3951 = vmatpush2.msra.mxu0 %v3856
    %3952 = vmatprep.subr.mxu0 %v3855
    %3953 = vmatpush2.msra.mxu0 %v3854
    %3954 = vmatprep.subr.mxu0 %v3853
    %3955 = vmatpush2.msra.mxu0 %v3852
    %3956 = vmatprep.subr.mxu0 %v3851
    %3957 = vmatpush2.msra.mxu0 %v3850
    %3958 = vmatprep.mubr.f32.mxu0 %v3756
    %3959 = vmatmul.mubr.f32.gmra.mxu0 %v3750
    %v3960 = vpop.f32.mrf.mxu0
    %v3961 = vadd.f32 %v3887, %v3960
    %v3962 = vpop.f32.mrf.mxu0
    %v3963 = vadd.f32 %v3891, %v3962
    %3964 = vmatprep.mubr.f32.mxu0 %v3757
    %3965 = vmatmul.mubr.f32.gmra.mxu0 %v3751
    %v3966 = vpop.f32.mrf.mxu0
    %v3967 = vadd.f32 %v3887, %v3966
    %v3968 = vpop.f32.mrf.mxu0
    %v3969 = vadd.f32 %v3891, %v3968
    %3970 = vmatprep.mubr.f32.mxu0 %v3816
    %3971 = vmatmul.mubr.f32.gmra.mxu0 %v3810
    %v3972 = vpop.f32.mrf.mxu0
    %v3973 = vadd.f32 %v3887, %v3972
    %v3974 = vpop.f32.mrf.mxu0
    %v3975 = vadd.f32 %v3891, %v3974
    %3976 = vmatprep.mubr.f32.mxu0 %v3817
    %3977 = vmatmul.mubr.f32.gmra.mxu0 %v3811
    %v3978 = vpop.f32.mrf.mxu0
    %v3979 = vadd.f32 %v3887, %v3978
    %v3980 = vpop.f32.mrf.mxu0
    %v3981 = vadd.f32 %v3891, %v3980
    %3982 = vdwg.mxu0
    %3983 = vst [vmem:[#allocation8] sm:$0xff] %v3961
    %3984 = vst [vmem:[#allocation8 + $0x8] sm:$0xff] %v3963
    %3985 = vst [vmem:[#allocation8 + $0x10] sm:$0xff] %v3967
    %3986 = vst [vmem:[#allocation8 + $0x18] sm:$0xff] %v3969
    %3987 = vst [vmem:[#allocation8 + $0x20] sm:$0xff] %v3973
    %3988 = vst [vmem:[#allocation8 + $0x28] sm:$0xff] %v3975
    %3989 = vst [vmem:[#allocation8 + $0x30] sm:$0xff] %v3979
    %3990 = vst [vmem:[#allocation8 + $0x38] sm:$0xff] %v3981
    // Predicated region
    $region30: #{tpu_custom_call.1} parent=1 // pred_check
      _
    $region31: #{tpu_custom_call.1} parent=1 // pred_check_branch
      %3992 = sbr.rel (0) target = $region33
    $region32: #{tpu_custom_call.1} parent=1 // pred_region
      %s3994 = ssub.s32 1024, 1024
      %3995 = vsyncadd [#allocation4], %s3994
      %s3996 = sshll.u32 [#allocation8], 4
      %s3997 = int_to_ptr.vmem [resolvable:$true] %s3996
      %4002 = dma.vmem_to_hbm [thread:$0]  %s3997, 1024, %s4, [#allocation4], 256, 256, 16
    $region33: #{tpu_custom_call.1} parent=1 // pred_fallthru
      _
    // Predicated region
    $region34: #{tpu_custom_call.1} parent=1 // pred_check
      _
    $region35: #{tpu_custom_call.1} parent=1 // pred_check_branch
      %4004 = sbr.rel (0) target = $region37
    $region36: #{tpu_custom_call.1} parent=1 // pred_region
      %4005 = dma.done [#allocation4], 1024
    $region37: #{tpu_custom_call.1} parent=1 // pred_fallthru
      _
    %4006 = vsyncpa [#allocation3], 1
    %4007 = vsyncpa [#allocation6], 1
    %4008 = vsyncpa [#allocation4], 1

</llo_original>
